<compile_context>
chip_gen: v7x
topology: tpu7x:2x2x1
jax: 0.10.0
libtpu: 0.0.40
codegen_flags: <defaults>
</compile_context>

<pallas_src>
import functools

import jax
import jax.numpy as jnp
from jax import lax
from jax.experimental import pallas as pl
from jax.experimental.pallas import tpu as pltpu


_SENT = 8  # zero sentinel pixels padded at both ends of every flattened tile


def _conv3x3_tap_kernel(x_ref, w_ref, o_ref, *, width, tile_h, mxu_dtype):
    """3x3 'same' conv (no bias) on one haloed height-tile, pixel-major.

    x_ref : (_SENT + (tile_h+2)*W + _SENT, Cin) haloed tile:
            [8 zeros | top-halo row | tile_h image rows | bottom-halo row | 8 zeros]
    w_ref : (9, Cin, Cout)   per-tap weights, tap index = kh*3 + kw
    o_ref : (tile_h*W, Cout) conv output tile, pixel-major
    """
    P = tile_h * width

    # Hoisted column masks: output pixel t sits at column t % W; the kw==0 tap
    # reads column j-1 (invalid at j==0), the kw==2 tap reads column j+1
    # (invalid at j==W-1).  (P, 1) masks broadcast along lanes for free.
    col = lax.broadcasted_iota(jnp.int32, (P, 1), 0) % width
    mask_l = col >= 1
    mask_r = col <= width - 2

    acc = None
    for kh in range(3):
        for kw in range(3):
            # Output pixel t reads haloed flat pixel  _SENT + t + kh*W + (kw-1).
            start = _SENT + kh * width + (kw - 1)
            xs = x_ref[start:start + P, :]
            if kw == 0:
                xs = jnp.where(mask_l, xs, jnp.zeros_like(xs))
            elif kw == 2:
                xs = jnp.where(mask_r, xs, jnp.zeros_like(xs))
            if mxu_dtype is not None:
                xs = xs.astype(mxu_dtype)
            tap = jnp.dot(xs, w_ref[kh * 3 + kw],
                          preferred_element_type=jnp.float32)
            acc = tap if acc is None else acc + tap

    # TODO(synk): for Cout < 128 a lane-dense (tile_h, W*Cout) output block
    # would avoid masked partial stores, but needs an in-kernel lane relayout.
    o_ref[...] = acc.astype(o_ref.dtype)


def _round_up(x, m):
    return -(-x // m) * m


def _vmem_capacity_bytes():
    """Physical VMEM of the attached TPU (64 MiB fallback — safe on v7x too)."""
    try:
        info = pltpu.get_tpu_info()
        cap = getattr(info, "vmem_capacity_bytes", None)
        if cap:
            return int(cap)
    except Exception:
        pass
    return 64 * 1024 * 1024


def _tile_vmem_bytes(tile_h, width, cin, cout):
    """Worst-case f32 VMEM working set of one grid step (incl. double-buffers)."""
    pb = (tile_h + 2) * width + 2 * _SENT
    p = tile_h * width
    b = 2 * _round_up(pb, 8) * _round_up(cin, 128) * 4         # input block  (x2)
    b += 2 * _round_up(p, 8) * _round_up(cout, 128) * 4        # output block (x2)
    b += _round_up(p, 8) * _round_up(cout, 128) * 4            # live f32 accumulator
    b += 2 * 9 * _round_up(cin, 8) * _round_up(cout, 128) * 4  # resident weight
    return b


def _pick_tile_h(batch, H, width, cin, cout, budget_bytes):
    """Largest divisor of H whose working set fits the budget.  When batch == 1,
    cap at H//2 so the grid has >= 2 parallel steps (keeps both v7x TCs busy)."""
    max_th = H
    if batch == 1 and H >= 2:
        max_th = max(1, H // 2)
    for th in sorted((d for d in range(1, H + 1) if H % d == 0), reverse=True):
        if th <= max_th and _tile_vmem_bytes(th, width, cin, cout) <= budget_bytes:
            return th
    # TODO(synk): also tile along W for images whose single-row working set
    # already exceeds the budget; tile_h == 1 is the smallest we can do here.
    return 1


def upsample_forward(x_nchw, w_oihw, *, tile_h=None, mxu_dtype=None):
    """Equivalent of Upsample.forward: 3x3 'same' conv (no bias) + PixelShuffle(2).

    x_nchw : (B, Cin, H, W),  w_oihw : (2*Cin, Cin, 3, 3) PyTorch conv weight.
    Returns (B, Cin // 2, 2H, 2W).
    """
    B, Cin, H, W = x_nchw.shape
    Cout = w_oihw.shape[0]
    assert w_oihw.shape == (Cout, Cin, 3, 3)
    assert Cout % 4 == 0

    vmem_cap = _vmem_capacity_bytes()
    if tile_h is None:
        tile_h = _pick_tile_h(B, H, W, Cin, Cout, budget_bytes=vmem_cap // 2)
    assert 1 <= tile_h <= H and H % tile_h == 0
    n_h = H // tile_h
    P = tile_h * W
    Pb = (tile_h + 2) * W + 2 * _SENT

    # One NCHW -> NHWC transpose, zero-pad H by one row each side, and cut
    # height tiles that carry their own 1-row halos (+ sentinel pixels).  XLA
    # fuses the pad / slicing into the transpose pass it already has to do, so
    # the kernel needs exactly one input DMA per grid step and no in-kernel
    # halo assembly or masking of top/bottom rows.
    x_nhwc = jnp.transpose(x_nchw, (0, 2, 3, 1))
    x_pad = jnp.pad(x_nhwc, ((0, 0), (1, 1), (0, 0), (0, 0)))
    tiles = [x_pad[:, h * tile_h:h * tile_h + tile_h + 2] for h in range(n_h)]
    x_tiles = jnp.stack(tiles, axis=1).reshape(B * n_h, (tile_h + 2) * W, Cin)
    x_tiles = jnp.pad(x_tiles, ((0, 0), (_SENT, _SENT), (0, 0)))

    # OIHW -> (tap, Cin, Cout): one dense (Cin, Cout) matrix per conv tap.
    w_taps = jnp.transpose(w_oihw, (2, 3, 1, 0)).reshape(9, Cin, Cout)
    if mxu_dtype is not None:
        w_taps = w_taps.astype(mxu_dtype)

    kernel = functools.partial(_conv3x3_tap_kernel, width=W, tile_h=tile_h,
                               mxu_dtype=mxu_dtype)

    out = pl.pallas_call(
        kernel,
        out_shape=jax.ShapeDtypeStruct((B * n_h, P, Cout), x_nchw.dtype),
        grid_spec=pltpu.PrefetchScalarGridSpec(
            num_scalar_prefetch=0,
            grid=(B * n_h,),
            in_specs=[
                # haloed tile: block spans the full trailing axes, so there is
                # no (8, 128) divisibility restriction on W / Cin.
                pl.BlockSpec((None, Pb, Cin), lambda i: (i, 0, 0)),
                # per-tap weights: constant block index -> fetched once, resident.
                pl.BlockSpec((9, Cin, Cout), lambda i: (0, 0, 0)),
            ],
            out_specs=pl.BlockSpec((None, P, Cout), lambda i: (i, 0, 0)),
        ),
        compiler_params=pltpu.CompilerParams(
            dimension_semantics=("parallel",),
            vmem_limit_bytes=int(vmem_cap * 0.85),
        ),
    )(x_tiles, w_taps)

    # out is flat NHWC: (B*n_h, tile_h*W, Cout) == (B, H, W, Cout) byte-for-byte.
    # Fuse NHWC->NCHW and PixelShuffle(2) into a single transpose.
    C = Cout // 4
    y = out.reshape(B, H, W, C, 2, 2)            # conv channel = c*4 + 2*r1 + r2
    y = jnp.transpose(y, (0, 3, 1, 4, 2, 5))     # (B, C, H, r1, W, r2)
    return y.reshape(B, C, 2 * H, 2 * W)


if __name__ == "__main__":
    key = jax.random.PRNGKey(0)
    kx, kw = jax.random.split(key)

    B, n_feat, H, W = 2, 4, 16, 16
    x = jax.random.normal(kx, (B, n_feat, H, W), dtype=jnp.float32)
    # Conv2d(n_feat, n_feat*2, 3, bias=False) weight, OIHW, deterministic init.
    w = jax.random.normal(kw, (n_feat * 2, n_feat, 3, 3), dtype=jnp.float32) * 0.1

    # Reference: XLA conv + pixel shuffle.
    ref_conv = lax.conv_general_dilated(
        x, w, window_strides=(1, 1), padding=((1, 1), (1, 1)),
        dimension_numbers=("NCHW", "OIHW", "NCHW"))
    Cr = ref_conv.shape[1] // 4
    ref = (ref_conv.reshape(B, Cr, 2, 2, H, W)
           .transpose(0, 1, 4, 2, 5, 3)
           .reshape(B, Cr, 2 * H, 2 * W))

    # Default tile choice (whole image per tile at this size -> grid=(B,)).
    out = jax.block_until_ready(jax.jit(upsample_forward)(x, w))
    assert out.shape == (B, n_feat // 2, 2 * H, 2 * W), out.shape
    assert jnp.allclose(out, ref, atol=1e-4, rtol=1e-4)

    # Explicitly exercise the height-tiled path (grid=(B*2,), interior halos).
    out_tiled = jax.block_until_ready(
        jax.jit(lambda a, b: upsample_forward(a, b, tile_h=8))(x, w))
    assert jnp.allclose(out_tiled, ref, atol=1e-4, rtol=1e-4)

    print("KERNEL_OK")
</pallas_src>

<mosaic_0001>
module attributes {stable_mosaic.version = 11 : i64} {
  func.func @_conv3x3_tap_kernel(%arg0: i32, %arg1: memref<1x304x4xf32, #tpu.memory_space<vmem>>, %arg2: memref<9x4x8xf32, #tpu.memory_space<vmem>>, %arg3: memref<1x256x8xf32, #tpu.memory_space<vmem>>) attributes {dimension_semantics = [#tpu.dimension_semantics<parallel>], iteration_bounds = array<i64: 2>, scalar_prefetch = 0 : i64, scratch_operands = 0 : i64, tpu.core_type = #tpu.core_type<tc>, window_params = [{transform_indices = @transform_0, window_bounds = array<i64: 1, 304, 4>}, {pipeline_mode = #tpu.pipeline_mode<synchronous>, transform_indices = @transform_1, window_bounds = array<i64: 9, 4, 8>}, {transform_indices = @transform_2, window_bounds = array<i64: 1, 256, 8>}]} {
    %0 = tpu.iota {dimensions = array<i32: 0>} : vector<256x1xi32>
    %c16_i32 = arith.constant 16 : i32
    %c0_i32 = arith.constant 0 : i32
    %1 = arith.cmpi eq, %c16_i32, %c0_i32 : i32
    %c1_i32 = arith.constant 1 : i32
    %2 = arith.select %1, %c1_i32, %c16_i32 : i32
    %3 = vector.broadcast %2 : i32 to vector<256x1xi32>
    %4 = arith.remsi %0, %3 : vector<256x1xi32>
    %c0_i32_0 = arith.constant 0 : i32
    %5 = vector.broadcast %c0_i32_0 : i32 to vector<256x1xi32>
    %6 = arith.cmpi ne, %4, %5 : vector<256x1xi32>
    %c0_i32_1 = arith.constant 0 : i32
    %7 = vector.broadcast %c0_i32_1 : i32 to vector<256x1xi32>
    %8 = arith.cmpi slt, %4, %7 : vector<256x1xi32>
    %c0_i32_2 = arith.constant 0 : i32
    %9 = arith.cmpi slt, %2, %c0_i32_2 : i32
    %10 = vector.broadcast %9 : i1 to vector<256x1xi1>
    %11 = vector.broadcast %10 : vector<256x1xi1> to vector<256x1xi1>
    %12 = arith.xori %8, %11 : vector<256x1xi1>
    %13 = arith.andi %12, %6 : vector<256x1xi1>
    %14 = vector.broadcast %2 : i32 to vector<256x1xi32>
    %15 = arith.addi %4, %14 : vector<256x1xi32>
    %16 = arith.select %13, %15, %4 : vector<256x1xi1>, vector<256x1xi32>
    %c1_i32_3 = arith.constant 1 : i32
    %17 = vector.broadcast %c1_i32_3 : i32 to vector<256x1xi32>
    %18 = arith.cmpi sge, %16, %17 : vector<256x1xi32>
    %c14_i32 = arith.constant 14 : i32
    %19 = vector.broadcast %c14_i32 : i32 to vector<256x1xi32>
    %20 = arith.cmpi sle, %16, %19 : vector<256x1xi32>
    %c0 = arith.constant 0 : index
    %c7 = arith.constant 7 : index
    %c0_4 = arith.constant 0 : index
    %21 = vector.load %arg1[%c0, %c7, %c0_4] : memref<1x304x4xf32, #tpu.memory_space<vmem>>, vector<1x256x4xf32>
    %22 = vector.shape_cast %21 : vector<1x256x4xf32> to vector<256x4xf32>
    %cst = arith.constant 0.000000e+00 : f32
    %23 = vector.broadcast %cst : f32 to vector<256x4xf32>
    %24 = vector.shape_cast %18 : vector<256x1xi1> to vector<256x1xi1>
    %25 = vector.broadcast %24 : vector<256x1xi1> to vector<256x4xi1>
    %26 = arith.select %25, %22, %23 : vector<256x4xi1>, vector<256x4xf32>
    %c0_5 = arith.constant 0 : index
    %c0_6 = arith.constant 0 : index
    %c0_7 = arith.constant 0 : index
    %27 = vector.load %arg2[%c0_5, %c0_6, %c0_7] : memref<9x4x8xf32, #tpu.memory_space<vmem>>, vector<1x4x8xf32>
    %28 = vector.shape_cast %27 : vector<1x4x8xf32> to vector<4x8xf32>
    %cst_8 = arith.constant dense<0.000000e+00> : vector<256x8xf32>
    %29 = tpu.matmul %26, %28, %cst_8 {dimension_numbers = #tpu.dot_dimension_numbers<[1], [0], [0], [1], [0, 0, 1, 1], [], []>} : vector<256x4xf32>, vector<4x8xf32>, vector<256x8xf32> -> vector<256x8xf32>
    %c0_9 = arith.constant 0 : index
    %c8 = arith.constant 8 : index
    %c0_10 = arith.constant 0 : index
    %30 = vector.load %arg1[%c0_9, %c8, %c0_10] : memref<1x304x4xf32, #tpu.memory_space<vmem>>, vector<1x256x4xf32>
    %31 = vector.shape_cast %30 : vector<1x256x4xf32> to vector<256x4xf32>
    %c1 = arith.constant 1 : index
    %c0_11 = arith.constant 0 : index
    %c0_12 = arith.constant 0 : index
    %32 = vector.load %arg2[%c1, %c0_11, %c0_12] : memref<9x4x8xf32, #tpu.memory_space<vmem>>, vector<1x4x8xf32>
    %33 = vector.shape_cast %32 : vector<1x4x8xf32> to vector<4x8xf32>
    %cst_13 = arith.constant dense<0.000000e+00> : vector<256x8xf32>
    %34 = tpu.matmul %31, %33, %cst_13 {dimension_numbers = #tpu.dot_dimension_numbers<[1], [0], [0], [1], [0, 0, 1, 1], [], []>} : vector<256x4xf32>, vector<4x8xf32>, vector<256x8xf32> -> vector<256x8xf32>
    %35 = arith.addf %29, %34 : vector<256x8xf32>
    %c0_14 = arith.constant 0 : index
    %c9 = arith.constant 9 : index
    %c0_15 = arith.constant 0 : index
    %36 = vector.load %arg1[%c0_14, %c9, %c0_15] : memref<1x304x4xf32, #tpu.memory_space<vmem>>, vector<1x256x4xf32>
    %37 = vector.shape_cast %36 : vector<1x256x4xf32> to vector<256x4xf32>
    %cst_16 = arith.constant 0.000000e+00 : f32
    %38 = vector.broadcast %cst_16 : f32 to vector<256x4xf32>
    %39 = vector.shape_cast %20 : vector<256x1xi1> to vector<256x1xi1>
    %40 = vector.broadcast %39 : vector<256x1xi1> to vector<256x4xi1>
    %41 = arith.select %40, %37, %38 : vector<256x4xi1>, vector<256x4xf32>
    %c2 = arith.constant 2 : index
    %c0_17 = arith.constant 0 : index
    %c0_18 = arith.constant 0 : index
    %42 = vector.load %arg2[%c2, %c0_17, %c0_18] : memref<9x4x8xf32, #tpu.memory_space<vmem>>, vector<1x4x8xf32>
    %43 = vector.shape_cast %42 : vector<1x4x8xf32> to vector<4x8xf32>
    %cst_19 = arith.constant dense<0.000000e+00> : vector<256x8xf32>
    %44 = tpu.matmul %41, %43, %cst_19 {dimension_numbers = #tpu.dot_dimension_numbers<[1], [0], [0], [1], [0, 0, 1, 1], [], []>} : vector<256x4xf32>, vector<4x8xf32>, vector<256x8xf32> -> vector<256x8xf32>
    %45 = arith.addf %35, %44 : vector<256x8xf32>
    %c0_20 = arith.constant 0 : index
    %c23 = arith.constant 23 : index
    %c0_21 = arith.constant 0 : index
    %46 = vector.load %arg1[%c0_20, %c23, %c0_21] : memref<1x304x4xf32, #tpu.memory_space<vmem>>, vector<1x256x4xf32>
    %47 = vector.shape_cast %46 : vector<1x256x4xf32> to vector<256x4xf32>
    %cst_22 = arith.constant 0.000000e+00 : f32
    %48 = vector.broadcast %cst_22 : f32 to vector<256x4xf32>
    %49 = vector.shape_cast %18 : vector<256x1xi1> to vector<256x1xi1>
    %50 = vector.broadcast %49 : vector<256x1xi1> to vector<256x4xi1>
    %51 = arith.select %50, %47, %48 : vector<256x4xi1>, vector<256x4xf32>
    %c3 = arith.constant 3 : index
    %c0_23 = arith.constant 0 : index
    %c0_24 = arith.constant 0 : index
    %52 = vector.load %arg2[%c3, %c0_23, %c0_24] : memref<9x4x8xf32, #tpu.memory_space<vmem>>, vector<1x4x8xf32>
    %53 = vector.shape_cast %52 : vector<1x4x8xf32> to vector<4x8xf32>
    %cst_25 = arith.constant dense<0.000000e+00> : vector<256x8xf32>
    %54 = tpu.matmul %51, %53, %cst_25 {dimension_numbers = #tpu.dot_dimension_numbers<[1], [0], [0], [1], [0, 0, 1, 1], [], []>} : vector<256x4xf32>, vector<4x8xf32>, vector<256x8xf32> -> vector<256x8xf32>
    %55 = arith.addf %45, %54 : vector<256x8xf32>
    %c0_26 = arith.constant 0 : index
    %c24 = arith.constant 24 : index
    %c0_27 = arith.constant 0 : index
    %56 = vector.load %arg1[%c0_26, %c24, %c0_27] : memref<1x304x4xf32, #tpu.memory_space<vmem>>, vector<1x256x4xf32>
    %57 = vector.shape_cast %56 : vector<1x256x4xf32> to vector<256x4xf32>
    %c4 = arith.constant 4 : index
    %c0_28 = arith.constant 0 : index
    %c0_29 = arith.constant 0 : index
    %58 = vector.load %arg2[%c4, %c0_28, %c0_29] : memref<9x4x8xf32, #tpu.memory_space<vmem>>, vector<1x4x8xf32>
    %59 = vector.shape_cast %58 : vector<1x4x8xf32> to vector<4x8xf32>
    %cst_30 = arith.constant dense<0.000000e+00> : vector<256x8xf32>
    %60 = tpu.matmul %57, %59, %cst_30 {dimension_numbers = #tpu.dot_dimension_numbers<[1], [0], [0], [1], [0, 0, 1, 1], [], []>} : vector<256x4xf32>, vector<4x8xf32>, vector<256x8xf32> -> vector<256x8xf32>
    %61 = arith.addf %55, %60 : vector<256x8xf32>
    %c0_31 = arith.constant 0 : index
    %c25 = arith.constant 25 : index
    %c0_32 = arith.constant 0 : index
    %62 = vector.load %arg1[%c0_31, %c25, %c0_32] : memref<1x304x4xf32, #tpu.memory_space<vmem>>, vector<1x256x4xf32>
    %63 = vector.shape_cast %62 : vector<1x256x4xf32> to vector<256x4xf32>
    %cst_33 = arith.constant 0.000000e+00 : f32
    %64 = vector.broadcast %cst_33 : f32 to vector<256x4xf32>
    %65 = vector.shape_cast %20 : vector<256x1xi1> to vector<256x1xi1>
    %66 = vector.broadcast %65 : vector<256x1xi1> to vector<256x4xi1>
    %67 = arith.select %66, %63, %64 : vector<256x4xi1>, vector<256x4xf32>
    %c5 = arith.constant 5 : index
    %c0_34 = arith.constant 0 : index
    %c0_35 = arith.constant 0 : index
    %68 = vector.load %arg2[%c5, %c0_34, %c0_35] : memref<9x4x8xf32, #tpu.memory_space<vmem>>, vector<1x4x8xf32>
    %69 = vector.shape_cast %68 : vector<1x4x8xf32> to vector<4x8xf32>
    %cst_36 = arith.constant dense<0.000000e+00> : vector<256x8xf32>
    %70 = tpu.matmul %67, %69, %cst_36 {dimension_numbers = #tpu.dot_dimension_numbers<[1], [0], [0], [1], [0, 0, 1, 1], [], []>} : vector<256x4xf32>, vector<4x8xf32>, vector<256x8xf32> -> vector<256x8xf32>
    %71 = arith.addf %61, %70 : vector<256x8xf32>
    %c0_37 = arith.constant 0 : index
    %c39 = arith.constant 39 : index
    %c0_38 = arith.constant 0 : index
    %72 = vector.load %arg1[%c0_37, %c39, %c0_38] : memref<1x304x4xf32, #tpu.memory_space<vmem>>, vector<1x256x4xf32>
    %73 = vector.shape_cast %72 : vector<1x256x4xf32> to vector<256x4xf32>
    %cst_39 = arith.constant 0.000000e+00 : f32
    %74 = vector.broadcast %cst_39 : f32 to vector<256x4xf32>
    %75 = vector.shape_cast %18 : vector<256x1xi1> to vector<256x1xi1>
    %76 = vector.broadcast %75 : vector<256x1xi1> to vector<256x4xi1>
    %77 = arith.select %76, %73, %74 : vector<256x4xi1>, vector<256x4xf32>
    %c6 = arith.constant 6 : index
    %c0_40 = arith.constant 0 : index
    %c0_41 = arith.constant 0 : index
    %78 = vector.load %arg2[%c6, %c0_40, %c0_41] : memref<9x4x8xf32, #tpu.memory_space<vmem>>, vector<1x4x8xf32>
    %79 = vector.shape_cast %78 : vector<1x4x8xf32> to vector<4x8xf32>
    %cst_42 = arith.constant dense<0.000000e+00> : vector<256x8xf32>
    %80 = tpu.matmul %77, %79, %cst_42 {dimension_numbers = #tpu.dot_dimension_numbers<[1], [0], [0], [1], [0, 0, 1, 1], [], []>} : vector<256x4xf32>, vector<4x8xf32>, vector<256x8xf32> -> vector<256x8xf32>
    %81 = arith.addf %71, %80 : vector<256x8xf32>
    %c0_43 = arith.constant 0 : index
    %c40 = arith.constant 40 : index
    %c0_44 = arith.constant 0 : index
    %82 = vector.load %arg1[%c0_43, %c40, %c0_44] : memref<1x304x4xf32, #tpu.memory_space<vmem>>, vector<1x256x4xf32>
    %83 = vector.shape_cast %82 : vector<1x256x4xf32> to vector<256x4xf32>
    %c7_45 = arith.constant 7 : index
    %c0_46 = arith.constant 0 : index
    %c0_47 = arith.constant 0 : index
    %84 = vector.load %arg2[%c7_45, %c0_46, %c0_47] : memref<9x4x8xf32, #tpu.memory_space<vmem>>, vector<1x4x8xf32>
    %85 = vector.shape_cast %84 : vector<1x4x8xf32> to vector<4x8xf32>
    %cst_48 = arith.constant dense<0.000000e+00> : vector<256x8xf32>
    %86 = tpu.matmul %83, %85, %cst_48 {dimension_numbers = #tpu.dot_dimension_numbers<[1], [0], [0], [1], [0, 0, 1, 1], [], []>} : vector<256x4xf32>, vector<4x8xf32>, vector<256x8xf32> -> vector<256x8xf32>
    %87 = arith.addf %81, %86 : vector<256x8xf32>
    %c0_49 = arith.constant 0 : index
    %c41 = arith.constant 41 : index
    %c0_50 = arith.constant 0 : index
    %88 = vector.load %arg1[%c0_49, %c41, %c0_50] : memref<1x304x4xf32, #tpu.memory_space<vmem>>, vector<1x256x4xf32>
    %89 = vector.shape_cast %88 : vector<1x256x4xf32> to vector<256x4xf32>
    %cst_51 = arith.constant 0.000000e+00 : f32
    %90 = vector.broadcast %cst_51 : f32 to vector<256x4xf32>
    %91 = vector.shape_cast %20 : vector<256x1xi1> to vector<256x1xi1>
    %92 = vector.broadcast %91 : vector<256x1xi1> to vector<256x4xi1>
    %93 = arith.select %92, %89, %90 : vector<256x4xi1>, vector<256x4xf32>
    %c8_52 = arith.constant 8 : index
    %c0_53 = arith.constant 0 : index
    %c0_54 = arith.constant 0 : index
    %94 = vector.load %arg2[%c8_52, %c0_53, %c0_54] : memref<9x4x8xf32, #tpu.memory_space<vmem>>, vector<1x4x8xf32>
    %95 = vector.shape_cast %94 : vector<1x4x8xf32> to vector<4x8xf32>
    %cst_55 = arith.constant dense<0.000000e+00> : vector<256x8xf32>
    %96 = tpu.matmul %93, %95, %cst_55 {dimension_numbers = #tpu.dot_dimension_numbers<[1], [0], [0], [1], [0, 0, 1, 1], [], []>} : vector<256x4xf32>, vector<4x8xf32>, vector<256x8xf32> -> vector<256x8xf32>
    %97 = arith.addf %87, %96 : vector<256x8xf32>
    %c0_56 = arith.constant 0 : index
    %c0_57 = arith.constant 0 : index
    %c0_58 = arith.constant 0 : index
    %98 = vector.load %arg3[%c0_56, %c0_57, %c0_58] : memref<1x256x8xf32, #tpu.memory_space<vmem>>, vector<1x256x8xf32>
    %99 = vector.shape_cast %98 : vector<1x256x8xf32> to vector<256x8xf32>
    %100 = vector.shape_cast %97 : vector<256x8xf32> to vector<1x256x8xf32>
    tpu.vector_store %arg3[%c0_56, %c0_57, %c0_58], %100 {strides = array<i32>} : memref<1x256x8xf32, #tpu.memory_space<vmem>>, vector<1x256x8xf32>,
    return
  }
  func.func @transform_0(%arg0: i32) -> (i32, i32, i32) {
    %c0_i32 = arith.constant 0 : i32
    %c0_i32_0 = arith.constant 0 : i32
    %c0_i32_1 = arith.constant 0 : i32
    return %arg0, %c0_i32, %c0_i32_0 : i32, i32, i32
  }
  func.func @transform_1(%arg0: i32) -> (i32, i32, i32) {
    %c0_i32 = arith.constant 0 : i32
    %c0_i32_0 = arith.constant 0 : i32
    %c0_i32_1 = arith.constant 0 : i32
    %c0_i32_2 = arith.constant 0 : i32
    return %c0_i32, %c0_i32_0, %c0_i32_1 : i32, i32, i32
  }
  func.func @transform_2(%arg0: i32) -> (i32, i32, i32) {
    %c0_i32 = arith.constant 0 : i32
    %c0_i32_0 = arith.constant 0 : i32
    %c0_i32_1 = arith.constant 0 : i32
    return %arg0, %c0_i32, %c0_i32_0 : i32, i32, i32
  }
}

</mosaic_0001>

<llo_original>
// kernel: upsample_forward.1
$region0: #{upsample_forward.1}
  #allocation0 [shape = 'u32[]', space=smem, size = 0x4, offset = 0x4, fixed_abs, tag = 'smem constant byte address 0x4 - core index']
  #allocation1 [shape = 'u32[144,128]{1,0:T(1,128)}', space=vmem, size = 0x12000, scoped, tag = 'internal scratch']
  %s0 = inlined_call_operand.vmem [shape: f32[2,304,4], index: 0, kind: input, shape index: {}]
  %s1 = inlined_call_operand.vmem [shape: f32[9,4,8], index: 1, kind: input, shape index: {}]
  %s2 = inlined_call_operand.vmem [shape: f32[2,256,8], index: 2, kind: output, shape index: {}]
  %s3 = sld [smem:[#allocation0]]
  $region41: #{upsample_forward.1} parent=0
    _
  %s5 = ssub.s32 1, %s3
  %s6 = scalar_select 0, %s5, %s3
  loop: start=0, step=1, limit=4
  $region2: #{upsample_forward.1} parent=0 // loop_pre_header
    _
  $region3: #{upsample_forward.1} parent=0 // loop_header
    %s8 = sphi 0, %s12
    %p9 = scmp.ge.s32.totalorder %s8, 4
    %s18 = sphi 0, %s20
    %s21 = sphi 0, %s18
    %s22 = sphi 0, %s21
    %s38 = sphi 0, %s22
    %s42 = sphi 0, %s42
    %s44 = sphi 0, %s42
    %s45 = sphi 0, %s44
    %s59 = sphi 0, %s45
    %s65 = sphi 0, %s67
    %s68 = sphi 0, %s65
    %s69 = sphi 0, %s68
    %s85 = sphi 0, %s69
  $region4: #{upsample_forward.1} parent=0 // loop_header_branch
    %11 = sbr.rel (%p9) target = $region8
  $region5: #{upsample_forward.1} parent=0 // loop_body
    %s13 = ssub.s32 %s8, 1
    %s14 = ssub.s32 %s8, 2
    %s15 = sadd.s32 %s8, 1
    %s16 = ssub.s32 %s8, %s15
    %p17 = scmp.eq.s32.totalorder %s16, 0
    %s19 = sadd.s32 %s18, 1
    %s20 = scalar_select %p17, %s18, %s19
    %p23 = pneg %p17
    %p24 = scmp.eq.s32.totalorder %s8, 1
    %p25 = por %p23, %p24
    %p26 = scmp.ne.s32.totalorder %s18, %s21
    %p27 = scmp.eq.s32.totalorder %s8, 0
    %p28 = por %p26, %p27
    %p29 = scmp.ne.s32.totalorder %s18, %s21
    %p30 = scmp.eq.s32.totalorder %s13, 1
    %p31 = por %p29, %p30
    %p32 = scmp.ne.s32.totalorder %s21, %s22
    %p33 = scmp.eq.s32.totalorder %s13, 0
    %p34 = por %p32, %p33
    %p35 = scmp.ne.s32.totalorder %s21, %s22
    %p36 = scmp.eq.s32.totalorder %s14, 1
    %p37 = por %p35, %p36
    %p39 = scmp.ne.s32.totalorder %s22, %s38
    %p40 = scmp.eq.s32.totalorder %s14, 0
    %p41 = por %p39, %p40
    %s43 = sadd.s32 %s42, 1
    %p46 = scmp.eq.s32.totalorder %s8, 1
    %p47 = scmp.ne.s32.totalorder %s42, %s44
    %p48 = scmp.eq.s32.totalorder %s8, 0
    %p49 = por %p47, %p48
    %p50 = scmp.ne.s32.totalorder %s42, %s44
    %p51 = scmp.eq.s32.totalorder %s13, 1
    %p52 = por %p50, %p51
    %p53 = scmp.ne.s32.totalorder %s44, %s45
    %p54 = scmp.eq.s32.totalorder %s13, 0
    %p55 = por %p53, %p54
    %p56 = scmp.ne.s32.totalorder %s44, %s45
    %p57 = scmp.eq.s32.totalorder %s14, 1
    %p58 = por %p56, %p57
    %p60 = scmp.ne.s32.totalorder %s45, %s59
    %p61 = scmp.eq.s32.totalorder %s14, 0
    %p62 = por %p60, %p61
    %s63 = ssub.s32 %s8, %s15
    %p64 = scmp.eq.s32.totalorder %s63, 0
    %s66 = sadd.s32 %s65, 1
    %s67 = scalar_select %p64, %s65, %s66
    %p70 = pneg %p64
    %p71 = scmp.eq.s32.totalorder %s8, 1
    %p72 = por %p70, %p71
    %p73 = scmp.ne.s32.totalorder %s65, %s68
    %p74 = scmp.eq.s32.totalorder %s8, 0
    %p75 = por %p73, %p74
    %p76 = scmp.ne.s32.totalorder %s65, %s68
    %p77 = scmp.eq.s32.totalorder %s13, 1
    %p78 = por %p76, %p77
    %p79 = scmp.ne.s32.totalorder %s68, %s69
    %p80 = scmp.eq.s32.totalorder %s13, 0
    %p81 = por %p79, %p80
    %p82 = scmp.ne.s32.totalorder %s68, %s69
    %p83 = scmp.eq.s32.totalorder %s14, 1
    %p84 = por %p82, %p83
    %p86 = scmp.ne.s32.totalorder %s69, %s85
    %p87 = scmp.eq.s32.totalorder %s14, 0
    %p88 = por %p86, %p87
    %p89 = scmp.le.s32.totalorder 1, %s8
    %p90 = scmp.lt.s32.totalorder %s8, 3
    %p91 = pnand %p89, %p90
    %p92 = pneg %p91
    // Predicated region
    $region9: #{upsample_forward.1} parent=5 // pred_check
      _
    $region10: #{upsample_forward.1} parent=5 // pred_check_branch
      %94 = sbr.rel (%p91) target = $region12
    $region11: #{upsample_forward.1} parent=5 // pred_region
      %s95 = ssub.s32 %s8, 1
      // Predicated region
      $region13: #{upsample_forward.1} parent=11 // pred_check
        %p96 = pneg %p55
      $region14: #{upsample_forward.1} parent=11 // pred_check_branch
        %98 = sbr.rel (%p96) target = $region16
      $region15: #{upsample_forward.1} parent=11 // pred_region
        _
      $region16: #{upsample_forward.1} parent=11 // pred_fallthru
        _
    $region12: #{upsample_forward.1} parent=5 // pred_fallthru
      _
    %p99 = scmp.lt.s32.totalorder %s8, 2
    // Predicated region
    $region17: #{upsample_forward.1} parent=5 // pred_check
      %p100 = pneg %p99
    $region18: #{upsample_forward.1} parent=5 // pred_check_branch
      %102 = sbr.rel (%p100) target = $region20
    $region19: #{upsample_forward.1} parent=5 // pred_region
      // Predicated region
      $region21: #{upsample_forward.1} parent=19 // pred_check
        %p103 = pneg %p28
      $region22: #{upsample_forward.1} parent=19 // pred_check_branch
        %105 = sbr.rel (%p103) target = $region24
      $region23: #{upsample_forward.1} parent=19 // pred_region
        %p106 = scmp.lt.s32.totalorder %s8, 1
        %s107 = scalar_select %p106, %s8, 1
        %s108 = smul.addr %s107, 38
        %s109 = smul.addr %s108, 8
        %s110 = scalar_lea.vmem %s0, %s109
      $region24: #{upsample_forward.1} parent=19 // pred_fallthru
        _
    $region20: #{upsample_forward.1} parent=5 // pred_fallthru
      _
    %p111 = scmp.le.s32.totalorder 1, %s8
    %p112 = scmp.lt.s32.totalorder %s8, 3
    %p113 = pnand %p111, %p112
    %p114 = pneg %p113
    // Predicated region
    $region25: #{upsample_forward.1} parent=5 // pred_check
      _
    $region26: #{upsample_forward.1} parent=5 // pred_check_branch
      %116 = sbr.rel (%p113) target = $region28
    $region27: #{upsample_forward.1} parent=5 // pred_region
      %s117 = ssub.s32 %s8, 1
      %p118 = scmp.lt.s32.totalorder %s13, 1
      %s119 = scalar_select %p118, %s13, 1
      %s120 = smul.addr %s119, 38
      %s121 = smul.addr %s120, 8
      %s122 = scalar_lea.vmem %s0, %s121
      %p123 = pneg %p34
      %p124 = pneg %p31
      %p125 = pneg %p55
      %p126 = pneg %p52
      %p127 = pneg %p81
      %p128 = pneg %p78
      %p129 = scmp.lt.s32.totalorder %s13, 1
      %s130 = scalar_select %p129, %s13, 1
      %s131 = smul.addr %s130, 32
      %s132 = smul.addr %s131, 8
      %s133 = scalar_lea.vmem %s2, %s132
      %p134 = scmp.lt.s32.totalorder %s13, 1
      %s135 = scalar_select %p134, %s13, 1
      %s136 = smul.addr %s135, 38
      %s137 = smul.addr %s136, 8
      %s138 = scalar_lea.vmem %s0, %s137
      %p139 = scmp.lt.s32.totalorder %s13, 1
      %s140 = scalar_select %p139, %s13, 1
      %s141 = smul.addr %s140, 32
      %s142 = smul.addr %s141, 8
      %s143 = scalar_lea.vmem %s2, %s142
      %v144 = vlaneseq
      %v145 = vshrl.u32 %v144, 7
      %v146 = vadd.s32 %v145, 8
      %v147 = vadd.s32 %v145, 16
      %v148 = vadd.s32 %v145, 24
      %v149 = vadd.s32 %v145, 32
      %v150 = vadd.s32 %v145, 40
      %v151 = vadd.s32 %v145, 48
      %v152 = vadd.s32 %v145, 56
      %v153 = vadd.s32 %v145, 64
      %v154 = vadd.s32 %v145, 72
      %v155 = vadd.s32 %v145, 80
      %v156 = vadd.s32 %v145, 88
      %v157 = vadd.s32 %v145, 96
      %v158 = vadd.s32 %v145, 104
      %v159 = vadd.s32 %v145, 112
      %v160 = vadd.s32 %v145, 120
      %v161 = vadd.s32 %v145, 128
      %v162 = vadd.s32 %v145, 136
      %v163 = vadd.s32 %v145, 144
      %v164 = vadd.s32 %v145, 152
      %v165 = vadd.s32 %v145, 160
      %v166 = vadd.s32 %v145, 168
      %v167 = vadd.s32 %v145, 176
      %v168 = vadd.s32 %v145, 184
      %v169 = vadd.s32 %v145, 192
      %v170 = vadd.s32 %v145, 200
      %v171 = vadd.s32 %v145, 208
      %v172 = vadd.s32 %v145, 216
      %v173 = vadd.s32 %v145, 224
      %v174 = vadd.s32 %v145, 232
      %v175 = vadd.s32 %v145, 240
      %v176 = vadd.s32 %v145, 248
      %vm177 = vcmp.lt.s32.totalorder %v145, 0
      %v178 = vsub.s32 0, %v145
      %v179 = vsel %vm177, %v178, %v145
      %v180 = vshrl.u32 %v179, 4
      %v181 = vand.u32 %v179, 15
      %v182 = vsub.s32 0, %v181
      %v183 = vsel %vm177, %v182, %v181
      %vm184 = vcmp.lt.s32.totalorder %v146, 0
      %v185 = vsub.s32 0, %v146
      %v186 = vsel %vm184, %v185, %v146
      %v187 = vshrl.u32 %v186, 4
      %v188 = vand.u32 %v186, 15
      %v189 = vsub.s32 0, %v188
      %v190 = vsel %vm184, %v189, %v188
      %vm191 = vcmp.lt.s32.totalorder %v147, 0
      %v192 = vsub.s32 0, %v147
      %v193 = vsel %vm191, %v192, %v147
      %v194 = vshrl.u32 %v193, 4
      %v195 = vand.u32 %v193, 15
      %v196 = vsub.s32 0, %v195
      %v197 = vsel %vm191, %v196, %v195
      %vm198 = vcmp.lt.s32.totalorder %v148, 0
      %v199 = vsub.s32 0, %v148
      %v200 = vsel %vm198, %v199, %v148
      %v201 = vshrl.u32 %v200, 4
      %v202 = vand.u32 %v200, 15
      %v203 = vsub.s32 0, %v202
      %v204 = vsel %vm198, %v203, %v202
      %vm205 = vcmp.lt.s32.totalorder %v149, 0
      %v206 = vsub.s32 0, %v149
      %v207 = vsel %vm205, %v206, %v149
      %v208 = vshrl.u32 %v207, 4
      %v209 = vand.u32 %v207, 15
      %v210 = vsub.s32 0, %v209
      %v211 = vsel %vm205, %v210, %v209
      %vm212 = vcmp.lt.s32.totalorder %v150, 0
      %v213 = vsub.s32 0, %v150
      %v214 = vsel %vm212, %v213, %v150
      %v215 = vshrl.u32 %v214, 4
      %v216 = vand.u32 %v214, 15
      %v217 = vsub.s32 0, %v216
      %v218 = vsel %vm212, %v217, %v216
      %vm219 = vcmp.lt.s32.totalorder %v151, 0
      %v220 = vsub.s32 0, %v151
      %v221 = vsel %vm219, %v220, %v151
      %v222 = vshrl.u32 %v221, 4
      %v223 = vand.u32 %v221, 15
      %v224 = vsub.s32 0, %v223
      %v225 = vsel %vm219, %v224, %v223
      %vm226 = vcmp.lt.s32.totalorder %v152, 0
      %v227 = vsub.s32 0, %v152
      %v228 = vsel %vm226, %v227, %v152
      %v229 = vshrl.u32 %v228, 4
      %v230 = vand.u32 %v228, 15
      %v231 = vsub.s32 0, %v230
      %v232 = vsel %vm226, %v231, %v230
      %vm233 = vcmp.lt.s32.totalorder %v153, 0
      %v234 = vsub.s32 0, %v153
      %v235 = vsel %vm233, %v234, %v153
      %v236 = vshrl.u32 %v235, 4
      %v237 = vand.u32 %v235, 15
      %v238 = vsub.s32 0, %v237
      %v239 = vsel %vm233, %v238, %v237
      %vm240 = vcmp.lt.s32.totalorder %v154, 0
      %v241 = vsub.s32 0, %v154
      %v242 = vsel %vm240, %v241, %v154
      %v243 = vshrl.u32 %v242, 4
      %v244 = vand.u32 %v242, 15
      %v245 = vsub.s32 0, %v244
      %v246 = vsel %vm240, %v245, %v244
      %vm247 = vcmp.lt.s32.totalorder %v155, 0
      %v248 = vsub.s32 0, %v155
      %v249 = vsel %vm247, %v248, %v155
      %v250 = vshrl.u32 %v249, 4
      %v251 = vand.u32 %v249, 15
      %v252 = vsub.s32 0, %v251
      %v253 = vsel %vm247, %v252, %v251
      %vm254 = vcmp.lt.s32.totalorder %v156, 0
      %v255 = vsub.s32 0, %v156
      %v256 = vsel %vm254, %v255, %v156
      %v257 = vshrl.u32 %v256, 4
      %v258 = vand.u32 %v256, 15
      %v259 = vsub.s32 0, %v258
      %v260 = vsel %vm254, %v259, %v258
      %vm261 = vcmp.lt.s32.totalorder %v157, 0
      %v262 = vsub.s32 0, %v157
      %v263 = vsel %vm261, %v262, %v157
      %v264 = vshrl.u32 %v263, 4
      %v265 = vand.u32 %v263, 15
      %v266 = vsub.s32 0, %v265
      %v267 = vsel %vm261, %v266, %v265
      %vm268 = vcmp.lt.s32.totalorder %v158, 0
      %v269 = vsub.s32 0, %v158
      %v270 = vsel %vm268, %v269, %v158
      %v271 = vshrl.u32 %v270, 4
      %v272 = vand.u32 %v270, 15
      %v273 = vsub.s32 0, %v272
      %v274 = vsel %vm268, %v273, %v272
      %vm275 = vcmp.lt.s32.totalorder %v159, 0
      %v276 = vsub.s32 0, %v159
      %v277 = vsel %vm275, %v276, %v159
      %v278 = vshrl.u32 %v277, 4
      %v279 = vand.u32 %v277, 15
      %v280 = vsub.s32 0, %v279
      %v281 = vsel %vm275, %v280, %v279
      %vm282 = vcmp.lt.s32.totalorder %v160, 0
      %v283 = vsub.s32 0, %v160
      %v284 = vsel %vm282, %v283, %v160
      %v285 = vshrl.u32 %v284, 4
      %v286 = vand.u32 %v284, 15
      %v287 = vsub.s32 0, %v286
      %v288 = vsel %vm282, %v287, %v286
      %vm289 = vcmp.lt.s32.totalorder %v161, 0
      %v290 = vsub.s32 0, %v161
      %v291 = vsel %vm289, %v290, %v161
      %v292 = vshrl.u32 %v291, 4
      %v293 = vand.u32 %v291, 15
      %v294 = vsub.s32 0, %v293
      %v295 = vsel %vm289, %v294, %v293
      %vm296 = vcmp.lt.s32.totalorder %v162, 0
      %v297 = vsub.s32 0, %v162
      %v298 = vsel %vm296, %v297, %v162
      %v299 = vshrl.u32 %v298, 4
      %v300 = vand.u32 %v298, 15
      %v301 = vsub.s32 0, %v300
      %v302 = vsel %vm296, %v301, %v300
      %vm303 = vcmp.lt.s32.totalorder %v163, 0
      %v304 = vsub.s32 0, %v163
      %v305 = vsel %vm303, %v304, %v163
      %v306 = vshrl.u32 %v305, 4
      %v307 = vand.u32 %v305, 15
      %v308 = vsub.s32 0, %v307
      %v309 = vsel %vm303, %v308, %v307
      %vm310 = vcmp.lt.s32.totalorder %v164, 0
      %v311 = vsub.s32 0, %v164
      %v312 = vsel %vm310, %v311, %v164
      %v313 = vshrl.u32 %v312, 4
      %v314 = vand.u32 %v312, 15
      %v315 = vsub.s32 0, %v314
      %v316 = vsel %vm310, %v315, %v314
      %vm317 = vcmp.lt.s32.totalorder %v165, 0
      %v318 = vsub.s32 0, %v165
      %v319 = vsel %vm317, %v318, %v165
      %v320 = vshrl.u32 %v319, 4
      %v321 = vand.u32 %v319, 15
      %v322 = vsub.s32 0, %v321
      %v323 = vsel %vm317, %v322, %v321
      %vm324 = vcmp.lt.s32.totalorder %v166, 0
      %v325 = vsub.s32 0, %v166
      %v326 = vsel %vm324, %v325, %v166
      %v327 = vshrl.u32 %v326, 4
      %v328 = vand.u32 %v326, 15
      %v329 = vsub.s32 0, %v328
      %v330 = vsel %vm324, %v329, %v328
      %vm331 = vcmp.lt.s32.totalorder %v167, 0
      %v332 = vsub.s32 0, %v167
      %v333 = vsel %vm331, %v332, %v167
      %v334 = vshrl.u32 %v333, 4
      %v335 = vand.u32 %v333, 15
      %v336 = vsub.s32 0, %v335
      %v337 = vsel %vm331, %v336, %v335
      %vm338 = vcmp.lt.s32.totalorder %v168, 0
      %v339 = vsub.s32 0, %v168
      %v340 = vsel %vm338, %v339, %v168
      %v341 = vshrl.u32 %v340, 4
      %v342 = vand.u32 %v340, 15
      %v343 = vsub.s32 0, %v342
      %v344 = vsel %vm338, %v343, %v342
      %vm345 = vcmp.lt.s32.totalorder %v169, 0
      %v346 = vsub.s32 0, %v169
      %v347 = vsel %vm345, %v346, %v169
      %v348 = vshrl.u32 %v347, 4
      %v349 = vand.u32 %v347, 15
      %v350 = vsub.s32 0, %v349
      %v351 = vsel %vm345, %v350, %v349
      %vm352 = vcmp.lt.s32.totalorder %v170, 0
      %v353 = vsub.s32 0, %v170
      %v354 = vsel %vm352, %v353, %v170
      %v355 = vshrl.u32 %v354, 4
      %v356 = vand.u32 %v354, 15
      %v357 = vsub.s32 0, %v356
      %v358 = vsel %vm352, %v357, %v356
      %vm359 = vcmp.lt.s32.totalorder %v171, 0
      %v360 = vsub.s32 0, %v171
      %v361 = vsel %vm359, %v360, %v171
      %v362 = vshrl.u32 %v361, 4
      %v363 = vand.u32 %v361, 15
      %v364 = vsub.s32 0, %v363
      %v365 = vsel %vm359, %v364, %v363
      %vm366 = vcmp.lt.s32.totalorder %v172, 0
      %v367 = vsub.s32 0, %v172
      %v368 = vsel %vm366, %v367, %v172
      %v369 = vshrl.u32 %v368, 4
      %v370 = vand.u32 %v368, 15
      %v371 = vsub.s32 0, %v370
      %v372 = vsel %vm366, %v371, %v370
      %vm373 = vcmp.lt.s32.totalorder %v173, 0
      %v374 = vsub.s32 0, %v173
      %v375 = vsel %vm373, %v374, %v173
      %v376 = vshrl.u32 %v375, 4
      %v377 = vand.u32 %v375, 15
      %v378 = vsub.s32 0, %v377
      %v379 = vsel %vm373, %v378, %v377
      %vm380 = vcmp.lt.s32.totalorder %v174, 0
      %v381 = vsub.s32 0, %v174
      %v382 = vsel %vm380, %v381, %v174
      %v383 = vshrl.u32 %v382, 4
      %v384 = vand.u32 %v382, 15
      %v385 = vsub.s32 0, %v384
      %v386 = vsel %vm380, %v385, %v384
      %vm387 = vcmp.lt.s32.totalorder %v175, 0
      %v388 = vsub.s32 0, %v175
      %v389 = vsel %vm387, %v388, %v175
      %v390 = vshrl.u32 %v389, 4
      %v391 = vand.u32 %v389, 15
      %v392 = vsub.s32 0, %v391
      %v393 = vsel %vm387, %v392, %v391
      %vm394 = vcmp.lt.s32.totalorder %v176, 0
      %v395 = vsub.s32 0, %v176
      %v396 = vsel %vm394, %v395, %v176
      %v397 = vshrl.u32 %v396, 4
      %v398 = vand.u32 %v396, 15
      %v399 = vsub.s32 0, %v398
      %v400 = vsel %vm394, %v399, %v398
      %vm401 = vcmp.ne.s32.totalorder %v183, 0
      %vm402 = vcmp.ne.s32.totalorder %v190, 0
      %vm403 = vcmp.ne.s32.totalorder %v197, 0
      %vm404 = vcmp.ne.s32.totalorder %v204, 0
      %vm405 = vcmp.ne.s32.totalorder %v211, 0
      %vm406 = vcmp.ne.s32.totalorder %v218, 0
      %vm407 = vcmp.ne.s32.totalorder %v225, 0
      %vm408 = vcmp.ne.s32.totalorder %v232, 0
      %vm409 = vcmp.ne.s32.totalorder %v239, 0
      %vm410 = vcmp.ne.s32.totalorder %v246, 0
      %vm411 = vcmp.ne.s32.totalorder %v253, 0
      %vm412 = vcmp.ne.s32.totalorder %v260, 0
      %vm413 = vcmp.ne.s32.totalorder %v267, 0
      %vm414 = vcmp.ne.s32.totalorder %v274, 0
      %vm415 = vcmp.ne.s32.totalorder %v281, 0
      %vm416 = vcmp.ne.s32.totalorder %v288, 0
      %vm417 = vcmp.ne.s32.totalorder %v295, 0
      %vm418 = vcmp.ne.s32.totalorder %v302, 0
      %vm419 = vcmp.ne.s32.totalorder %v309, 0
      %vm420 = vcmp.ne.s32.totalorder %v316, 0
      %vm421 = vcmp.ne.s32.totalorder %v323, 0
      %vm422 = vcmp.ne.s32.totalorder %v330, 0
      %vm423 = vcmp.ne.s32.totalorder %v337, 0
      %vm424 = vcmp.ne.s32.totalorder %v344, 0
      %vm425 = vcmp.ne.s32.totalorder %v351, 0
      %vm426 = vcmp.ne.s32.totalorder %v358, 0
      %vm427 = vcmp.ne.s32.totalorder %v365, 0
      %vm428 = vcmp.ne.s32.totalorder %v372, 0
      %vm429 = vcmp.ne.s32.totalorder %v379, 0
      %vm430 = vcmp.ne.s32.totalorder %v386, 0
      %vm431 = vcmp.ne.s32.totalorder %v393, 0
      %vm432 = vcmp.ne.s32.totalorder %v400, 0
      %vm433 = vcmp.lt.s32.totalorder %v183, 0
      %vm434 = vcmp.lt.s32.totalorder %v190, 0
      %vm435 = vcmp.lt.s32.totalorder %v197, 0
      %vm436 = vcmp.lt.s32.totalorder %v204, 0
      %vm437 = vcmp.lt.s32.totalorder %v211, 0
      %vm438 = vcmp.lt.s32.totalorder %v218, 0
      %vm439 = vcmp.lt.s32.totalorder %v225, 0
      %vm440 = vcmp.lt.s32.totalorder %v232, 0
      %vm441 = vcmp.lt.s32.totalorder %v239, 0
      %vm442 = vcmp.lt.s32.totalorder %v246, 0
      %vm443 = vcmp.lt.s32.totalorder %v253, 0
      %vm444 = vcmp.lt.s32.totalorder %v260, 0
      %vm445 = vcmp.lt.s32.totalorder %v267, 0
      %vm446 = vcmp.lt.s32.totalorder %v274, 0
      %vm447 = vcmp.lt.s32.totalorder %v281, 0
      %vm448 = vcmp.lt.s32.totalorder %v288, 0
      %vm449 = vcmp.lt.s32.totalorder %v295, 0
      %vm450 = vcmp.lt.s32.totalorder %v302, 0
      %vm451 = vcmp.lt.s32.totalorder %v309, 0
      %vm452 = vcmp.lt.s32.totalorder %v316, 0
      %vm453 = vcmp.lt.s32.totalorder %v323, 0
      %vm454 = vcmp.lt.s32.totalorder %v330, 0
      %vm455 = vcmp.lt.s32.totalorder %v337, 0
      %vm456 = vcmp.lt.s32.totalorder %v344, 0
      %vm457 = vcmp.lt.s32.totalorder %v351, 0
      %vm458 = vcmp.lt.s32.totalorder %v358, 0
      %vm459 = vcmp.lt.s32.totalorder %v365, 0
      %vm460 = vcmp.lt.s32.totalorder %v372, 0
      %vm461 = vcmp.lt.s32.totalorder %v379, 0
      %vm462 = vcmp.lt.s32.totalorder %v386, 0
      %vm463 = vcmp.lt.s32.totalorder %v393, 0
      %vm464 = vcmp.lt.s32.totalorder %v400, 0
      %vm465 = vmand %vm433, %vm401
      %vm466 = vmand %vm434, %vm402
      %vm467 = vmand %vm435, %vm403
      %vm468 = vmand %vm436, %vm404
      %vm469 = vmand %vm437, %vm405
      %vm470 = vmand %vm438, %vm406
      %vm471 = vmand %vm439, %vm407
      %vm472 = vmand %vm440, %vm408
      %vm473 = vmand %vm441, %vm409
      %vm474 = vmand %vm442, %vm410
      %vm475 = vmand %vm443, %vm411
      %vm476 = vmand %vm444, %vm412
      %vm477 = vmand %vm445, %vm413
      %vm478 = vmand %vm446, %vm414
      %vm479 = vmand %vm447, %vm415
      %vm480 = vmand %vm448, %vm416
      %vm481 = vmand %vm449, %vm417
      %vm482 = vmand %vm450, %vm418
      %vm483 = vmand %vm451, %vm419
      %vm484 = vmand %vm452, %vm420
      %vm485 = vmand %vm453, %vm421
      %vm486 = vmand %vm454, %vm422
      %vm487 = vmand %vm455, %vm423
      %vm488 = vmand %vm456, %vm424
      %vm489 = vmand %vm457, %vm425
      %vm490 = vmand %vm458, %vm426
      %vm491 = vmand %vm459, %vm427
      %vm492 = vmand %vm460, %vm428
      %vm493 = vmand %vm461, %vm429
      %vm494 = vmand %vm462, %vm430
      %vm495 = vmand %vm463, %vm431
      %vm496 = vmand %vm464, %vm432
      %v497 = vadd.s32 %v183, 16
      %v498 = vadd.s32 %v190, 16
      %v499 = vadd.s32 %v197, 16
      %v500 = vadd.s32 %v204, 16
      %v501 = vadd.s32 %v211, 16
      %v502 = vadd.s32 %v218, 16
      %v503 = vadd.s32 %v225, 16
      %v504 = vadd.s32 %v232, 16
      %v505 = vadd.s32 %v239, 16
      %v506 = vadd.s32 %v246, 16
      %v507 = vadd.s32 %v253, 16
      %v508 = vadd.s32 %v260, 16
      %v509 = vadd.s32 %v267, 16
      %v510 = vadd.s32 %v274, 16
      %v511 = vadd.s32 %v281, 16
      %v512 = vadd.s32 %v288, 16
      %v513 = vadd.s32 %v295, 16
      %v514 = vadd.s32 %v302, 16
      %v515 = vadd.s32 %v309, 16
      %v516 = vadd.s32 %v316, 16
      %v517 = vadd.s32 %v323, 16
      %v518 = vadd.s32 %v330, 16
      %v519 = vadd.s32 %v337, 16
      %v520 = vadd.s32 %v344, 16
      %v521 = vadd.s32 %v351, 16
      %v522 = vadd.s32 %v358, 16
      %v523 = vadd.s32 %v365, 16
      %v524 = vadd.s32 %v372, 16
      %v525 = vadd.s32 %v379, 16
      %v526 = vadd.s32 %v386, 16
      %v527 = vadd.s32 %v393, 16
      %v528 = vadd.s32 %v400, 16
      %v529 = vsel %vm465, %v497, %v183
      %v530 = vsel %vm466, %v498, %v190
      %v531 = vsel %vm467, %v499, %v197
      %v532 = vsel %vm468, %v500, %v204
      %v533 = vsel %vm469, %v501, %v211
      %v534 = vsel %vm470, %v502, %v218
      %v535 = vsel %vm471, %v503, %v225
      %v536 = vsel %vm472, %v504, %v232
      %v537 = vsel %vm473, %v505, %v239
      %v538 = vsel %vm474, %v506, %v246
      %v539 = vsel %vm475, %v507, %v253
      %v540 = vsel %vm476, %v508, %v260
      %v541 = vsel %vm477, %v509, %v267
      %v542 = vsel %vm478, %v510, %v274
      %v543 = vsel %vm479, %v511, %v281
      %v544 = vsel %vm480, %v512, %v288
      %v545 = vsel %vm481, %v513, %v295
      %v546 = vsel %vm482, %v514, %v302
      %v547 = vsel %vm483, %v515, %v309
      %v548 = vsel %vm484, %v516, %v316
      %v549 = vsel %vm485, %v517, %v323
      %v550 = vsel %vm486, %v518, %v330
      %v551 = vsel %vm487, %v519, %v337
      %v552 = vsel %vm488, %v520, %v344
      %v553 = vsel %vm489, %v521, %v351
      %v554 = vsel %vm490, %v522, %v358
      %v555 = vsel %vm491, %v523, %v365
      %v556 = vsel %vm492, %v524, %v372
      %v557 = vsel %vm493, %v525, %v379
      %v558 = vsel %vm494, %v526, %v386
      %v559 = vsel %vm495, %v527, %v393
      %v560 = vsel %vm496, %v528, %v400
      %vm561 = vcmp.ge.s32.totalorder %v529, 1
      %vm562 = vcmp.ge.s32.totalorder %v530, 1
      %vm563 = vcmp.ge.s32.totalorder %v531, 1
      %vm564 = vcmp.ge.s32.totalorder %v532, 1
      %vm565 = vcmp.ge.s32.totalorder %v533, 1
      %vm566 = vcmp.ge.s32.totalorder %v534, 1
      %vm567 = vcmp.ge.s32.totalorder %v535, 1
      %vm568 = vcmp.ge.s32.totalorder %v536, 1
      %vm569 = vcmp.ge.s32.totalorder %v537, 1
      %vm570 = vcmp.ge.s32.totalorder %v538, 1
      %vm571 = vcmp.ge.s32.totalorder %v539, 1
      %vm572 = vcmp.ge.s32.totalorder %v540, 1
      %vm573 = vcmp.ge.s32.totalorder %v541, 1
      %vm574 = vcmp.ge.s32.totalorder %v542, 1
      %vm575 = vcmp.ge.s32.totalorder %v543, 1
      %vm576 = vcmp.ge.s32.totalorder %v544, 1
      %vm577 = vcmp.ge.s32.totalorder %v545, 1
      %vm578 = vcmp.ge.s32.totalorder %v546, 1
      %vm579 = vcmp.ge.s32.totalorder %v547, 1
      %vm580 = vcmp.ge.s32.totalorder %v548, 1
      %vm581 = vcmp.ge.s32.totalorder %v549, 1
      %vm582 = vcmp.ge.s32.totalorder %v550, 1
      %vm583 = vcmp.ge.s32.totalorder %v551, 1
      %vm584 = vcmp.ge.s32.totalorder %v552, 1
      %vm585 = vcmp.ge.s32.totalorder %v553, 1
      %vm586 = vcmp.ge.s32.totalorder %v554, 1
      %vm587 = vcmp.ge.s32.totalorder %v555, 1
      %vm588 = vcmp.ge.s32.totalorder %v556, 1
      %vm589 = vcmp.ge.s32.totalorder %v557, 1
      %vm590 = vcmp.ge.s32.totalorder %v558, 1
      %vm591 = vcmp.ge.s32.totalorder %v559, 1
      %vm592 = vcmp.ge.s32.totalorder %v560, 1
      %vm593 = vcmp.le.s32.totalorder %v529, 14
      %vm594 = vcmp.le.s32.totalorder %v530, 14
      %vm595 = vcmp.le.s32.totalorder %v531, 14
      %vm596 = vcmp.le.s32.totalorder %v532, 14
      %vm597 = vcmp.le.s32.totalorder %v533, 14
      %vm598 = vcmp.le.s32.totalorder %v534, 14
      %vm599 = vcmp.le.s32.totalorder %v535, 14
      %vm600 = vcmp.le.s32.totalorder %v536, 14
      %vm601 = vcmp.le.s32.totalorder %v537, 14
      %vm602 = vcmp.le.s32.totalorder %v538, 14
      %vm603 = vcmp.le.s32.totalorder %v539, 14
      %vm604 = vcmp.le.s32.totalorder %v540, 14
      %vm605 = vcmp.le.s32.totalorder %v541, 14
      %vm606 = vcmp.le.s32.totalorder %v542, 14
      %vm607 = vcmp.le.s32.totalorder %v543, 14
      %vm608 = vcmp.le.s32.totalorder %v544, 14
      %vm609 = vcmp.le.s32.totalorder %v545, 14
      %vm610 = vcmp.le.s32.totalorder %v546, 14
      %vm611 = vcmp.le.s32.totalorder %v547, 14
      %vm612 = vcmp.le.s32.totalorder %v548, 14
      %vm613 = vcmp.le.s32.totalorder %v549, 14
      %vm614 = vcmp.le.s32.totalorder %v550, 14
      %vm615 = vcmp.le.s32.totalorder %v551, 14
      %vm616 = vcmp.le.s32.totalorder %v552, 14
      %vm617 = vcmp.le.s32.totalorder %v553, 14
      %vm618 = vcmp.le.s32.totalorder %v554, 14
      %vm619 = vcmp.le.s32.totalorder %v555, 14
      %vm620 = vcmp.le.s32.totalorder %v556, 14
      %vm621 = vcmp.le.s32.totalorder %v557, 14
      %vm622 = vcmp.le.s32.totalorder %v558, 14
      %vm623 = vcmp.le.s32.totalorder %v559, 14
      %vm624 = vcmp.le.s32.totalorder %v560, 14
      %v625 = vld [vmem:[%s138 + $0x7] sm:$0xff]
      %v626 = vld [vmem:[%s138 + $0xf] sm:$0xff]
      %v627 = vld [vmem:[%s138 + $0x17] sm:$0xff]
      %v628 = vld [vmem:[%s138 + $0x1f] sm:$0xff]
      %v629 = vld [vmem:[%s138 + $0x27] sm:$0xff]
      %v630 = vld [vmem:[%s138 + $0x2f] sm:$0xff]
      %v631 = vld [vmem:[%s138 + $0x37] sm:$0xff]
      %v632 = vld [vmem:[%s138 + $0x3f] sm:$0xff]
      %v633 = vld [vmem:[%s138 + $0x47] sm:$0xff]
      %v634 = vld [vmem:[%s138 + $0x4f] sm:$0xff]
      %v635 = vld [vmem:[%s138 + $0x57] sm:$0xff]
      %v636 = vld [vmem:[%s138 + $0x5f] sm:$0xff]
      %v637 = vld [vmem:[%s138 + $0x67] sm:$0xff]
      %v638 = vld [vmem:[%s138 + $0x6f] sm:$0xff]
      %v639 = vld [vmem:[%s138 + $0x77] sm:$0xff]
      %v640 = vld [vmem:[%s138 + $0x7f] sm:$0xff]
      %v641 = vld [vmem:[%s138 + $0x87] sm:$0xff]
      %v642 = vld [vmem:[%s138 + $0x8f] sm:$0xff]
      %v643 = vld [vmem:[%s138 + $0x97] sm:$0xff]
      %v644 = vld [vmem:[%s138 + $0x9f] sm:$0xff]
      %v645 = vld [vmem:[%s138 + $0xa7] sm:$0xff]
      %v646 = vld [vmem:[%s138 + $0xaf] sm:$0xff]
      %v647 = vld [vmem:[%s138 + $0xb7] sm:$0xff]
      %v648 = vld [vmem:[%s138 + $0xbf] sm:$0xff]
      %v649 = vld [vmem:[%s138 + $0xc7] sm:$0xff]
      %v650 = vld [vmem:[%s138 + $0xcf] sm:$0xff]
      %v651 = vld [vmem:[%s138 + $0xd7] sm:$0xff]
      %v652 = vld [vmem:[%s138 + $0xdf] sm:$0xff]
      %v653 = vld [vmem:[%s138 + $0xe7] sm:$0xff]
      %v654 = vld [vmem:[%s138 + $0xef] sm:$0xff]
      %v655 = vld [vmem:[%s138 + $0xf7] sm:$0xff]
      %v656 = vld [vmem:[%s138 + $0xff] sm:$0xff]
      %v657 = vsel %vm561, 1, 0
      %v658 = vsel %vm562, 1, 0
      %v659 = vsel %vm563, 1, 0
      %v660 = vsel %vm564, 1, 0
      %v661 = vsel %vm565, 1, 0
      %v662 = vsel %vm566, 1, 0
      %v663 = vsel %vm567, 1, 0
      %v664 = vsel %vm568, 1, 0
      %v665 = vsel %vm569, 1, 0
      %v666 = vsel %vm570, 1, 0
      %v667 = vsel %vm571, 1, 0
      %v668 = vsel %vm572, 1, 0
      %v669 = vsel %vm573, 1, 0
      %v670 = vsel %vm574, 1, 0
      %v671 = vsel %vm575, 1, 0
      %v672 = vsel %vm576, 1, 0
      %v673 = vsel %vm577, 1, 0
      %v674 = vsel %vm578, 1, 0
      %v675 = vsel %vm579, 1, 0
      %v676 = vsel %vm580, 1, 0
      %v677 = vsel %vm581, 1, 0
      %v678 = vsel %vm582, 1, 0
      %v679 = vsel %vm583, 1, 0
      %v680 = vsel %vm584, 1, 0
      %v681 = vsel %vm585, 1, 0
      %v682 = vsel %vm586, 1, 0
      %v683 = vsel %vm587, 1, 0
      %v684 = vsel %vm588, 1, 0
      %v685 = vsel %vm589, 1, 0
      %v686 = vsel %vm590, 1, 0
      %v687 = vsel %vm591, 1, 0
      %v688 = vsel %vm592, 1, 0
      %vm689 = vcmp.eq.s32.totalorder %v657, 1
      %vm690 = vcmp.eq.s32.totalorder %v658, 1
      %vm691 = vcmp.eq.s32.totalorder %v659, 1
      %vm692 = vcmp.eq.s32.totalorder %v660, 1
      %vm693 = vcmp.eq.s32.totalorder %v661, 1
      %vm694 = vcmp.eq.s32.totalorder %v662, 1
      %vm695 = vcmp.eq.s32.totalorder %v663, 1
      %vm696 = vcmp.eq.s32.totalorder %v664, 1
      %vm697 = vcmp.eq.s32.totalorder %v665, 1
      %vm698 = vcmp.eq.s32.totalorder %v666, 1
      %vm699 = vcmp.eq.s32.totalorder %v667, 1
      %vm700 = vcmp.eq.s32.totalorder %v668, 1
      %vm701 = vcmp.eq.s32.totalorder %v669, 1
      %vm702 = vcmp.eq.s32.totalorder %v670, 1
      %vm703 = vcmp.eq.s32.totalorder %v671, 1
      %vm704 = vcmp.eq.s32.totalorder %v672, 1
      %vm705 = vcmp.eq.s32.totalorder %v673, 1
      %vm706 = vcmp.eq.s32.totalorder %v674, 1
      %vm707 = vcmp.eq.s32.totalorder %v675, 1
      %vm708 = vcmp.eq.s32.totalorder %v676, 1
      %vm709 = vcmp.eq.s32.totalorder %v677, 1
      %vm710 = vcmp.eq.s32.totalorder %v678, 1
      %vm711 = vcmp.eq.s32.totalorder %v679, 1
      %vm712 = vcmp.eq.s32.totalorder %v680, 1
      %vm713 = vcmp.eq.s32.totalorder %v681, 1
      %vm714 = vcmp.eq.s32.totalorder %v682, 1
      %vm715 = vcmp.eq.s32.totalorder %v683, 1
      %vm716 = vcmp.eq.s32.totalorder %v684, 1
      %vm717 = vcmp.eq.s32.totalorder %v685, 1
      %vm718 = vcmp.eq.s32.totalorder %v686, 1
      %vm719 = vcmp.eq.s32.totalorder %v687, 1
      %vm720 = vcmp.eq.s32.totalorder %v688, 1
      %v721 = vsel %vm689, %v625, 0.0
      %v722 = vsel %vm690, %v626, 0.0
      %v723 = vsel %vm691, %v627, 0.0
      %v724 = vsel %vm692, %v628, 0.0
      %v725 = vsel %vm693, %v629, 0.0
      %v726 = vsel %vm694, %v630, 0.0
      %v727 = vsel %vm695, %v631, 0.0
      %v728 = vsel %vm696, %v632, 0.0
      %v729 = vsel %vm697, %v633, 0.0
      %v730 = vsel %vm698, %v634, 0.0
      %v731 = vsel %vm699, %v635, 0.0
      %v732 = vsel %vm700, %v636, 0.0
      %v733 = vsel %vm701, %v637, 0.0
      %v734 = vsel %vm702, %v638, 0.0
      %v735 = vsel %vm703, %v639, 0.0
      %v736 = vsel %vm704, %v640, 0.0
      %v737 = vsel %vm705, %v641, 0.0
      %v738 = vsel %vm706, %v642, 0.0
      %v739 = vsel %vm707, %v643, 0.0
      %v740 = vsel %vm708, %v644, 0.0
      %v741 = vsel %vm709, %v645, 0.0
      %v742 = vsel %vm710, %v646, 0.0
      %v743 = vsel %vm711, %v647, 0.0
      %v744 = vsel %vm712, %v648, 0.0
      %v745 = vsel %vm713, %v649, 0.0
      %v746 = vsel %vm714, %v650, 0.0
      %v747 = vsel %vm715, %v651, 0.0
      %v748 = vsel %vm716, %v652, 0.0
      %v749 = vsel %vm717, %v653, 0.0
      %v750 = vsel %vm718, %v654, 0.0
      %v751 = vsel %vm719, %v655, 0.0
      %v752 = vsel %vm720, %v656, 0.0
      %v753 = vld [vmem:[%s1] sm:$0xf]
      %v754 = vld [vmem:[%s138 + $0x8] sm:$0xff]
      %v755 = vld [vmem:[%s138 + $0x10] sm:$0xff]
      %v756 = vld [vmem:[%s138 + $0x18] sm:$0xff]
      %v757 = vld [vmem:[%s138 + $0x20] sm:$0xff]
      %v758 = vld [vmem:[%s138 + $0x28] sm:$0xff]
      %v759 = vld [vmem:[%s138 + $0x30] sm:$0xff]
      %v760 = vld [vmem:[%s138 + $0x38] sm:$0xff]
      %v761 = vld [vmem:[%s138 + $0x40] sm:$0xff]
      %v762 = vld [vmem:[%s138 + $0x48] sm:$0xff]
      %v763 = vld [vmem:[%s138 + $0x50] sm:$0xff]
      %v764 = vld [vmem:[%s138 + $0x58] sm:$0xff]
      %v765 = vld [vmem:[%s138 + $0x60] sm:$0xff]
      %v766 = vld [vmem:[%s138 + $0x68] sm:$0xff]
      %v767 = vld [vmem:[%s138 + $0x70] sm:$0xff]
      %v768 = vld [vmem:[%s138 + $0x78] sm:$0xff]
      %v769 = vld [vmem:[%s138 + $0x80] sm:$0xff]
      %v770 = vld [vmem:[%s138 + $0x88] sm:$0xff]
      %v771 = vld [vmem:[%s138 + $0x90] sm:$0xff]
      %v772 = vld [vmem:[%s138 + $0x98] sm:$0xff]
      %v773 = vld [vmem:[%s138 + $0xa0] sm:$0xff]
      %v774 = vld [vmem:[%s138 + $0xa8] sm:$0xff]
      %v775 = vld [vmem:[%s138 + $0xb0] sm:$0xff]
      %v776 = vld [vmem:[%s138 + $0xb8] sm:$0xff]
      %v777 = vld [vmem:[%s138 + $0xc0] sm:$0xff]
      %v778 = vld [vmem:[%s138 + $0xc8] sm:$0xff]
      %v779 = vld [vmem:[%s138 + $0xd0] sm:$0xff]
      %v780 = vld [vmem:[%s138 + $0xd8] sm:$0xff]
      %v781 = vld [vmem:[%s138 + $0xe0] sm:$0xff]
      %v782 = vld [vmem:[%s138 + $0xe8] sm:$0xff]
      %v783 = vld [vmem:[%s138 + $0xf0] sm:$0xff]
      %v784 = vld [vmem:[%s138 + $0xf8] sm:$0xff]
      %v785 = vld [vmem:[%s138 + $0x100] sm:$0xff]
      %s786 = scalar_lea.vmem %s1, 4
      %v787 = vld [vmem:[%s786] sm:$0xf]
      %vm788 = vcmask 31744
      %v790 = vsel %vm788, %v754, 0
      %v793 = vsel %vm788, %v755, 0
      %v796 = vsel %vm788, %v756, 0
      %v799 = vsel %vm788, %v757, 0
      %v802 = vsel %vm788, %v758, 0
      %v805 = vsel %vm788, %v759, 0
      %v808 = vsel %vm788, %v760, 0
      %v811 = vsel %vm788, %v761, 0
      %v814 = vsel %vm788, %v762, 0
      %v817 = vsel %vm788, %v763, 0
      %v820 = vsel %vm788, %v764, 0
      %v823 = vsel %vm788, %v765, 0
      %v826 = vsel %vm788, %v766, 0
      %v829 = vsel %vm788, %v767, 0
      %v832 = vsel %vm788, %v768, 0
      %v835 = vsel %vm788, %v769, 0
      %v838 = vsel %vm788, %v770, 0
      %v841 = vsel %vm788, %v771, 0
      %v844 = vsel %vm788, %v772, 0
      %v847 = vsel %vm788, %v773, 0
      %v850 = vsel %vm788, %v774, 0
      %v853 = vsel %vm788, %v775, 0
      %v856 = vsel %vm788, %v776, 0
      %v859 = vsel %vm788, %v777, 0
      %v862 = vsel %vm788, %v778, 0
      %v865 = vsel %vm788, %v779, 0
      %v868 = vsel %vm788, %v780, 0
      %v871 = vsel %vm788, %v781, 0
      %v874 = vsel %vm788, %v782, 0
      %v877 = vsel %vm788, %v783, 0
      %v880 = vsel %vm788, %v784, 0
      %v883 = vsel %vm788, %v785, 0
      %vm885 = vcmask 1043456
      %v887 = vsel %vm885, %v787, 0
      %889 = vmatprep.subr.mxu0 0.0
      %890 = vmatpush1.msra.mxu0 %v887
      %891 = vmatprep.subr.mxu0 0.0
      %892 = vmatpush1.msra.mxu0 0.0
      %893 = vmatprep.subr.mxu0 0.0
      %894 = vmatpush1.msra.mxu0 0.0
      %895 = vmatprep.subr.mxu0 0.0
      %896 = vmatpush1.msra.mxu0 0.0
      %897 = vmatprep.subr.mxu0 0.0
      %898 = vmatpush1.msra.mxu0 0.0
      %899 = vmatprep.subr.mxu0 0.0
      %900 = vmatpush1.msra.mxu0 0.0
      %901 = vmatprep.subr.mxu0 0.0
      %902 = vmatpush1.msra.mxu0 0.0
      %903 = vmatprep.subr.mxu0 0.0
      %904 = vmatpush1.msra.mxu0 0.0
      %905 = vmatprep.subr.mxu0 0.0
      %906 = vmatpush1.msra.mxu0 0.0
      %907 = vmatprep.subr.mxu0 0.0
      %908 = vmatpush1.msra.mxu0 0.0
      %909 = vmatprep.subr.mxu0 0.0
      %910 = vmatpush1.msra.mxu0 0.0
      %911 = vmatprep.subr.mxu0 0.0
      %912 = vmatpush1.msra.mxu0 0.0
      %913 = vmatprep.subr.mxu0 0.0
      %914 = vmatpush1.msra.mxu0 0.0
      %915 = vmatprep.subr.mxu0 0.0
      %916 = vmatpush1.msra.mxu0 0.0
      %917 = vmatprep.subr.mxu0 0.0
      %918 = vmatpush1.msra.mxu0 0.0
      %919 = vmatprep.subr.mxu0 0.0
      %920 = vmatpush1.msra.mxu0 0.0
      %921 = vmatprep.subr.mxu0 0.0
      %922 = vmatpush1.msra.mxu0 0.0
      %923 = vmatprep.subr.mxu0 0.0
      %924 = vmatpush1.msra.mxu0 0.0
      %925 = vmatprep.subr.mxu0 0.0
      %926 = vmatpush1.msra.mxu0 0.0
      %927 = vmatprep.subr.mxu0 0.0
      %928 = vmatpush1.msra.mxu0 0.0
      %929 = vmatprep.subr.mxu0 0.0
      %930 = vmatpush1.msra.mxu0 0.0
      %931 = vmatprep.subr.mxu0 0.0
      %932 = vmatpush1.msra.mxu0 0.0
      %933 = vmatprep.subr.mxu0 0.0
      %934 = vmatpush1.msra.mxu0 0.0
      %935 = vmatprep.subr.mxu0 0.0
      %936 = vmatpush1.msra.mxu0 0.0
      %937 = vmatprep.subr.mxu0 0.0
      %938 = vmatpush1.msra.mxu0 0.0
      %939 = vmatprep.subr.mxu0 0.0
      %940 = vmatpush1.msra.mxu0 0.0
      %941 = vmatprep.subr.mxu0 0.0
      %942 = vmatpush1.msra.mxu0 0.0
      %943 = vmatprep.subr.mxu0 0.0
      %944 = vmatpush1.msra.mxu0 0.0
      %945 = vmatprep.subr.mxu0 0.0
      %946 = vmatpush1.msra.mxu0 0.0
      %947 = vmatprep.subr.mxu0 0.0
      %948 = vmatpush1.msra.mxu0 0.0
      %949 = vmatprep.subr.mxu0 0.0
      %950 = vmatpush1.msra.mxu0 0.0
      %951 = vmatprep.subr.mxu0 0.0
      %952 = vmatpush1.msra.mxu0 0.0
      %953 = vmatprep.mubr.f32.mxu0 0.0
      %954 = vmatmul.mubr.f32.gmra.mrb[0].mxu0 %v790
      %v955 = vpop.f32.mrb[0].mxu0
      %v956 = vadd.f32 0.0, %v955
      %v957 = vpop.f32.mrb[0].mxu0
      %958 = vmatprep.mubr.f32.mxu0 0.0
      %959 = vmatmul.mubr.f32.gmra.mrb[0].mxu0 %v793
      %v960 = vpop.f32.mrb[0].mxu0
      %v961 = vadd.f32 0.0, %v960
      %v962 = vpop.f32.mrb[0].mxu0
      %963 = vmatprep.mubr.f32.mxu0 0.0
      %964 = vmatmul.mubr.f32.gmra.mrb[0].mxu0 %v796
      %v965 = vpop.f32.mrb[0].mxu0
      %v966 = vadd.f32 0.0, %v965
      %v967 = vpop.f32.mrb[0].mxu0
      %968 = vmatprep.mubr.f32.mxu0 0.0
      %969 = vmatmul.mubr.f32.gmra.mrb[0].mxu0 %v799
      %v970 = vpop.f32.mrb[0].mxu0
      %v971 = vadd.f32 0.0, %v970
      %v972 = vpop.f32.mrb[0].mxu0
      %973 = vmatprep.mubr.f32.mxu0 0.0
      %974 = vmatmul.mubr.f32.gmra.mrb[0].mxu0 %v802
      %v975 = vpop.f32.mrb[0].mxu0
      %v976 = vadd.f32 0.0, %v975
      %v977 = vpop.f32.mrb[0].mxu0
      %978 = vmatprep.mubr.f32.mxu0 0.0
      %979 = vmatmul.mubr.f32.gmra.mrb[0].mxu0 %v805
      %v980 = vpop.f32.mrb[0].mxu0
      %v981 = vadd.f32 0.0, %v980
      %v982 = vpop.f32.mrb[0].mxu0
      %983 = vmatprep.mubr.f32.mxu0 0.0
      %984 = vmatmul.mubr.f32.gmra.mrb[0].mxu0 %v808
      %v985 = vpop.f32.mrb[0].mxu0
      %v986 = vadd.f32 0.0, %v985
      %v987 = vpop.f32.mrb[0].mxu0
      %988 = vmatprep.mubr.f32.mxu0 0.0
      %989 = vmatmul.mubr.f32.gmra.mrb[0].mxu0 %v811
      %v990 = vpop.f32.mrb[0].mxu0
      %v991 = vadd.f32 0.0, %v990
      %v992 = vpop.f32.mrb[0].mxu0
      %993 = vmatprep.mubr.f32.mxu0 0.0
      %994 = vmatmul.mubr.f32.gmra.mrb[0].mxu0 %v814
      %v995 = vpop.f32.mrb[0].mxu0
      %v996 = vadd.f32 0.0, %v995
      %v997 = vpop.f32.mrb[0].mxu0
      %998 = vmatprep.mubr.f32.mxu0 0.0
      %999 = vmatmul.mubr.f32.gmra.mrb[0].mxu0 %v817
      %v1000 = vpop.f32.mrb[0].mxu0
      %v1001 = vadd.f32 0.0, %v1000
      %v1002 = vpop.f32.mrb[0].mxu0
      %1003 = vmatprep.mubr.f32.mxu0 0.0
      %1004 = vmatmul.mubr.f32.gmra.mrb[0].mxu0 %v820
      %v1005 = vpop.f32.mrb[0].mxu0
      %v1006 = vadd.f32 0.0, %v1005
      %v1007 = vpop.f32.mrb[0].mxu0
      %1008 = vmatprep.mubr.f32.mxu0 0.0
      %1009 = vmatmul.mubr.f32.gmra.mrb[0].mxu0 %v823
      %v1010 = vpop.f32.mrb[0].mxu0
      %v1011 = vadd.f32 0.0, %v1010
      %v1012 = vpop.f32.mrb[0].mxu0
      %1013 = vmatprep.mubr.f32.mxu0 0.0
      %1014 = vmatmul.mubr.f32.gmra.mrb[0].mxu0 %v826
      %v1015 = vpop.f32.mrb[0].mxu0
      %v1016 = vadd.f32 0.0, %v1015
      %v1017 = vpop.f32.mrb[0].mxu0
      %1018 = vmatprep.mubr.f32.mxu0 0.0
      %1019 = vmatmul.mubr.f32.gmra.mrb[0].mxu0 %v829
      %v1020 = vpop.f32.mrb[0].mxu0
      %v1021 = vadd.f32 0.0, %v1020
      %v1022 = vpop.f32.mrb[0].mxu0
      %1023 = vmatprep.mubr.f32.mxu0 0.0
      %1024 = vmatmul.mubr.f32.gmra.mrb[0].mxu0 %v832
      %v1025 = vpop.f32.mrb[0].mxu0
      %v1026 = vadd.f32 0.0, %v1025
      %v1027 = vpop.f32.mrb[0].mxu0
      %1028 = vmatprep.mubr.f32.mxu0 0.0
      %1029 = vmatmul.mubr.f32.gmra.mrb[0].mxu0 %v835
      %v1030 = vpop.f32.mrb[0].mxu0
      %v1031 = vadd.f32 0.0, %v1030
      %v1032 = vpop.f32.mrb[0].mxu0
      %1033 = vmatprep.mubr.f32.mxu0 0.0
      %1034 = vmatmul.mubr.f32.gmra.mrb[0].mxu0 %v838
      %v1035 = vpop.f32.mrb[0].mxu0
      %v1036 = vadd.f32 0.0, %v1035
      %v1037 = vpop.f32.mrb[0].mxu0
      %1038 = vmatprep.mubr.f32.mxu0 0.0
      %1039 = vmatmul.mubr.f32.gmra.mrb[0].mxu0 %v841
      %v1040 = vpop.f32.mrb[0].mxu0
      %v1041 = vadd.f32 0.0, %v1040
      %v1042 = vpop.f32.mrb[0].mxu0
      %1043 = vmatprep.mubr.f32.mxu0 0.0
      %1044 = vmatmul.mubr.f32.gmra.mrb[0].mxu0 %v844
      %v1045 = vpop.f32.mrb[0].mxu0
      %v1046 = vadd.f32 0.0, %v1045
      %v1047 = vpop.f32.mrb[0].mxu0
      %1048 = vmatprep.mubr.f32.mxu0 0.0
      %1049 = vmatmul.mubr.f32.gmra.mrb[0].mxu0 %v847
      %v1050 = vpop.f32.mrb[0].mxu0
      %v1051 = vadd.f32 0.0, %v1050
      %v1052 = vpop.f32.mrb[0].mxu0
      %1053 = vmatprep.mubr.f32.mxu0 0.0
      %1054 = vmatmul.mubr.f32.gmra.mrb[0].mxu0 %v850
      %v1055 = vpop.f32.mrb[0].mxu0
      %v1056 = vadd.f32 0.0, %v1055
      %v1057 = vpop.f32.mrb[0].mxu0
      %1058 = vmatprep.mubr.f32.mxu0 0.0
      %1059 = vmatmul.mubr.f32.gmra.mrb[0].mxu0 %v853
      %v1060 = vpop.f32.mrb[0].mxu0
      %v1061 = vadd.f32 0.0, %v1060
      %v1062 = vpop.f32.mrb[0].mxu0
      %1063 = vmatprep.mubr.f32.mxu0 0.0
      %1064 = vmatmul.mubr.f32.gmra.mrb[0].mxu0 %v856
      %v1065 = vpop.f32.mrb[0].mxu0
      %v1066 = vadd.f32 0.0, %v1065
      %v1067 = vpop.f32.mrb[0].mxu0
      %1068 = vmatprep.mubr.f32.mxu0 0.0
      %1069 = vmatmul.mubr.f32.gmra.mrb[0].mxu0 %v859
      %v1070 = vpop.f32.mrb[0].mxu0
      %v1071 = vadd.f32 0.0, %v1070
      %v1072 = vpop.f32.mrb[0].mxu0
      %1073 = vmatprep.mubr.f32.mxu0 0.0
      %1074 = vmatmul.mubr.f32.gmra.mrb[0].mxu0 %v862
      %v1075 = vpop.f32.mrb[0].mxu0
      %v1076 = vadd.f32 0.0, %v1075
      %v1077 = vpop.f32.mrb[0].mxu0
      %1078 = vmatprep.mubr.f32.mxu0 0.0
      %1079 = vmatmul.mubr.f32.gmra.mrb[0].mxu0 %v865
      %v1080 = vpop.f32.mrb[0].mxu0
      %v1081 = vadd.f32 0.0, %v1080
      %v1082 = vpop.f32.mrb[0].mxu0
      %1083 = vmatprep.mubr.f32.mxu0 0.0
      %1084 = vmatmul.mubr.f32.gmra.mrb[0].mxu0 %v868
      %v1085 = vpop.f32.mrb[0].mxu0
      %v1086 = vadd.f32 0.0, %v1085
      %v1087 = vpop.f32.mrb[0].mxu0
      %1088 = vmatprep.mubr.f32.mxu0 0.0
      %1089 = vmatmul.mubr.f32.gmra.mrb[0].mxu0 %v871
      %v1090 = vpop.f32.mrb[0].mxu0
      %v1091 = vadd.f32 0.0, %v1090
      %v1092 = vpop.f32.mrb[0].mxu0
      %1093 = vmatprep.mubr.f32.mxu0 0.0
      %1094 = vmatmul.mubr.f32.gmra.mrb[0].mxu0 %v874
      %v1095 = vpop.f32.mrb[0].mxu0
      %v1096 = vadd.f32 0.0, %v1095
      %v1097 = vpop.f32.mrb[0].mxu0
      %1098 = vmatprep.mubr.f32.mxu0 0.0
      %1099 = vmatmul.mubr.f32.gmra.mrb[0].mxu0 %v877
      %v1100 = vpop.f32.mrb[0].mxu0
      %v1101 = vadd.f32 0.0, %v1100
      %v1102 = vpop.f32.mrb[0].mxu0
      %1103 = vmatprep.mubr.f32.mxu0 0.0
      %1104 = vmatmul.mubr.f32.gmra.mrb[0].mxu0 %v880
      %v1105 = vpop.f32.mrb[0].mxu0
      %v1106 = vadd.f32 0.0, %v1105
      %v1107 = vpop.f32.mrb[0].mxu0
      %1108 = vmatprep.mubr.f32.mxu0 0.0
      %1109 = vmatmul.mubr.f32.gmra.mrb[0].mxu0 %v883
      %v1110 = vpop.f32.mrb[0].mxu0
      %v1111 = vadd.f32 0.0, %v1110
      %v1112 = vpop.f32.mrb[0].mxu0
      %1113 = vdwg.mxu0
      %v1115 = vsel %vm788, %v721, 0
      %v1118 = vsel %vm788, %v722, 0
      %v1121 = vsel %vm788, %v723, 0
      %v1124 = vsel %vm788, %v724, 0
      %v1127 = vsel %vm788, %v725, 0
      %v1130 = vsel %vm788, %v726, 0
      %v1133 = vsel %vm788, %v727, 0
      %v1136 = vsel %vm788, %v728, 0
      %v1139 = vsel %vm788, %v729, 0
      %v1142 = vsel %vm788, %v730, 0
      %v1145 = vsel %vm788, %v731, 0
      %v1148 = vsel %vm788, %v732, 0
      %v1151 = vsel %vm788, %v733, 0
      %v1154 = vsel %vm788, %v734, 0
      %v1157 = vsel %vm788, %v735, 0
      %v1160 = vsel %vm788, %v736, 0
      %v1163 = vsel %vm788, %v737, 0
      %v1166 = vsel %vm788, %v738, 0
      %v1169 = vsel %vm788, %v739, 0
      %v1172 = vsel %vm788, %v740, 0
      %v1175 = vsel %vm788, %v741, 0
      %v1178 = vsel %vm788, %v742, 0
      %v1181 = vsel %vm788, %v743, 0
      %v1184 = vsel %vm788, %v744, 0
      %v1187 = vsel %vm788, %v745, 0
      %v1190 = vsel %vm788, %v746, 0
      %v1193 = vsel %vm788, %v747, 0
      %v1196 = vsel %vm788, %v748, 0
      %v1199 = vsel %vm788, %v749, 0
      %v1202 = vsel %vm788, %v750, 0
      %v1205 = vsel %vm788, %v751, 0
      %v1208 = vsel %vm788, %v752, 0
      %v1211 = vsel %vm885, %v753, 0
      %1213 = vmatprep.subr.mxu0 0.0
      %1214 = vmatpush1.msra.mxu0 %v1211
      %1215 = vmatprep.subr.mxu0 0.0
      %1216 = vmatpush1.msra.mxu0 0.0
      %1217 = vmatprep.subr.mxu0 0.0
      %1218 = vmatpush1.msra.mxu0 0.0
      %1219 = vmatprep.subr.mxu0 0.0
      %1220 = vmatpush1.msra.mxu0 0.0
      %1221 = vmatprep.subr.mxu0 0.0
      %1222 = vmatpush1.msra.mxu0 0.0
      %1223 = vmatprep.subr.mxu0 0.0
      %1224 = vmatpush1.msra.mxu0 0.0
      %1225 = vmatprep.subr.mxu0 0.0
      %1226 = vmatpush1.msra.mxu0 0.0
      %1227 = vmatprep.subr.mxu0 0.0
      %1228 = vmatpush1.msra.mxu0 0.0
      %1229 = vmatprep.subr.mxu0 0.0
      %1230 = vmatpush1.msra.mxu0 0.0
      %1231 = vmatprep.subr.mxu0 0.0
      %1232 = vmatpush1.msra.mxu0 0.0
      %1233 = vmatprep.subr.mxu0 0.0
      %1234 = vmatpush1.msra.mxu0 0.0
      %1235 = vmatprep.subr.mxu0 0.0
      %1236 = vmatpush1.msra.mxu0 0.0
      %1237 = vmatprep.subr.mxu0 0.0
      %1238 = vmatpush1.msra.mxu0 0.0
      %1239 = vmatprep.subr.mxu0 0.0
      %1240 = vmatpush1.msra.mxu0 0.0
      %1241 = vmatprep.subr.mxu0 0.0
      %1242 = vmatpush1.msra.mxu0 0.0
      %1243 = vmatprep.subr.mxu0 0.0
      %1244 = vmatpush1.msra.mxu0 0.0
      %1245 = vmatprep.subr.mxu0 0.0
      %1246 = vmatpush1.msra.mxu0 0.0
      %1247 = vmatprep.subr.mxu0 0.0
      %1248 = vmatpush1.msra.mxu0 0.0
      %1249 = vmatprep.subr.mxu0 0.0
      %1250 = vmatpush1.msra.mxu0 0.0
      %1251 = vmatprep.subr.mxu0 0.0
      %1252 = vmatpush1.msra.mxu0 0.0
      %1253 = vmatprep.subr.mxu0 0.0
      %1254 = vmatpush1.msra.mxu0 0.0
      %1255 = vmatprep.subr.mxu0 0.0
      %1256 = vmatpush1.msra.mxu0 0.0
      %1257 = vmatprep.subr.mxu0 0.0
      %1258 = vmatpush1.msra.mxu0 0.0
      %1259 = vmatprep.subr.mxu0 0.0
      %1260 = vmatpush1.msra.mxu0 0.0
      %1261 = vmatprep.subr.mxu0 0.0
      %1262 = vmatpush1.msra.mxu0 0.0
      %1263 = vmatprep.subr.mxu0 0.0
      %1264 = vmatpush1.msra.mxu0 0.0
      %1265 = vmatprep.subr.mxu0 0.0
      %1266 = vmatpush1.msra.mxu0 0.0
      %1267 = vmatprep.subr.mxu0 0.0
      %1268 = vmatpush1.msra.mxu0 0.0
      %1269 = vmatprep.subr.mxu0 0.0
      %1270 = vmatpush1.msra.mxu0 0.0
      %1271 = vmatprep.subr.mxu0 0.0
      %1272 = vmatpush1.msra.mxu0 0.0
      %1273 = vmatprep.subr.mxu0 0.0
      %1274 = vmatpush1.msra.mxu0 0.0
      %1275 = vmatprep.subr.mxu0 0.0
      %1276 = vmatpush1.msra.mxu0 0.0
      %1277 = vmatprep.mubr.f32.mxu0 0.0
      %1278 = vmatmul.mubr.f32.gmra.mrb[0].mxu0 %v1115
      %v1279 = vpop.f32.mrb[0].mxu0
      %v1280 = vadd.f32 %v956, %v1279
      %v1281 = vpop.f32.mrb[0].mxu0
      %1282 = vmatprep.mubr.f32.mxu0 0.0
      %1283 = vmatmul.mubr.f32.gmra.mrb[0].mxu0 %v1118
      %v1284 = vpop.f32.mrb[0].mxu0
      %v1285 = vadd.f32 %v961, %v1284
      %v1286 = vpop.f32.mrb[0].mxu0
      %1287 = vmatprep.mubr.f32.mxu0 0.0
      %1288 = vmatmul.mubr.f32.gmra.mrb[0].mxu0 %v1121
      %v1289 = vpop.f32.mrb[0].mxu0
      %v1290 = vadd.f32 %v966, %v1289
      %v1291 = vpop.f32.mrb[0].mxu0
      %1292 = vmatprep.mubr.f32.mxu0 0.0
      %1293 = vmatmul.mubr.f32.gmra.mrb[0].mxu0 %v1124
      %v1294 = vpop.f32.mrb[0].mxu0
      %v1295 = vadd.f32 %v971, %v1294
      %v1296 = vpop.f32.mrb[0].mxu0
      %1297 = vmatprep.mubr.f32.mxu0 0.0
      %1298 = vmatmul.mubr.f32.gmra.mrb[0].mxu0 %v1127
      %v1299 = vpop.f32.mrb[0].mxu0
      %v1300 = vadd.f32 %v976, %v1299
      %v1301 = vpop.f32.mrb[0].mxu0
      %1302 = vmatprep.mubr.f32.mxu0 0.0
      %1303 = vmatmul.mubr.f32.gmra.mrb[0].mxu0 %v1130
      %v1304 = vpop.f32.mrb[0].mxu0
      %v1305 = vadd.f32 %v981, %v1304
      %v1306 = vpop.f32.mrb[0].mxu0
      %1307 = vmatprep.mubr.f32.mxu0 0.0
      %1308 = vmatmul.mubr.f32.gmra.mrb[0].mxu0 %v1133
      %v1309 = vpop.f32.mrb[0].mxu0
      %v1310 = vadd.f32 %v986, %v1309
      %v1311 = vpop.f32.mrb[0].mxu0
      %1312 = vmatprep.mubr.f32.mxu0 0.0
      %1313 = vmatmul.mubr.f32.gmra.mrb[0].mxu0 %v1136
      %v1314 = vpop.f32.mrb[0].mxu0
      %v1315 = vadd.f32 %v991, %v1314
      %v1316 = vpop.f32.mrb[0].mxu0
      %1317 = vmatprep.mubr.f32.mxu0 0.0
      %1318 = vmatmul.mubr.f32.gmra.mrb[0].mxu0 %v1139
      %v1319 = vpop.f32.mrb[0].mxu0
      %v1320 = vadd.f32 %v996, %v1319
      %v1321 = vpop.f32.mrb[0].mxu0
      %1322 = vmatprep.mubr.f32.mxu0 0.0
      %1323 = vmatmul.mubr.f32.gmra.mrb[0].mxu0 %v1142
      %v1324 = vpop.f32.mrb[0].mxu0
      %v1325 = vadd.f32 %v1001, %v1324
      %v1326 = vpop.f32.mrb[0].mxu0
      %1327 = vmatprep.mubr.f32.mxu0 0.0
      %1328 = vmatmul.mubr.f32.gmra.mrb[0].mxu0 %v1145
      %v1329 = vpop.f32.mrb[0].mxu0
      %v1330 = vadd.f32 %v1006, %v1329
      %v1331 = vpop.f32.mrb[0].mxu0
      %1332 = vmatprep.mubr.f32.mxu0 0.0
      %1333 = vmatmul.mubr.f32.gmra.mrb[0].mxu0 %v1148
      %v1334 = vpop.f32.mrb[0].mxu0
      %v1335 = vadd.f32 %v1011, %v1334
      %v1336 = vpop.f32.mrb[0].mxu0
      %1337 = vmatprep.mubr.f32.mxu0 0.0
      %1338 = vmatmul.mubr.f32.gmra.mrb[0].mxu0 %v1151
      %v1339 = vpop.f32.mrb[0].mxu0
      %v1340 = vadd.f32 %v1016, %v1339
      %v1341 = vpop.f32.mrb[0].mxu0
      %1342 = vmatprep.mubr.f32.mxu0 0.0
      %1343 = vmatmul.mubr.f32.gmra.mrb[0].mxu0 %v1154
      %v1344 = vpop.f32.mrb[0].mxu0
      %v1345 = vadd.f32 %v1021, %v1344
      %v1346 = vpop.f32.mrb[0].mxu0
      %1347 = vmatprep.mubr.f32.mxu0 0.0
      %1348 = vmatmul.mubr.f32.gmra.mrb[0].mxu0 %v1157
      %v1349 = vpop.f32.mrb[0].mxu0
      %v1350 = vadd.f32 %v1026, %v1349
      %v1351 = vpop.f32.mrb[0].mxu0
      %1352 = vmatprep.mubr.f32.mxu0 0.0
      %1353 = vmatmul.mubr.f32.gmra.mrb[0].mxu0 %v1160
      %v1354 = vpop.f32.mrb[0].mxu0
      %v1355 = vadd.f32 %v1031, %v1354
      %v1356 = vpop.f32.mrb[0].mxu0
      %1357 = vmatprep.mubr.f32.mxu0 0.0
      %1358 = vmatmul.mubr.f32.gmra.mrb[0].mxu0 %v1163
      %v1359 = vpop.f32.mrb[0].mxu0
      %v1360 = vadd.f32 %v1036, %v1359
      %v1361 = vpop.f32.mrb[0].mxu0
      %1362 = vmatprep.mubr.f32.mxu0 0.0
      %1363 = vmatmul.mubr.f32.gmra.mrb[0].mxu0 %v1166
      %v1364 = vpop.f32.mrb[0].mxu0
      %v1365 = vadd.f32 %v1041, %v1364
      %v1366 = vpop.f32.mrb[0].mxu0
      %1367 = vmatprep.mubr.f32.mxu0 0.0
      %1368 = vmatmul.mubr.f32.gmra.mrb[0].mxu0 %v1169
      %v1369 = vpop.f32.mrb[0].mxu0
      %v1370 = vadd.f32 %v1046, %v1369
      %v1371 = vpop.f32.mrb[0].mxu0
      %1372 = vmatprep.mubr.f32.mxu0 0.0
      %1373 = vmatmul.mubr.f32.gmra.mrb[0].mxu0 %v1172
      %v1374 = vpop.f32.mrb[0].mxu0
      %v1375 = vadd.f32 %v1051, %v1374
      %v1376 = vpop.f32.mrb[0].mxu0
      %1377 = vmatprep.mubr.f32.mxu0 0.0
      %1378 = vmatmul.mubr.f32.gmra.mrb[0].mxu0 %v1175
      %v1379 = vpop.f32.mrb[0].mxu0
      %v1380 = vadd.f32 %v1056, %v1379
      %v1381 = vpop.f32.mrb[0].mxu0
      %1382 = vmatprep.mubr.f32.mxu0 0.0
      %1383 = vmatmul.mubr.f32.gmra.mrb[0].mxu0 %v1178
      %v1384 = vpop.f32.mrb[0].mxu0
      %v1385 = vadd.f32 %v1061, %v1384
      %v1386 = vpop.f32.mrb[0].mxu0
      %1387 = vmatprep.mubr.f32.mxu0 0.0
      %1388 = vmatmul.mubr.f32.gmra.mrb[0].mxu0 %v1181
      %v1389 = vpop.f32.mrb[0].mxu0
      %v1390 = vadd.f32 %v1066, %v1389
      %v1391 = vpop.f32.mrb[0].mxu0
      %1392 = vmatprep.mubr.f32.mxu0 0.0
      %1393 = vmatmul.mubr.f32.gmra.mrb[0].mxu0 %v1184
      %v1394 = vpop.f32.mrb[0].mxu0
      %v1395 = vadd.f32 %v1071, %v1394
      %v1396 = vpop.f32.mrb[0].mxu0
      %1397 = vmatprep.mubr.f32.mxu0 0.0
      %1398 = vmatmul.mubr.f32.gmra.mrb[0].mxu0 %v1187
      %v1399 = vpop.f32.mrb[0].mxu0
      %v1400 = vadd.f32 %v1076, %v1399
      %v1401 = vpop.f32.mrb[0].mxu0
      %1402 = vmatprep.mubr.f32.mxu0 0.0
      %1403 = vmatmul.mubr.f32.gmra.mrb[0].mxu0 %v1190
      %v1404 = vpop.f32.mrb[0].mxu0
      %v1405 = vadd.f32 %v1081, %v1404
      %v1406 = vpop.f32.mrb[0].mxu0
      %1407 = vmatprep.mubr.f32.mxu0 0.0
      %1408 = vmatmul.mubr.f32.gmra.mrb[0].mxu0 %v1193
      %v1409 = vpop.f32.mrb[0].mxu0
      %v1410 = vadd.f32 %v1086, %v1409
      %v1411 = vpop.f32.mrb[0].mxu0
      %1412 = vmatprep.mubr.f32.mxu0 0.0
      %1413 = vmatmul.mubr.f32.gmra.mrb[0].mxu0 %v1196
      %v1414 = vpop.f32.mrb[0].mxu0
      %v1415 = vadd.f32 %v1091, %v1414
      %v1416 = vpop.f32.mrb[0].mxu0
      %1417 = vmatprep.mubr.f32.mxu0 0.0
      %1418 = vmatmul.mubr.f32.gmra.mrb[0].mxu0 %v1199
      %v1419 = vpop.f32.mrb[0].mxu0
      %v1420 = vadd.f32 %v1096, %v1419
      %v1421 = vpop.f32.mrb[0].mxu0
      %1422 = vmatprep.mubr.f32.mxu0 0.0
      %1423 = vmatmul.mubr.f32.gmra.mrb[0].mxu0 %v1202
      %v1424 = vpop.f32.mrb[0].mxu0
      %v1425 = vadd.f32 %v1101, %v1424
      %v1426 = vpop.f32.mrb[0].mxu0
      %1427 = vmatprep.mubr.f32.mxu0 0.0
      %1428 = vmatmul.mubr.f32.gmra.mrb[0].mxu0 %v1205
      %v1429 = vpop.f32.mrb[0].mxu0
      %v1430 = vadd.f32 %v1106, %v1429
      %v1431 = vpop.f32.mrb[0].mxu0
      %1432 = vmatprep.mubr.f32.mxu0 0.0
      %1433 = vmatmul.mubr.f32.gmra.mrb[0].mxu0 %v1208
      %v1434 = vpop.f32.mrb[0].mxu0
      %v1435 = vadd.f32 %v1111, %v1434
      %v1436 = vpop.f32.mrb[0].mxu0
      %1437 = vdwg.mxu0
      %v1438 = vld [vmem:[%s138 + $0x9] sm:$0xff]
      %v1439 = vld [vmem:[%s138 + $0x11] sm:$0xff]
      %v1440 = vld [vmem:[%s138 + $0x19] sm:$0xff]
      %v1441 = vld [vmem:[%s138 + $0x21] sm:$0xff]
      %v1442 = vld [vmem:[%s138 + $0x29] sm:$0xff]
      %v1443 = vld [vmem:[%s138 + $0x31] sm:$0xff]
      %v1444 = vld [vmem:[%s138 + $0x39] sm:$0xff]
      %v1445 = vld [vmem:[%s138 + $0x41] sm:$0xff]
      %v1446 = vld [vmem:[%s138 + $0x49] sm:$0xff]
      %v1447 = vld [vmem:[%s138 + $0x51] sm:$0xff]
      %v1448 = vld [vmem:[%s138 + $0x59] sm:$0xff]
      %v1449 = vld [vmem:[%s138 + $0x61] sm:$0xff]
      %v1450 = vld [vmem:[%s138 + $0x69] sm:$0xff]
      %v1451 = vld [vmem:[%s138 + $0x71] sm:$0xff]
      %v1452 = vld [vmem:[%s138 + $0x79] sm:$0xff]
      %v1453 = vld [vmem:[%s138 + $0x81] sm:$0xff]
      %v1454 = vld [vmem:[%s138 + $0x89] sm:$0xff]
      %v1455 = vld [vmem:[%s138 + $0x91] sm:$0xff]
      %v1456 = vld [vmem:[%s138 + $0x99] sm:$0xff]
      %v1457 = vld [vmem:[%s138 + $0xa1] sm:$0xff]
      %v1458 = vld [vmem:[%s138 + $0xa9] sm:$0xff]
      %v1459 = vld [vmem:[%s138 + $0xb1] sm:$0xff]
      %v1460 = vld [vmem:[%s138 + $0xb9] sm:$0xff]
      %v1461 = vld [vmem:[%s138 + $0xc1] sm:$0xff]
      %v1462 = vld [vmem:[%s138 + $0xc9] sm:$0xff]
      %v1463 = vld [vmem:[%s138 + $0xd1] sm:$0xff]
      %v1464 = vld [vmem:[%s138 + $0xd9] sm:$0xff]
      %v1465 = vld [vmem:[%s138 + $0xe1] sm:$0xff]
      %v1466 = vld [vmem:[%s138 + $0xe9] sm:$0xff]
      %v1467 = vld [vmem:[%s138 + $0xf1] sm:$0xff]
      %v1468 = vld [vmem:[%s138 + $0xf9] sm:$0xff]
      %v1469 = vld [vmem:[%s138 + $0x101] sm:$0xff]
      %v1470 = vsel %vm593, 1, 0
      %v1471 = vsel %vm594, 1, 0
      %v1472 = vsel %vm595, 1, 0
      %v1473 = vsel %vm596, 1, 0
      %v1474 = vsel %vm597, 1, 0
      %v1475 = vsel %vm598, 1, 0
      %v1476 = vsel %vm599, 1, 0
      %v1477 = vsel %vm600, 1, 0
      %v1478 = vsel %vm601, 1, 0
      %v1479 = vsel %vm602, 1, 0
      %v1480 = vsel %vm603, 1, 0
      %v1481 = vsel %vm604, 1, 0
      %v1482 = vsel %vm605, 1, 0
      %v1483 = vsel %vm606, 1, 0
      %v1484 = vsel %vm607, 1, 0
      %v1485 = vsel %vm608, 1, 0
      %v1486 = vsel %vm609, 1, 0
      %v1487 = vsel %vm610, 1, 0
      %v1488 = vsel %vm611, 1, 0
      %v1489 = vsel %vm612, 1, 0
      %v1490 = vsel %vm613, 1, 0
      %v1491 = vsel %vm614, 1, 0
      %v1492 = vsel %vm615, 1, 0
      %v1493 = vsel %vm616, 1, 0
      %v1494 = vsel %vm617, 1, 0
      %v1495 = vsel %vm618, 1, 0
      %v1496 = vsel %vm619, 1, 0
      %v1497 = vsel %vm620, 1, 0
      %v1498 = vsel %vm621, 1, 0
      %v1499 = vsel %vm622, 1, 0
      %v1500 = vsel %vm623, 1, 0
      %v1501 = vsel %vm624, 1, 0
      %vm1502 = vcmp.eq.s32.totalorder %v1470, 1
      %vm1503 = vcmp.eq.s32.totalorder %v1471, 1
      %vm1504 = vcmp.eq.s32.totalorder %v1472, 1
      %vm1505 = vcmp.eq.s32.totalorder %v1473, 1
      %vm1506 = vcmp.eq.s32.totalorder %v1474, 1
      %vm1507 = vcmp.eq.s32.totalorder %v1475, 1
      %vm1508 = vcmp.eq.s32.totalorder %v1476, 1
      %vm1509 = vcmp.eq.s32.totalorder %v1477, 1
      %vm1510 = vcmp.eq.s32.totalorder %v1478, 1
      %vm1511 = vcmp.eq.s32.totalorder %v1479, 1
      %vm1512 = vcmp.eq.s32.totalorder %v1480, 1
      %vm1513 = vcmp.eq.s32.totalorder %v1481, 1
      %vm1514 = vcmp.eq.s32.totalorder %v1482, 1
      %vm1515 = vcmp.eq.s32.totalorder %v1483, 1
      %vm1516 = vcmp.eq.s32.totalorder %v1484, 1
      %vm1517 = vcmp.eq.s32.totalorder %v1485, 1
      %vm1518 = vcmp.eq.s32.totalorder %v1486, 1
      %vm1519 = vcmp.eq.s32.totalorder %v1487, 1
      %vm1520 = vcmp.eq.s32.totalorder %v1488, 1
      %vm1521 = vcmp.eq.s32.totalorder %v1489, 1
      %vm1522 = vcmp.eq.s32.totalorder %v1490, 1
      %vm1523 = vcmp.eq.s32.totalorder %v1491, 1
      %vm1524 = vcmp.eq.s32.totalorder %v1492, 1
      %vm1525 = vcmp.eq.s32.totalorder %v1493, 1
      %vm1526 = vcmp.eq.s32.totalorder %v1494, 1
      %vm1527 = vcmp.eq.s32.totalorder %v1495, 1
      %vm1528 = vcmp.eq.s32.totalorder %v1496, 1
      %vm1529 = vcmp.eq.s32.totalorder %v1497, 1
      %vm1530 = vcmp.eq.s32.totalorder %v1498, 1
      %vm1531 = vcmp.eq.s32.totalorder %v1499, 1
      %vm1532 = vcmp.eq.s32.totalorder %v1500, 1
      %vm1533 = vcmp.eq.s32.totalorder %v1501, 1
      %v1534 = vsel %vm1502, %v1438, 0.0
      %v1535 = vsel %vm1503, %v1439, 0.0
      %v1536 = vsel %vm1504, %v1440, 0.0
      %v1537 = vsel %vm1505, %v1441, 0.0
      %v1538 = vsel %vm1506, %v1442, 0.0
      %v1539 = vsel %vm1507, %v1443, 0.0
      %v1540 = vsel %vm1508, %v1444, 0.0
      %v1541 = vsel %vm1509, %v1445, 0.0
      %v1542 = vsel %vm1510, %v1446, 0.0
      %v1543 = vsel %vm1511, %v1447, 0.0
      %v1544 = vsel %vm1512, %v1448, 0.0
      %v1545 = vsel %vm1513, %v1449, 0.0
      %v1546 = vsel %vm1514, %v1450, 0.0
      %v1547 = vsel %vm1515, %v1451, 0.0
      %v1548 = vsel %vm1516, %v1452, 0.0
      %v1549 = vsel %vm1517, %v1453, 0.0
      %v1550 = vsel %vm1518, %v1454, 0.0
      %v1551 = vsel %vm1519, %v1455, 0.0
      %v1552 = vsel %vm1520, %v1456, 0.0
      %v1553 = vsel %vm1521, %v1457, 0.0
      %v1554 = vsel %vm1522, %v1458, 0.0
      %v1555 = vsel %vm1523, %v1459, 0.0
      %v1556 = vsel %vm1524, %v1460, 0.0
      %v1557 = vsel %vm1525, %v1461, 0.0
      %v1558 = vsel %vm1526, %v1462, 0.0
      %v1559 = vsel %vm1527, %v1463, 0.0
      %v1560 = vsel %vm1528, %v1464, 0.0
      %v1561 = vsel %vm1529, %v1465, 0.0
      %v1562 = vsel %vm1530, %v1466, 0.0
      %v1563 = vsel %vm1531, %v1467, 0.0
      %v1564 = vsel %vm1532, %v1468, 0.0
      %v1565 = vsel %vm1533, %v1469, 0.0
      %s1566 = scalar_lea.vmem %s1, 8
      %v1567 = vld [vmem:[%s1566] sm:$0xf]
      %v1569 = vsel %vm788, %v1534, 0
      %v1572 = vsel %vm788, %v1535, 0
      %v1575 = vsel %vm788, %v1536, 0
      %v1578 = vsel %vm788, %v1537, 0
      %v1581 = vsel %vm788, %v1538, 0
      %v1584 = vsel %vm788, %v1539, 0
      %v1587 = vsel %vm788, %v1540, 0
      %v1590 = vsel %vm788, %v1541, 0
      %v1593 = vsel %vm788, %v1542, 0
      %v1596 = vsel %vm788, %v1543, 0
      %v1599 = vsel %vm788, %v1544, 0
      %v1602 = vsel %vm788, %v1545, 0
      %v1605 = vsel %vm788, %v1546, 0
      %v1608 = vsel %vm788, %v1547, 0
      %v1611 = vsel %vm788, %v1548, 0
      %v1614 = vsel %vm788, %v1549, 0
      %v1617 = vsel %vm788, %v1550, 0
      %v1620 = vsel %vm788, %v1551, 0
      %v1623 = vsel %vm788, %v1552, 0
      %v1626 = vsel %vm788, %v1553, 0
      %v1629 = vsel %vm788, %v1554, 0
      %v1632 = vsel %vm788, %v1555, 0
      %v1635 = vsel %vm788, %v1556, 0
      %v1638 = vsel %vm788, %v1557, 0
      %v1641 = vsel %vm788, %v1558, 0
      %v1644 = vsel %vm788, %v1559, 0
      %v1647 = vsel %vm788, %v1560, 0
      %v1650 = vsel %vm788, %v1561, 0
      %v1653 = vsel %vm788, %v1562, 0
      %v1656 = vsel %vm788, %v1563, 0
      %v1659 = vsel %vm788, %v1564, 0
      %v1662 = vsel %vm788, %v1565, 0
      %v1665 = vsel %vm885, %v1567, 0
      %1667 = vmatprep.subr.mxu0 0.0
      %1668 = vmatpush1.msra.mxu0 %v1665
      %1669 = vmatprep.subr.mxu0 0.0
      %1670 = vmatpush1.msra.mxu0 0.0
      %1671 = vmatprep.subr.mxu0 0.0
      %1672 = vmatpush1.msra.mxu0 0.0
      %1673 = vmatprep.subr.mxu0 0.0
      %1674 = vmatpush1.msra.mxu0 0.0
      %1675 = vmatprep.subr.mxu0 0.0
      %1676 = vmatpush1.msra.mxu0 0.0
      %1677 = vmatprep.subr.mxu0 0.0
      %1678 = vmatpush1.msra.mxu0 0.0
      %1679 = vmatprep.subr.mxu0 0.0
      %1680 = vmatpush1.msra.mxu0 0.0
      %1681 = vmatprep.subr.mxu0 0.0
      %1682 = vmatpush1.msra.mxu0 0.0
      %1683 = vmatprep.subr.mxu0 0.0
      %1684 = vmatpush1.msra.mxu0 0.0
      %1685 = vmatprep.subr.mxu0 0.0
      %1686 = vmatpush1.msra.mxu0 0.0
      %1687 = vmatprep.subr.mxu0 0.0
      %1688 = vmatpush1.msra.mxu0 0.0
      %1689 = vmatprep.subr.mxu0 0.0
      %1690 = vmatpush1.msra.mxu0 0.0
      %1691 = vmatprep.subr.mxu0 0.0
      %1692 = vmatpush1.msra.mxu0 0.0
      %1693 = vmatprep.subr.mxu0 0.0
      %1694 = vmatpush1.msra.mxu0 0.0
      %1695 = vmatprep.subr.mxu0 0.0
      %1696 = vmatpush1.msra.mxu0 0.0
      %1697 = vmatprep.subr.mxu0 0.0
      %1698 = vmatpush1.msra.mxu0 0.0
      %1699 = vmatprep.subr.mxu0 0.0
      %1700 = vmatpush1.msra.mxu0 0.0
      %1701 = vmatprep.subr.mxu0 0.0
      %1702 = vmatpush1.msra.mxu0 0.0
      %1703 = vmatprep.subr.mxu0 0.0
      %1704 = vmatpush1.msra.mxu0 0.0
      %1705 = vmatprep.subr.mxu0 0.0
      %1706 = vmatpush1.msra.mxu0 0.0
      %1707 = vmatprep.subr.mxu0 0.0
      %1708 = vmatpush1.msra.mxu0 0.0
      %1709 = vmatprep.subr.mxu0 0.0
      %1710 = vmatpush1.msra.mxu0 0.0
      %1711 = vmatprep.subr.mxu0 0.0
      %1712 = vmatpush1.msra.mxu0 0.0
      %1713 = vmatprep.subr.mxu0 0.0
      %1714 = vmatpush1.msra.mxu0 0.0
      %1715 = vmatprep.subr.mxu0 0.0
      %1716 = vmatpush1.msra.mxu0 0.0
      %1717 = vmatprep.subr.mxu0 0.0
      %1718 = vmatpush1.msra.mxu0 0.0
      %1719 = vmatprep.subr.mxu0 0.0
      %1720 = vmatpush1.msra.mxu0 0.0
      %1721 = vmatprep.subr.mxu0 0.0
      %1722 = vmatpush1.msra.mxu0 0.0
      %1723 = vmatprep.subr.mxu0 0.0
      %1724 = vmatpush1.msra.mxu0 0.0
      %1725 = vmatprep.subr.mxu0 0.0
      %1726 = vmatpush1.msra.mxu0 0.0
      %1727 = vmatprep.subr.mxu0 0.0
      %1728 = vmatpush1.msra.mxu0 0.0
      %1729 = vmatprep.subr.mxu0 0.0
      %1730 = vmatpush1.msra.mxu0 0.0
      %1731 = vmatprep.mubr.f32.mxu0 0.0
      %1732 = vmatmul.mubr.f32.gmra.mrb[0].mxu0 %v1569
      %v1733 = vpop.f32.mrb[0].mxu0
      %v1734 = vadd.f32 0.0, %v1733
      %v1735 = vpop.f32.mrb[0].mxu0
      %1736 = vmatprep.mubr.f32.mxu0 0.0
      %1737 = vmatmul.mubr.f32.gmra.mrb[0].mxu0 %v1572
      %v1738 = vpop.f32.mrb[0].mxu0
      %v1739 = vadd.f32 0.0, %v1738
      %v1740 = vpop.f32.mrb[0].mxu0
      %1741 = vmatprep.mubr.f32.mxu0 0.0
      %1742 = vmatmul.mubr.f32.gmra.mrb[0].mxu0 %v1575
      %v1743 = vpop.f32.mrb[0].mxu0
      %v1744 = vadd.f32 0.0, %v1743
      %v1745 = vpop.f32.mrb[0].mxu0
      %1746 = vmatprep.mubr.f32.mxu0 0.0
      %1747 = vmatmul.mubr.f32.gmra.mrb[0].mxu0 %v1578
      %v1748 = vpop.f32.mrb[0].mxu0
      %v1749 = vadd.f32 0.0, %v1748
      %v1750 = vpop.f32.mrb[0].mxu0
      %1751 = vmatprep.mubr.f32.mxu0 0.0
      %1752 = vmatmul.mubr.f32.gmra.mrb[0].mxu0 %v1581
      %v1753 = vpop.f32.mrb[0].mxu0
      %v1754 = vadd.f32 0.0, %v1753
      %v1755 = vpop.f32.mrb[0].mxu0
      %1756 = vmatprep.mubr.f32.mxu0 0.0
      %1757 = vmatmul.mubr.f32.gmra.mrb[0].mxu0 %v1584
      %v1758 = vpop.f32.mrb[0].mxu0
      %v1759 = vadd.f32 0.0, %v1758
      %v1760 = vpop.f32.mrb[0].mxu0
      %1761 = vmatprep.mubr.f32.mxu0 0.0
      %1762 = vmatmul.mubr.f32.gmra.mrb[0].mxu0 %v1587
      %v1763 = vpop.f32.mrb[0].mxu0
      %v1764 = vadd.f32 0.0, %v1763
      %v1765 = vpop.f32.mrb[0].mxu0
      %1766 = vmatprep.mubr.f32.mxu0 0.0
      %1767 = vmatmul.mubr.f32.gmra.mrb[0].mxu0 %v1590
      %v1768 = vpop.f32.mrb[0].mxu0
      %v1769 = vadd.f32 0.0, %v1768
      %v1770 = vpop.f32.mrb[0].mxu0
      %1771 = vmatprep.mubr.f32.mxu0 0.0
      %1772 = vmatmul.mubr.f32.gmra.mrb[0].mxu0 %v1593
      %v1773 = vpop.f32.mrb[0].mxu0
      %v1774 = vadd.f32 0.0, %v1773
      %v1775 = vpop.f32.mrb[0].mxu0
      %1776 = vmatprep.mubr.f32.mxu0 0.0
      %1777 = vmatmul.mubr.f32.gmra.mrb[0].mxu0 %v1596
      %v1778 = vpop.f32.mrb[0].mxu0
      %v1779 = vadd.f32 0.0, %v1778
      %v1780 = vpop.f32.mrb[0].mxu0
      %1781 = vmatprep.mubr.f32.mxu0 0.0
      %1782 = vmatmul.mubr.f32.gmra.mrb[0].mxu0 %v1599
      %v1783 = vpop.f32.mrb[0].mxu0
      %v1784 = vadd.f32 0.0, %v1783
      %v1785 = vpop.f32.mrb[0].mxu0
      %1786 = vmatprep.mubr.f32.mxu0 0.0
      %1787 = vmatmul.mubr.f32.gmra.mrb[0].mxu0 %v1602
      %v1788 = vpop.f32.mrb[0].mxu0
      %v1789 = vadd.f32 0.0, %v1788
      %v1790 = vpop.f32.mrb[0].mxu0
      %1791 = vmatprep.mubr.f32.mxu0 0.0
      %1792 = vmatmul.mubr.f32.gmra.mrb[0].mxu0 %v1605
      %v1793 = vpop.f32.mrb[0].mxu0
      %v1794 = vadd.f32 0.0, %v1793
      %v1795 = vpop.f32.mrb[0].mxu0
      %1796 = vmatprep.mubr.f32.mxu0 0.0
      %1797 = vmatmul.mubr.f32.gmra.mrb[0].mxu0 %v1608
      %v1798 = vpop.f32.mrb[0].mxu0
      %v1799 = vadd.f32 0.0, %v1798
      %v1800 = vpop.f32.mrb[0].mxu0
      %1801 = vmatprep.mubr.f32.mxu0 0.0
      %1802 = vmatmul.mubr.f32.gmra.mrb[0].mxu0 %v1611
      %v1803 = vpop.f32.mrb[0].mxu0
      %v1804 = vadd.f32 0.0, %v1803
      %v1805 = vpop.f32.mrb[0].mxu0
      %1806 = vmatprep.mubr.f32.mxu0 0.0
      %1807 = vmatmul.mubr.f32.gmra.mrb[0].mxu0 %v1614
      %v1808 = vpop.f32.mrb[0].mxu0
      %v1809 = vadd.f32 0.0, %v1808
      %v1810 = vpop.f32.mrb[0].mxu0
      %1811 = vmatprep.mubr.f32.mxu0 0.0
      %1812 = vmatmul.mubr.f32.gmra.mrb[0].mxu0 %v1617
      %v1813 = vpop.f32.mrb[0].mxu0
      %v1814 = vadd.f32 0.0, %v1813
      %v1815 = vpop.f32.mrb[0].mxu0
      %1816 = vmatprep.mubr.f32.mxu0 0.0
      %1817 = vmatmul.mubr.f32.gmra.mrb[0].mxu0 %v1620
      %v1818 = vpop.f32.mrb[0].mxu0
      %v1819 = vadd.f32 0.0, %v1818
      %v1820 = vpop.f32.mrb[0].mxu0
      %1821 = vmatprep.mubr.f32.mxu0 0.0
      %1822 = vmatmul.mubr.f32.gmra.mrb[0].mxu0 %v1623
      %v1823 = vpop.f32.mrb[0].mxu0
      %v1824 = vadd.f32 0.0, %v1823
      %v1825 = vpop.f32.mrb[0].mxu0
      %1826 = vmatprep.mubr.f32.mxu0 0.0
      %1827 = vmatmul.mubr.f32.gmra.mrb[0].mxu0 %v1626
      %v1828 = vpop.f32.mrb[0].mxu0
      %v1829 = vadd.f32 0.0, %v1828
      %v1830 = vpop.f32.mrb[0].mxu0
      %1831 = vmatprep.mubr.f32.mxu0 0.0
      %1832 = vmatmul.mubr.f32.gmra.mrb[0].mxu0 %v1629
      %v1833 = vpop.f32.mrb[0].mxu0
      %v1834 = vadd.f32 0.0, %v1833
      %v1835 = vpop.f32.mrb[0].mxu0
      %1836 = vmatprep.mubr.f32.mxu0 0.0
      %1837 = vmatmul.mubr.f32.gmra.mrb[0].mxu0 %v1632
      %v1838 = vpop.f32.mrb[0].mxu0
      %v1839 = vadd.f32 0.0, %v1838
      %v1840 = vpop.f32.mrb[0].mxu0
      %1841 = vmatprep.mubr.f32.mxu0 0.0
      %1842 = vmatmul.mubr.f32.gmra.mrb[0].mxu0 %v1635
      %v1843 = vpop.f32.mrb[0].mxu0
      %v1844 = vadd.f32 0.0, %v1843
      %v1845 = vpop.f32.mrb[0].mxu0
      %1846 = vmatprep.mubr.f32.mxu0 0.0
      %1847 = vmatmul.mubr.f32.gmra.mrb[0].mxu0 %v1638
      %v1848 = vpop.f32.mrb[0].mxu0
      %v1849 = vadd.f32 0.0, %v1848
      %v1850 = vpop.f32.mrb[0].mxu0
      %1851 = vmatprep.mubr.f32.mxu0 0.0
      %1852 = vmatmul.mubr.f32.gmra.mrb[0].mxu0 %v1641
      %v1853 = vpop.f32.mrb[0].mxu0
      %v1854 = vadd.f32 0.0, %v1853
      %v1855 = vpop.f32.mrb[0].mxu0
      %1856 = vmatprep.mubr.f32.mxu0 0.0
      %1857 = vmatmul.mubr.f32.gmra.mrb[0].mxu0 %v1644
      %v1858 = vpop.f32.mrb[0].mxu0
      %v1859 = vadd.f32 0.0, %v1858
      %v1860 = vpop.f32.mrb[0].mxu0
      %1861 = vmatprep.mubr.f32.mxu0 0.0
      %1862 = vmatmul.mubr.f32.gmra.mrb[0].mxu0 %v1647
      %v1863 = vpop.f32.mrb[0].mxu0
      %v1864 = vadd.f32 0.0, %v1863
      %v1865 = vpop.f32.mrb[0].mxu0
      %1866 = vmatprep.mubr.f32.mxu0 0.0
      %1867 = vmatmul.mubr.f32.gmra.mrb[0].mxu0 %v1650
      %v1868 = vpop.f32.mrb[0].mxu0
      %v1869 = vadd.f32 0.0, %v1868
      %v1870 = vpop.f32.mrb[0].mxu0
      %1871 = vmatprep.mubr.f32.mxu0 0.0
      %1872 = vmatmul.mubr.f32.gmra.mrb[0].mxu0 %v1653
      %v1873 = vpop.f32.mrb[0].mxu0
      %v1874 = vadd.f32 0.0, %v1873
      %v1875 = vpop.f32.mrb[0].mxu0
      %1876 = vmatprep.mubr.f32.mxu0 0.0
      %1877 = vmatmul.mubr.f32.gmra.mrb[0].mxu0 %v1656
      %v1878 = vpop.f32.mrb[0].mxu0
      %v1879 = vadd.f32 0.0, %v1878
      %v1880 = vpop.f32.mrb[0].mxu0
      %1881 = vmatprep.mubr.f32.mxu0 0.0
      %1882 = vmatmul.mubr.f32.gmra.mrb[0].mxu0 %v1659
      %v1883 = vpop.f32.mrb[0].mxu0
      %v1884 = vadd.f32 0.0, %v1883
      %v1885 = vpop.f32.mrb[0].mxu0
      %1886 = vmatprep.mubr.f32.mxu0 0.0
      %1887 = vmatmul.mubr.f32.gmra.mrb[0].mxu0 %v1662
      %v1888 = vpop.f32.mrb[0].mxu0
      %v1889 = vadd.f32 0.0, %v1888
      %v1890 = vpop.f32.mrb[0].mxu0
      %1891 = vdwg.mxu0
      %v1892 = vadd.f32 %v1280, %v1734
      %v1893 = vadd.f32 %v1285, %v1739
      %v1894 = vadd.f32 %v1290, %v1744
      %v1895 = vadd.f32 %v1295, %v1749
      %v1896 = vadd.f32 %v1300, %v1754
      %v1897 = vadd.f32 %v1305, %v1759
      %v1898 = vadd.f32 %v1310, %v1764
      %v1899 = vadd.f32 %v1315, %v1769
      %v1900 = vadd.f32 %v1320, %v1774
      %v1901 = vadd.f32 %v1325, %v1779
      %v1902 = vadd.f32 %v1330, %v1784
      %v1903 = vadd.f32 %v1335, %v1789
      %v1904 = vadd.f32 %v1340, %v1794
      %v1905 = vadd.f32 %v1345, %v1799
      %v1906 = vadd.f32 %v1350, %v1804
      %v1907 = vadd.f32 %v1355, %v1809
      %v1908 = vadd.f32 %v1360, %v1814
      %v1909 = vadd.f32 %v1365, %v1819
      %v1910 = vadd.f32 %v1370, %v1824
      %v1911 = vadd.f32 %v1375, %v1829
      %v1912 = vadd.f32 %v1380, %v1834
      %v1913 = vadd.f32 %v1385, %v1839
      %v1914 = vadd.f32 %v1390, %v1844
      %v1915 = vadd.f32 %v1395, %v1849
      %v1916 = vadd.f32 %v1400, %v1854
      %v1917 = vadd.f32 %v1405, %v1859
      %v1918 = vadd.f32 %v1410, %v1864
      %v1919 = vadd.f32 %v1415, %v1869
      %v1920 = vadd.f32 %v1420, %v1874
      %v1921 = vadd.f32 %v1425, %v1879
      %v1922 = vadd.f32 %v1430, %v1884
      %v1923 = vadd.f32 %v1435, %v1889
      %v1924 = vld [vmem:[%s138 + $0x17] sm:$0xff]
      %v1925 = vld [vmem:[%s138 + $0x1f] sm:$0xff]
      %v1926 = vld [vmem:[%s138 + $0x27] sm:$0xff]
      %v1927 = vld [vmem:[%s138 + $0x2f] sm:$0xff]
      %v1928 = vld [vmem:[%s138 + $0x37] sm:$0xff]
      %v1929 = vld [vmem:[%s138 + $0x3f] sm:$0xff]
      %v1930 = vld [vmem:[%s138 + $0x47] sm:$0xff]
      %v1931 = vld [vmem:[%s138 + $0x4f] sm:$0xff]
      %v1932 = vld [vmem:[%s138 + $0x57] sm:$0xff]
      %v1933 = vld [vmem:[%s138 + $0x5f] sm:$0xff]
      %v1934 = vld [vmem:[%s138 + $0x67] sm:$0xff]
      %v1935 = vld [vmem:[%s138 + $0x6f] sm:$0xff]
      %v1936 = vld [vmem:[%s138 + $0x77] sm:$0xff]
      %v1937 = vld [vmem:[%s138 + $0x7f] sm:$0xff]
      %v1938 = vld [vmem:[%s138 + $0x87] sm:$0xff]
      %v1939 = vld [vmem:[%s138 + $0x8f] sm:$0xff]
      %v1940 = vld [vmem:[%s138 + $0x97] sm:$0xff]
      %v1941 = vld [vmem:[%s138 + $0x9f] sm:$0xff]
      %v1942 = vld [vmem:[%s138 + $0xa7] sm:$0xff]
      %v1943 = vld [vmem:[%s138 + $0xaf] sm:$0xff]
      %v1944 = vld [vmem:[%s138 + $0xb7] sm:$0xff]
      %v1945 = vld [vmem:[%s138 + $0xbf] sm:$0xff]
      %v1946 = vld [vmem:[%s138 + $0xc7] sm:$0xff]
      %v1947 = vld [vmem:[%s138 + $0xcf] sm:$0xff]
      %v1948 = vld [vmem:[%s138 + $0xd7] sm:$0xff]
      %v1949 = vld [vmem:[%s138 + $0xdf] sm:$0xff]
      %v1950 = vld [vmem:[%s138 + $0xe7] sm:$0xff]
      %v1951 = vld [vmem:[%s138 + $0xef] sm:$0xff]
      %v1952 = vld [vmem:[%s138 + $0xf7] sm:$0xff]
      %v1953 = vld [vmem:[%s138 + $0xff] sm:$0xff]
      %v1954 = vld [vmem:[%s138 + $0x107] sm:$0xff]
      %v1955 = vld [vmem:[%s138 + $0x10f] sm:$0xff]
      %v1956 = vsel %vm689, %v1924, 0.0
      %v1957 = vsel %vm690, %v1925, 0.0
      %v1958 = vsel %vm691, %v1926, 0.0
      %v1959 = vsel %vm692, %v1927, 0.0
      %v1960 = vsel %vm693, %v1928, 0.0
      %v1961 = vsel %vm694, %v1929, 0.0
      %v1962 = vsel %vm695, %v1930, 0.0
      %v1963 = vsel %vm696, %v1931, 0.0
      %v1964 = vsel %vm697, %v1932, 0.0
      %v1965 = vsel %vm698, %v1933, 0.0
      %v1966 = vsel %vm699, %v1934, 0.0
      %v1967 = vsel %vm700, %v1935, 0.0
      %v1968 = vsel %vm701, %v1936, 0.0
      %v1969 = vsel %vm702, %v1937, 0.0
      %v1970 = vsel %vm703, %v1938, 0.0
      %v1971 = vsel %vm704, %v1939, 0.0
      %v1972 = vsel %vm705, %v1940, 0.0
      %v1973 = vsel %vm706, %v1941, 0.0
      %v1974 = vsel %vm707, %v1942, 0.0
      %v1975 = vsel %vm708, %v1943, 0.0
      %v1976 = vsel %vm709, %v1944, 0.0
      %v1977 = vsel %vm710, %v1945, 0.0
      %v1978 = vsel %vm711, %v1946, 0.0
      %v1979 = vsel %vm712, %v1947, 0.0
      %v1980 = vsel %vm713, %v1948, 0.0
      %v1981 = vsel %vm714, %v1949, 0.0
      %v1982 = vsel %vm715, %v1950, 0.0
      %v1983 = vsel %vm716, %v1951, 0.0
      %v1984 = vsel %vm717, %v1952, 0.0
      %v1985 = vsel %vm718, %v1953, 0.0
      %v1986 = vsel %vm719, %v1954, 0.0
      %v1987 = vsel %vm720, %v1955, 0.0
      %s1988 = scalar_lea.vmem %s1, 12
      %v1989 = vld [vmem:[%s1988] sm:$0xf]
      %v1991 = vsel %vm788, %v1956, 0
      %v1994 = vsel %vm788, %v1957, 0
      %v1997 = vsel %vm788, %v1958, 0
      %v2000 = vsel %vm788, %v1959, 0
      %v2003 = vsel %vm788, %v1960, 0
      %v2006 = vsel %vm788, %v1961, 0
      %v2009 = vsel %vm788, %v1962, 0
      %v2012 = vsel %vm788, %v1963, 0
      %v2015 = vsel %vm788, %v1964, 0
      %v2018 = vsel %vm788, %v1965, 0
      %v2021 = vsel %vm788, %v1966, 0
      %v2024 = vsel %vm788, %v1967, 0
      %v2027 = vsel %vm788, %v1968, 0
      %v2030 = vsel %vm788, %v1969, 0
      %v2033 = vsel %vm788, %v1970, 0
      %v2036 = vsel %vm788, %v1971, 0
      %v2039 = vsel %vm788, %v1972, 0
      %v2042 = vsel %vm788, %v1973, 0
      %v2045 = vsel %vm788, %v1974, 0
      %v2048 = vsel %vm788, %v1975, 0
      %v2051 = vsel %vm788, %v1976, 0
      %v2054 = vsel %vm788, %v1977, 0
      %v2057 = vsel %vm788, %v1978, 0
      %v2060 = vsel %vm788, %v1979, 0
      %v2063 = vsel %vm788, %v1980, 0
      %v2066 = vsel %vm788, %v1981, 0
      %v2069 = vsel %vm788, %v1982, 0
      %v2072 = vsel %vm788, %v1983, 0
      %v2075 = vsel %vm788, %v1984, 0
      %v2078 = vsel %vm788, %v1985, 0
      %v2081 = vsel %vm788, %v1986, 0
      %v2084 = vsel %vm788, %v1987, 0
      %v2087 = vsel %vm885, %v1989, 0
      %2089 = vmatprep.subr.mxu0 0.0
      %2090 = vmatpush1.msra.mxu0 %v2087
      %2091 = vmatprep.subr.mxu0 0.0
      %2092 = vmatpush1.msra.mxu0 0.0
      %2093 = vmatprep.subr.mxu0 0.0
      %2094 = vmatpush1.msra.mxu0 0.0
      %2095 = vmatprep.subr.mxu0 0.0
      %2096 = vmatpush1.msra.mxu0 0.0
      %2097 = vmatprep.subr.mxu0 0.0
      %2098 = vmatpush1.msra.mxu0 0.0
      %2099 = vmatprep.subr.mxu0 0.0
      %2100 = vmatpush1.msra.mxu0 0.0
      %2101 = vmatprep.subr.mxu0 0.0
      %2102 = vmatpush1.msra.mxu0 0.0
      %2103 = vmatprep.subr.mxu0 0.0
      %2104 = vmatpush1.msra.mxu0 0.0
      %2105 = vmatprep.subr.mxu0 0.0
      %2106 = vmatpush1.msra.mxu0 0.0
      %2107 = vmatprep.subr.mxu0 0.0
      %2108 = vmatpush1.msra.mxu0 0.0
      %2109 = vmatprep.subr.mxu0 0.0
      %2110 = vmatpush1.msra.mxu0 0.0
      %2111 = vmatprep.subr.mxu0 0.0
      %2112 = vmatpush1.msra.mxu0 0.0
      %2113 = vmatprep.subr.mxu0 0.0
      %2114 = vmatpush1.msra.mxu0 0.0
      %2115 = vmatprep.subr.mxu0 0.0
      %2116 = vmatpush1.msra.mxu0 0.0
      %2117 = vmatprep.subr.mxu0 0.0
      %2118 = vmatpush1.msra.mxu0 0.0
      %2119 = vmatprep.subr.mxu0 0.0
      %2120 = vmatpush1.msra.mxu0 0.0
      %2121 = vmatprep.subr.mxu0 0.0
      %2122 = vmatpush1.msra.mxu0 0.0
      %2123 = vmatprep.subr.mxu0 0.0
      %2124 = vmatpush1.msra.mxu0 0.0
      %2125 = vmatprep.subr.mxu0 0.0
      %2126 = vmatpush1.msra.mxu0 0.0
      %2127 = vmatprep.subr.mxu0 0.0
      %2128 = vmatpush1.msra.mxu0 0.0
      %2129 = vmatprep.subr.mxu0 0.0
      %2130 = vmatpush1.msra.mxu0 0.0
      %2131 = vmatprep.subr.mxu0 0.0
      %2132 = vmatpush1.msra.mxu0 0.0
      %2133 = vmatprep.subr.mxu0 0.0
      %2134 = vmatpush1.msra.mxu0 0.0
      %2135 = vmatprep.subr.mxu0 0.0
      %2136 = vmatpush1.msra.mxu0 0.0
      %2137 = vmatprep.subr.mxu0 0.0
      %2138 = vmatpush1.msra.mxu0 0.0
      %2139 = vmatprep.subr.mxu0 0.0
      %2140 = vmatpush1.msra.mxu0 0.0
      %2141 = vmatprep.subr.mxu0 0.0
      %2142 = vmatpush1.msra.mxu0 0.0
      %2143 = vmatprep.subr.mxu0 0.0
      %2144 = vmatpush1.msra.mxu0 0.0
      %2145 = vmatprep.subr.mxu0 0.0
      %2146 = vmatpush1.msra.mxu0 0.0
      %2147 = vmatprep.subr.mxu0 0.0
      %2148 = vmatpush1.msra.mxu0 0.0
      %2149 = vmatprep.subr.mxu0 0.0
      %2150 = vmatpush1.msra.mxu0 0.0
      %2151 = vmatprep.subr.mxu0 0.0
      %2152 = vmatpush1.msra.mxu0 0.0
      %2153 = vmatprep.mubr.f32.mxu0 0.0
      %2154 = vmatmul.mubr.f32.gmra.mrb[0].mxu0 %v1991
      %v2155 = vpop.f32.mrb[0].mxu0
      %v2156 = vadd.f32 0.0, %v2155
      %v2157 = vpop.f32.mrb[0].mxu0
      %2158 = vmatprep.mubr.f32.mxu0 0.0
      %2159 = vmatmul.mubr.f32.gmra.mrb[0].mxu0 %v1994
      %v2160 = vpop.f32.mrb[0].mxu0
      %v2161 = vadd.f32 0.0, %v2160
      %v2162 = vpop.f32.mrb[0].mxu0
      %2163 = vmatprep.mubr.f32.mxu0 0.0
      %2164 = vmatmul.mubr.f32.gmra.mrb[0].mxu0 %v1997
      %v2165 = vpop.f32.mrb[0].mxu0
      %v2166 = vadd.f32 0.0, %v2165
      %v2167 = vpop.f32.mrb[0].mxu0
      %2168 = vmatprep.mubr.f32.mxu0 0.0
      %2169 = vmatmul.mubr.f32.gmra.mrb[0].mxu0 %v2000
      %v2170 = vpop.f32.mrb[0].mxu0
      %v2171 = vadd.f32 0.0, %v2170
      %v2172 = vpop.f32.mrb[0].mxu0
      %2173 = vmatprep.mubr.f32.mxu0 0.0
      %2174 = vmatmul.mubr.f32.gmra.mrb[0].mxu0 %v2003
      %v2175 = vpop.f32.mrb[0].mxu0
      %v2176 = vadd.f32 0.0, %v2175
      %v2177 = vpop.f32.mrb[0].mxu0
      %2178 = vmatprep.mubr.f32.mxu0 0.0
      %2179 = vmatmul.mubr.f32.gmra.mrb[0].mxu0 %v2006
      %v2180 = vpop.f32.mrb[0].mxu0
      %v2181 = vadd.f32 0.0, %v2180
      %v2182 = vpop.f32.mrb[0].mxu0
      %2183 = vmatprep.mubr.f32.mxu0 0.0
      %2184 = vmatmul.mubr.f32.gmra.mrb[0].mxu0 %v2009
      %v2185 = vpop.f32.mrb[0].mxu0
      %v2186 = vadd.f32 0.0, %v2185
      %v2187 = vpop.f32.mrb[0].mxu0
      %2188 = vmatprep.mubr.f32.mxu0 0.0
      %2189 = vmatmul.mubr.f32.gmra.mrb[0].mxu0 %v2012
      %v2190 = vpop.f32.mrb[0].mxu0
      %v2191 = vadd.f32 0.0, %v2190
      %v2192 = vpop.f32.mrb[0].mxu0
      %2193 = vmatprep.mubr.f32.mxu0 0.0
      %2194 = vmatmul.mubr.f32.gmra.mrb[0].mxu0 %v2015
      %v2195 = vpop.f32.mrb[0].mxu0
      %v2196 = vadd.f32 0.0, %v2195
      %v2197 = vpop.f32.mrb[0].mxu0
      %2198 = vmatprep.mubr.f32.mxu0 0.0
      %2199 = vmatmul.mubr.f32.gmra.mrb[0].mxu0 %v2018
      %v2200 = vpop.f32.mrb[0].mxu0
      %v2201 = vadd.f32 0.0, %v2200
      %v2202 = vpop.f32.mrb[0].mxu0
      %2203 = vmatprep.mubr.f32.mxu0 0.0
      %2204 = vmatmul.mubr.f32.gmra.mrb[0].mxu0 %v2021
      %v2205 = vpop.f32.mrb[0].mxu0
      %v2206 = vadd.f32 0.0, %v2205
      %v2207 = vpop.f32.mrb[0].mxu0
      %2208 = vmatprep.mubr.f32.mxu0 0.0
      %2209 = vmatmul.mubr.f32.gmra.mrb[0].mxu0 %v2024
      %v2210 = vpop.f32.mrb[0].mxu0
      %v2211 = vadd.f32 0.0, %v2210
      %v2212 = vpop.f32.mrb[0].mxu0
      %2213 = vmatprep.mubr.f32.mxu0 0.0
      %2214 = vmatmul.mubr.f32.gmra.mrb[0].mxu0 %v2027
      %v2215 = vpop.f32.mrb[0].mxu0
      %v2216 = vadd.f32 0.0, %v2215
      %v2217 = vpop.f32.mrb[0].mxu0
      %2218 = vmatprep.mubr.f32.mxu0 0.0
      %2219 = vmatmul.mubr.f32.gmra.mrb[0].mxu0 %v2030
      %v2220 = vpop.f32.mrb[0].mxu0
      %v2221 = vadd.f32 0.0, %v2220
      %v2222 = vpop.f32.mrb[0].mxu0
      %2223 = vmatprep.mubr.f32.mxu0 0.0
      %2224 = vmatmul.mubr.f32.gmra.mrb[0].mxu0 %v2033
      %v2225 = vpop.f32.mrb[0].mxu0
      %v2226 = vadd.f32 0.0, %v2225
      %v2227 = vpop.f32.mrb[0].mxu0
      %2228 = vmatprep.mubr.f32.mxu0 0.0
      %2229 = vmatmul.mubr.f32.gmra.mrb[0].mxu0 %v2036
      %v2230 = vpop.f32.mrb[0].mxu0
      %v2231 = vadd.f32 0.0, %v2230
      %v2232 = vpop.f32.mrb[0].mxu0
      %2233 = vmatprep.mubr.f32.mxu0 0.0
      %2234 = vmatmul.mubr.f32.gmra.mrb[0].mxu0 %v2039
      %v2235 = vpop.f32.mrb[0].mxu0
      %v2236 = vadd.f32 0.0, %v2235
      %v2237 = vpop.f32.mrb[0].mxu0
      %2238 = vmatprep.mubr.f32.mxu0 0.0
      %2239 = vmatmul.mubr.f32.gmra.mrb[0].mxu0 %v2042
      %v2240 = vpop.f32.mrb[0].mxu0
      %v2241 = vadd.f32 0.0, %v2240
      %v2242 = vpop.f32.mrb[0].mxu0
      %2243 = vmatprep.mubr.f32.mxu0 0.0
      %2244 = vmatmul.mubr.f32.gmra.mrb[0].mxu0 %v2045
      %v2245 = vpop.f32.mrb[0].mxu0
      %v2246 = vadd.f32 0.0, %v2245
      %v2247 = vpop.f32.mrb[0].mxu0
      %2248 = vmatprep.mubr.f32.mxu0 0.0
      %2249 = vmatmul.mubr.f32.gmra.mrb[0].mxu0 %v2048
      %v2250 = vpop.f32.mrb[0].mxu0
      %v2251 = vadd.f32 0.0, %v2250
      %v2252 = vpop.f32.mrb[0].mxu0
      %2253 = vmatprep.mubr.f32.mxu0 0.0
      %2254 = vmatmul.mubr.f32.gmra.mrb[0].mxu0 %v2051
      %v2255 = vpop.f32.mrb[0].mxu0
      %v2256 = vadd.f32 0.0, %v2255
      %v2257 = vpop.f32.mrb[0].mxu0
      %2258 = vmatprep.mubr.f32.mxu0 0.0
      %2259 = vmatmul.mubr.f32.gmra.mrb[0].mxu0 %v2054
      %v2260 = vpop.f32.mrb[0].mxu0
      %v2261 = vadd.f32 0.0, %v2260
      %v2262 = vpop.f32.mrb[0].mxu0
      %2263 = vmatprep.mubr.f32.mxu0 0.0
      %2264 = vmatmul.mubr.f32.gmra.mrb[0].mxu0 %v2057
      %v2265 = vpop.f32.mrb[0].mxu0
      %v2266 = vadd.f32 0.0, %v2265
      %v2267 = vpop.f32.mrb[0].mxu0
      %2268 = vmatprep.mubr.f32.mxu0 0.0
      %2269 = vmatmul.mubr.f32.gmra.mrb[0].mxu0 %v2060
      %v2270 = vpop.f32.mrb[0].mxu0
      %v2271 = vadd.f32 0.0, %v2270
      %v2272 = vpop.f32.mrb[0].mxu0
      %2273 = vmatprep.mubr.f32.mxu0 0.0
      %2274 = vmatmul.mubr.f32.gmra.mrb[0].mxu0 %v2063
      %v2275 = vpop.f32.mrb[0].mxu0
      %v2276 = vadd.f32 0.0, %v2275
      %v2277 = vpop.f32.mrb[0].mxu0
      %2278 = vmatprep.mubr.f32.mxu0 0.0
      %2279 = vmatmul.mubr.f32.gmra.mrb[0].mxu0 %v2066
      %v2280 = vpop.f32.mrb[0].mxu0
      %v2281 = vadd.f32 0.0, %v2280
      %v2282 = vpop.f32.mrb[0].mxu0
      %2283 = vmatprep.mubr.f32.mxu0 0.0
      %2284 = vmatmul.mubr.f32.gmra.mrb[0].mxu0 %v2069
      %v2285 = vpop.f32.mrb[0].mxu0
      %v2286 = vadd.f32 0.0, %v2285
      %v2287 = vpop.f32.mrb[0].mxu0
      %2288 = vmatprep.mubr.f32.mxu0 0.0
      %2289 = vmatmul.mubr.f32.gmra.mrb[0].mxu0 %v2072
      %v2290 = vpop.f32.mrb[0].mxu0
      %v2291 = vadd.f32 0.0, %v2290
      %v2292 = vpop.f32.mrb[0].mxu0
      %2293 = vmatprep.mubr.f32.mxu0 0.0
      %2294 = vmatmul.mubr.f32.gmra.mrb[0].mxu0 %v2075
      %v2295 = vpop.f32.mrb[0].mxu0
      %v2296 = vadd.f32 0.0, %v2295
      %v2297 = vpop.f32.mrb[0].mxu0
      %2298 = vmatprep.mubr.f32.mxu0 0.0
      %2299 = vmatmul.mubr.f32.gmra.mrb[0].mxu0 %v2078
      %v2300 = vpop.f32.mrb[0].mxu0
      %v2301 = vadd.f32 0.0, %v2300
      %v2302 = vpop.f32.mrb[0].mxu0
      %2303 = vmatprep.mubr.f32.mxu0 0.0
      %2304 = vmatmul.mubr.f32.gmra.mrb[0].mxu0 %v2081
      %v2305 = vpop.f32.mrb[0].mxu0
      %v2306 = vadd.f32 0.0, %v2305
      %v2307 = vpop.f32.mrb[0].mxu0
      %2308 = vmatprep.mubr.f32.mxu0 0.0
      %2309 = vmatmul.mubr.f32.gmra.mrb[0].mxu0 %v2084
      %v2310 = vpop.f32.mrb[0].mxu0
      %v2311 = vadd.f32 0.0, %v2310
      %v2312 = vpop.f32.mrb[0].mxu0
      %2313 = vdwg.mxu0
      %v2314 = vadd.f32 %v1892, %v2156
      %v2315 = vadd.f32 %v1893, %v2161
      %v2316 = vadd.f32 %v1894, %v2166
      %v2317 = vadd.f32 %v1895, %v2171
      %v2318 = vadd.f32 %v1896, %v2176
      %v2319 = vadd.f32 %v1897, %v2181
      %v2320 = vadd.f32 %v1898, %v2186
      %v2321 = vadd.f32 %v1899, %v2191
      %v2322 = vadd.f32 %v1900, %v2196
      %v2323 = vadd.f32 %v1901, %v2201
      %v2324 = vadd.f32 %v1902, %v2206
      %v2325 = vadd.f32 %v1903, %v2211
      %v2326 = vadd.f32 %v1904, %v2216
      %v2327 = vadd.f32 %v1905, %v2221
      %v2328 = vadd.f32 %v1906, %v2226
      %v2329 = vadd.f32 %v1907, %v2231
      %v2330 = vadd.f32 %v1908, %v2236
      %v2331 = vadd.f32 %v1909, %v2241
      %v2332 = vadd.f32 %v1910, %v2246
      %v2333 = vadd.f32 %v1911, %v2251
      %v2334 = vadd.f32 %v1912, %v2256
      %v2335 = vadd.f32 %v1913, %v2261
      %v2336 = vadd.f32 %v1914, %v2266
      %v2337 = vadd.f32 %v1915, %v2271
      %v2338 = vadd.f32 %v1916, %v2276
      %v2339 = vadd.f32 %v1917, %v2281
      %v2340 = vadd.f32 %v1918, %v2286
      %v2341 = vadd.f32 %v1919, %v2291
      %v2342 = vadd.f32 %v1920, %v2296
      %v2343 = vadd.f32 %v1921, %v2301
      %v2344 = vadd.f32 %v1922, %v2306
      %v2345 = vadd.f32 %v1923, %v2311
      %v2346 = vld [vmem:[%s138 + $0x18] sm:$0xff]
      %v2347 = vld [vmem:[%s138 + $0x20] sm:$0xff]
      %v2348 = vld [vmem:[%s138 + $0x28] sm:$0xff]
      %v2349 = vld [vmem:[%s138 + $0x30] sm:$0xff]
      %v2350 = vld [vmem:[%s138 + $0x38] sm:$0xff]
      %v2351 = vld [vmem:[%s138 + $0x40] sm:$0xff]
      %v2352 = vld [vmem:[%s138 + $0x48] sm:$0xff]
      %v2353 = vld [vmem:[%s138 + $0x50] sm:$0xff]
      %v2354 = vld [vmem:[%s138 + $0x58] sm:$0xff]
      %v2355 = vld [vmem:[%s138 + $0x60] sm:$0xff]
      %v2356 = vld [vmem:[%s138 + $0x68] sm:$0xff]
      %v2357 = vld [vmem:[%s138 + $0x70] sm:$0xff]
      %v2358 = vld [vmem:[%s138 + $0x78] sm:$0xff]
      %v2359 = vld [vmem:[%s138 + $0x80] sm:$0xff]
      %v2360 = vld [vmem:[%s138 + $0x88] sm:$0xff]
      %v2361 = vld [vmem:[%s138 + $0x90] sm:$0xff]
      %v2362 = vld [vmem:[%s138 + $0x98] sm:$0xff]
      %v2363 = vld [vmem:[%s138 + $0xa0] sm:$0xff]
      %v2364 = vld [vmem:[%s138 + $0xa8] sm:$0xff]
      %v2365 = vld [vmem:[%s138 + $0xb0] sm:$0xff]
      %v2366 = vld [vmem:[%s138 + $0xb8] sm:$0xff]
      %v2367 = vld [vmem:[%s138 + $0xc0] sm:$0xff]
      %v2368 = vld [vmem:[%s138 + $0xc8] sm:$0xff]
      %v2369 = vld [vmem:[%s138 + $0xd0] sm:$0xff]
      %v2370 = vld [vmem:[%s138 + $0xd8] sm:$0xff]
      %v2371 = vld [vmem:[%s138 + $0xe0] sm:$0xff]
      %v2372 = vld [vmem:[%s138 + $0xe8] sm:$0xff]
      %v2373 = vld [vmem:[%s138 + $0xf0] sm:$0xff]
      %v2374 = vld [vmem:[%s138 + $0xf8] sm:$0xff]
      %v2375 = vld [vmem:[%s138 + $0x100] sm:$0xff]
      %v2376 = vld [vmem:[%s138 + $0x108] sm:$0xff]
      %v2377 = vld [vmem:[%s138 + $0x110] sm:$0xff]
      %s2378 = scalar_lea.vmem %s1, 16
      %v2379 = vld [vmem:[%s2378] sm:$0xf]
      %v2381 = vsel %vm788, %v2346, 0
      %v2384 = vsel %vm788, %v2347, 0
      %v2387 = vsel %vm788, %v2348, 0
      %v2390 = vsel %vm788, %v2349, 0
      %v2393 = vsel %vm788, %v2350, 0
      %v2396 = vsel %vm788, %v2351, 0
      %v2399 = vsel %vm788, %v2352, 0
      %v2402 = vsel %vm788, %v2353, 0
      %v2405 = vsel %vm788, %v2354, 0
      %v2408 = vsel %vm788, %v2355, 0
      %v2411 = vsel %vm788, %v2356, 0
      %v2414 = vsel %vm788, %v2357, 0
      %v2417 = vsel %vm788, %v2358, 0
      %v2420 = vsel %vm788, %v2359, 0
      %v2423 = vsel %vm788, %v2360, 0
      %v2426 = vsel %vm788, %v2361, 0
      %v2429 = vsel %vm788, %v2362, 0
      %v2432 = vsel %vm788, %v2363, 0
      %v2435 = vsel %vm788, %v2364, 0
      %v2438 = vsel %vm788, %v2365, 0
      %v2441 = vsel %vm788, %v2366, 0
      %v2444 = vsel %vm788, %v2367, 0
      %v2447 = vsel %vm788, %v2368, 0
      %v2450 = vsel %vm788, %v2369, 0
      %v2453 = vsel %vm788, %v2370, 0
      %v2456 = vsel %vm788, %v2371, 0
      %v2459 = vsel %vm788, %v2372, 0
      %v2462 = vsel %vm788, %v2373, 0
      %v2465 = vsel %vm788, %v2374, 0
      %v2468 = vsel %vm788, %v2375, 0
      %v2471 = vsel %vm788, %v2376, 0
      %v2474 = vsel %vm788, %v2377, 0
      %v2477 = vsel %vm885, %v2379, 0
      %2479 = vmatprep.subr.mxu0 0.0
      %2480 = vmatpush1.msra.mxu0 %v2477
      %2481 = vmatprep.subr.mxu0 0.0
      %2482 = vmatpush1.msra.mxu0 0.0
      %2483 = vmatprep.subr.mxu0 0.0
      %2484 = vmatpush1.msra.mxu0 0.0
      %2485 = vmatprep.subr.mxu0 0.0
      %2486 = vmatpush1.msra.mxu0 0.0
      %2487 = vmatprep.subr.mxu0 0.0
      %2488 = vmatpush1.msra.mxu0 0.0
      %2489 = vmatprep.subr.mxu0 0.0
      %2490 = vmatpush1.msra.mxu0 0.0
      %2491 = vmatprep.subr.mxu0 0.0
      %2492 = vmatpush1.msra.mxu0 0.0
      %2493 = vmatprep.subr.mxu0 0.0
      %2494 = vmatpush1.msra.mxu0 0.0
      %2495 = vmatprep.subr.mxu0 0.0
      %2496 = vmatpush1.msra.mxu0 0.0
      %2497 = vmatprep.subr.mxu0 0.0
      %2498 = vmatpush1.msra.mxu0 0.0
      %2499 = vmatprep.subr.mxu0 0.0
      %2500 = vmatpush1.msra.mxu0 0.0
      %2501 = vmatprep.subr.mxu0 0.0
      %2502 = vmatpush1.msra.mxu0 0.0
      %2503 = vmatprep.subr.mxu0 0.0
      %2504 = vmatpush1.msra.mxu0 0.0
      %2505 = vmatprep.subr.mxu0 0.0
      %2506 = vmatpush1.msra.mxu0 0.0
      %2507 = vmatprep.subr.mxu0 0.0
      %2508 = vmatpush1.msra.mxu0 0.0
      %2509 = vmatprep.subr.mxu0 0.0
      %2510 = vmatpush1.msra.mxu0 0.0
      %2511 = vmatprep.subr.mxu0 0.0
      %2512 = vmatpush1.msra.mxu0 0.0
      %2513 = vmatprep.subr.mxu0 0.0
      %2514 = vmatpush1.msra.mxu0 0.0
      %2515 = vmatprep.subr.mxu0 0.0
      %2516 = vmatpush1.msra.mxu0 0.0
      %2517 = vmatprep.subr.mxu0 0.0
      %2518 = vmatpush1.msra.mxu0 0.0
      %2519 = vmatprep.subr.mxu0 0.0
      %2520 = vmatpush1.msra.mxu0 0.0
      %2521 = vmatprep.subr.mxu0 0.0
      %2522 = vmatpush1.msra.mxu0 0.0
      %2523 = vmatprep.subr.mxu0 0.0
      %2524 = vmatpush1.msra.mxu0 0.0
      %2525 = vmatprep.subr.mxu0 0.0
      %2526 = vmatpush1.msra.mxu0 0.0
      %2527 = vmatprep.subr.mxu0 0.0
      %2528 = vmatpush1.msra.mxu0 0.0
      %2529 = vmatprep.subr.mxu0 0.0
      %2530 = vmatpush1.msra.mxu0 0.0
      %2531 = vmatprep.subr.mxu0 0.0
      %2532 = vmatpush1.msra.mxu0 0.0
      %2533 = vmatprep.subr.mxu0 0.0
      %2534 = vmatpush1.msra.mxu0 0.0
      %2535 = vmatprep.subr.mxu0 0.0
      %2536 = vmatpush1.msra.mxu0 0.0
      %2537 = vmatprep.subr.mxu0 0.0
      %2538 = vmatpush1.msra.mxu0 0.0
      %2539 = vmatprep.subr.mxu0 0.0
      %2540 = vmatpush1.msra.mxu0 0.0
      %2541 = vmatprep.subr.mxu0 0.0
      %2542 = vmatpush1.msra.mxu0 0.0
      %2543 = vmatprep.mubr.f32.mxu0 0.0
      %2544 = vmatmul.mubr.f32.gmra.mrb[0].mxu0 %v2381
      %v2545 = vpop.f32.mrb[0].mxu0
      %v2546 = vadd.f32 0.0, %v2545
      %v2547 = vpop.f32.mrb[0].mxu0
      %2548 = vmatprep.mubr.f32.mxu0 0.0
      %2549 = vmatmul.mubr.f32.gmra.mrb[0].mxu0 %v2384
      %v2550 = vpop.f32.mrb[0].mxu0
      %v2551 = vadd.f32 0.0, %v2550
      %v2552 = vpop.f32.mrb[0].mxu0
      %2553 = vmatprep.mubr.f32.mxu0 0.0
      %2554 = vmatmul.mubr.f32.gmra.mrb[0].mxu0 %v2387
      %v2555 = vpop.f32.mrb[0].mxu0
      %v2556 = vadd.f32 0.0, %v2555
      %v2557 = vpop.f32.mrb[0].mxu0
      %2558 = vmatprep.mubr.f32.mxu0 0.0
      %2559 = vmatmul.mubr.f32.gmra.mrb[0].mxu0 %v2390
      %v2560 = vpop.f32.mrb[0].mxu0
      %v2561 = vadd.f32 0.0, %v2560
      %v2562 = vpop.f32.mrb[0].mxu0
      %2563 = vmatprep.mubr.f32.mxu0 0.0
      %2564 = vmatmul.mubr.f32.gmra.mrb[0].mxu0 %v2393
      %v2565 = vpop.f32.mrb[0].mxu0
      %v2566 = vadd.f32 0.0, %v2565
      %v2567 = vpop.f32.mrb[0].mxu0
      %2568 = vmatprep.mubr.f32.mxu0 0.0
      %2569 = vmatmul.mubr.f32.gmra.mrb[0].mxu0 %v2396
      %v2570 = vpop.f32.mrb[0].mxu0
      %v2571 = vadd.f32 0.0, %v2570
      %v2572 = vpop.f32.mrb[0].mxu0
      %2573 = vmatprep.mubr.f32.mxu0 0.0
      %2574 = vmatmul.mubr.f32.gmra.mrb[0].mxu0 %v2399
      %v2575 = vpop.f32.mrb[0].mxu0
      %v2576 = vadd.f32 0.0, %v2575
      %v2577 = vpop.f32.mrb[0].mxu0
      %2578 = vmatprep.mubr.f32.mxu0 0.0
      %2579 = vmatmul.mubr.f32.gmra.mrb[0].mxu0 %v2402
      %v2580 = vpop.f32.mrb[0].mxu0
      %v2581 = vadd.f32 0.0, %v2580
      %v2582 = vpop.f32.mrb[0].mxu0
      %2583 = vmatprep.mubr.f32.mxu0 0.0
      %2584 = vmatmul.mubr.f32.gmra.mrb[0].mxu0 %v2405
      %v2585 = vpop.f32.mrb[0].mxu0
      %v2586 = vadd.f32 0.0, %v2585
      %v2587 = vpop.f32.mrb[0].mxu0
      %2588 = vmatprep.mubr.f32.mxu0 0.0
      %2589 = vmatmul.mubr.f32.gmra.mrb[0].mxu0 %v2408
      %v2590 = vpop.f32.mrb[0].mxu0
      %v2591 = vadd.f32 0.0, %v2590
      %v2592 = vpop.f32.mrb[0].mxu0
      %2593 = vmatprep.mubr.f32.mxu0 0.0
      %2594 = vmatmul.mubr.f32.gmra.mrb[0].mxu0 %v2411
      %v2595 = vpop.f32.mrb[0].mxu0
      %v2596 = vadd.f32 0.0, %v2595
      %v2597 = vpop.f32.mrb[0].mxu0
      %2598 = vmatprep.mubr.f32.mxu0 0.0
      %2599 = vmatmul.mubr.f32.gmra.mrb[0].mxu0 %v2414
      %v2600 = vpop.f32.mrb[0].mxu0
      %v2601 = vadd.f32 0.0, %v2600
      %v2602 = vpop.f32.mrb[0].mxu0
      %2603 = vmatprep.mubr.f32.mxu0 0.0
      %2604 = vmatmul.mubr.f32.gmra.mrb[0].mxu0 %v2417
      %v2605 = vpop.f32.mrb[0].mxu0
      %v2606 = vadd.f32 0.0, %v2605
      %v2607 = vpop.f32.mrb[0].mxu0
      %2608 = vmatprep.mubr.f32.mxu0 0.0
      %2609 = vmatmul.mubr.f32.gmra.mrb[0].mxu0 %v2420
      %v2610 = vpop.f32.mrb[0].mxu0
      %v2611 = vadd.f32 0.0, %v2610
      %v2612 = vpop.f32.mrb[0].mxu0
      %2613 = vmatprep.mubr.f32.mxu0 0.0
      %2614 = vmatmul.mubr.f32.gmra.mrb[0].mxu0 %v2423
      %v2615 = vpop.f32.mrb[0].mxu0
      %v2616 = vadd.f32 0.0, %v2615
      %v2617 = vpop.f32.mrb[0].mxu0
      %2618 = vmatprep.mubr.f32.mxu0 0.0
      %2619 = vmatmul.mubr.f32.gmra.mrb[0].mxu0 %v2426
      %v2620 = vpop.f32.mrb[0].mxu0
      %v2621 = vadd.f32 0.0, %v2620
      %v2622 = vpop.f32.mrb[0].mxu0
      %2623 = vmatprep.mubr.f32.mxu0 0.0
      %2624 = vmatmul.mubr.f32.gmra.mrb[0].mxu0 %v2429
      %v2625 = vpop.f32.mrb[0].mxu0
      %v2626 = vadd.f32 0.0, %v2625
      %v2627 = vpop.f32.mrb[0].mxu0
      %2628 = vmatprep.mubr.f32.mxu0 0.0
      %2629 = vmatmul.mubr.f32.gmra.mrb[0].mxu0 %v2432
      %v2630 = vpop.f32.mrb[0].mxu0
      %v2631 = vadd.f32 0.0, %v2630
      %v2632 = vpop.f32.mrb[0].mxu0
      %2633 = vmatprep.mubr.f32.mxu0 0.0
      %2634 = vmatmul.mubr.f32.gmra.mrb[0].mxu0 %v2435
      %v2635 = vpop.f32.mrb[0].mxu0
      %v2636 = vadd.f32 0.0, %v2635
      %v2637 = vpop.f32.mrb[0].mxu0
      %2638 = vmatprep.mubr.f32.mxu0 0.0
      %2639 = vmatmul.mubr.f32.gmra.mrb[0].mxu0 %v2438
      %v2640 = vpop.f32.mrb[0].mxu0
      %v2641 = vadd.f32 0.0, %v2640
      %v2642 = vpop.f32.mrb[0].mxu0
      %2643 = vmatprep.mubr.f32.mxu0 0.0
      %2644 = vmatmul.mubr.f32.gmra.mrb[0].mxu0 %v2441
      %v2645 = vpop.f32.mrb[0].mxu0
      %v2646 = vadd.f32 0.0, %v2645
      %v2647 = vpop.f32.mrb[0].mxu0
      %2648 = vmatprep.mubr.f32.mxu0 0.0
      %2649 = vmatmul.mubr.f32.gmra.mrb[0].mxu0 %v2444
      %v2650 = vpop.f32.mrb[0].mxu0
      %v2651 = vadd.f32 0.0, %v2650
      %v2652 = vpop.f32.mrb[0].mxu0
      %2653 = vmatprep.mubr.f32.mxu0 0.0
      %2654 = vmatmul.mubr.f32.gmra.mrb[0].mxu0 %v2447
      %v2655 = vpop.f32.mrb[0].mxu0
      %v2656 = vadd.f32 0.0, %v2655
      %v2657 = vpop.f32.mrb[0].mxu0
      %2658 = vmatprep.mubr.f32.mxu0 0.0
      %2659 = vmatmul.mubr.f32.gmra.mrb[0].mxu0 %v2450
      %v2660 = vpop.f32.mrb[0].mxu0
      %v2661 = vadd.f32 0.0, %v2660
      %v2662 = vpop.f32.mrb[0].mxu0
      %2663 = vmatprep.mubr.f32.mxu0 0.0
      %2664 = vmatmul.mubr.f32.gmra.mrb[0].mxu0 %v2453
      %v2665 = vpop.f32.mrb[0].mxu0
      %v2666 = vadd.f32 0.0, %v2665
      %v2667 = vpop.f32.mrb[0].mxu0
      %2668 = vmatprep.mubr.f32.mxu0 0.0
      %2669 = vmatmul.mubr.f32.gmra.mrb[0].mxu0 %v2456
      %v2670 = vpop.f32.mrb[0].mxu0
      %v2671 = vadd.f32 0.0, %v2670
      %v2672 = vpop.f32.mrb[0].mxu0
      %2673 = vmatprep.mubr.f32.mxu0 0.0
      %2674 = vmatmul.mubr.f32.gmra.mrb[0].mxu0 %v2459
      %v2675 = vpop.f32.mrb[0].mxu0
      %v2676 = vadd.f32 0.0, %v2675
      %v2677 = vpop.f32.mrb[0].mxu0
      %2678 = vmatprep.mubr.f32.mxu0 0.0
      %2679 = vmatmul.mubr.f32.gmra.mrb[0].mxu0 %v2462
      %v2680 = vpop.f32.mrb[0].mxu0
      %v2681 = vadd.f32 0.0, %v2680
      %v2682 = vpop.f32.mrb[0].mxu0
      %2683 = vmatprep.mubr.f32.mxu0 0.0
      %2684 = vmatmul.mubr.f32.gmra.mrb[0].mxu0 %v2465
      %v2685 = vpop.f32.mrb[0].mxu0
      %v2686 = vadd.f32 0.0, %v2685
      %v2687 = vpop.f32.mrb[0].mxu0
      %2688 = vmatprep.mubr.f32.mxu0 0.0
      %2689 = vmatmul.mubr.f32.gmra.mrb[0].mxu0 %v2468
      %v2690 = vpop.f32.mrb[0].mxu0
      %v2691 = vadd.f32 0.0, %v2690
      %v2692 = vpop.f32.mrb[0].mxu0
      %2693 = vmatprep.mubr.f32.mxu0 0.0
      %2694 = vmatmul.mubr.f32.gmra.mrb[0].mxu0 %v2471
      %v2695 = vpop.f32.mrb[0].mxu0
      %v2696 = vadd.f32 0.0, %v2695
      %v2697 = vpop.f32.mrb[0].mxu0
      %2698 = vmatprep.mubr.f32.mxu0 0.0
      %2699 = vmatmul.mubr.f32.gmra.mrb[0].mxu0 %v2474
      %v2700 = vpop.f32.mrb[0].mxu0
      %v2701 = vadd.f32 0.0, %v2700
      %v2702 = vpop.f32.mrb[0].mxu0
      %2703 = vdwg.mxu0
      %v2704 = vadd.f32 %v2314, %v2546
      %v2705 = vadd.f32 %v2315, %v2551
      %v2706 = vadd.f32 %v2316, %v2556
      %v2707 = vadd.f32 %v2317, %v2561
      %v2708 = vadd.f32 %v2318, %v2566
      %v2709 = vadd.f32 %v2319, %v2571
      %v2710 = vadd.f32 %v2320, %v2576
      %v2711 = vadd.f32 %v2321, %v2581
      %v2712 = vadd.f32 %v2322, %v2586
      %v2713 = vadd.f32 %v2323, %v2591
      %v2714 = vadd.f32 %v2324, %v2596
      %v2715 = vadd.f32 %v2325, %v2601
      %v2716 = vadd.f32 %v2326, %v2606
      %v2717 = vadd.f32 %v2327, %v2611
      %v2718 = vadd.f32 %v2328, %v2616
      %v2719 = vadd.f32 %v2329, %v2621
      %v2720 = vadd.f32 %v2330, %v2626
      %v2721 = vadd.f32 %v2331, %v2631
      %v2722 = vadd.f32 %v2332, %v2636
      %v2723 = vadd.f32 %v2333, %v2641
      %v2724 = vadd.f32 %v2334, %v2646
      %v2725 = vadd.f32 %v2335, %v2651
      %v2726 = vadd.f32 %v2336, %v2656
      %v2727 = vadd.f32 %v2337, %v2661
      %v2728 = vadd.f32 %v2338, %v2666
      %v2729 = vadd.f32 %v2339, %v2671
      %v2730 = vadd.f32 %v2340, %v2676
      %v2731 = vadd.f32 %v2341, %v2681
      %v2732 = vadd.f32 %v2342, %v2686
      %v2733 = vadd.f32 %v2343, %v2691
      %v2734 = vadd.f32 %v2344, %v2696
      %v2735 = vadd.f32 %v2345, %v2701
      %v2736 = vld [vmem:[%s138 + $0x19] sm:$0xff]
      %v2737 = vld [vmem:[%s138 + $0x21] sm:$0xff]
      %v2738 = vld [vmem:[%s138 + $0x29] sm:$0xff]
      %v2739 = vld [vmem:[%s138 + $0x31] sm:$0xff]
      %v2740 = vld [vmem:[%s138 + $0x39] sm:$0xff]
      %v2741 = vld [vmem:[%s138 + $0x41] sm:$0xff]
      %v2742 = vld [vmem:[%s138 + $0x49] sm:$0xff]
      %v2743 = vld [vmem:[%s138 + $0x51] sm:$0xff]
      %v2744 = vld [vmem:[%s138 + $0x59] sm:$0xff]
      %v2745 = vld [vmem:[%s138 + $0x61] sm:$0xff]
      %v2746 = vld [vmem:[%s138 + $0x69] sm:$0xff]
      %v2747 = vld [vmem:[%s138 + $0x71] sm:$0xff]
      %v2748 = vld [vmem:[%s138 + $0x79] sm:$0xff]
      %v2749 = vld [vmem:[%s138 + $0x81] sm:$0xff]
      %v2750 = vld [vmem:[%s138 + $0x89] sm:$0xff]
      %v2751 = vld [vmem:[%s138 + $0x91] sm:$0xff]
      %v2752 = vld [vmem:[%s138 + $0x99] sm:$0xff]
      %v2753 = vld [vmem:[%s138 + $0xa1] sm:$0xff]
      %v2754 = vld [vmem:[%s138 + $0xa9] sm:$0xff]
      %v2755 = vld [vmem:[%s138 + $0xb1] sm:$0xff]
      %v2756 = vld [vmem:[%s138 + $0xb9] sm:$0xff]
      %v2757 = vld [vmem:[%s138 + $0xc1] sm:$0xff]
      %v2758 = vld [vmem:[%s138 + $0xc9] sm:$0xff]
      %v2759 = vld [vmem:[%s138 + $0xd1] sm:$0xff]
      %v2760 = vld [vmem:[%s138 + $0xd9] sm:$0xff]
      %v2761 = vld [vmem:[%s138 + $0xe1] sm:$0xff]
      %v2762 = vld [vmem:[%s138 + $0xe9] sm:$0xff]
      %v2763 = vld [vmem:[%s138 + $0xf1] sm:$0xff]
      %v2764 = vld [vmem:[%s138 + $0xf9] sm:$0xff]
      %v2765 = vld [vmem:[%s138 + $0x101] sm:$0xff]
      %v2766 = vld [vmem:[%s138 + $0x109] sm:$0xff]
      %v2767 = vld [vmem:[%s138 + $0x111] sm:$0xff]
      %v2768 = vsel %vm1502, %v2736, 0.0
      %v2769 = vsel %vm1503, %v2737, 0.0
      %v2770 = vsel %vm1504, %v2738, 0.0
      %v2771 = vsel %vm1505, %v2739, 0.0
      %v2772 = vsel %vm1506, %v2740, 0.0
      %v2773 = vsel %vm1507, %v2741, 0.0
      %v2774 = vsel %vm1508, %v2742, 0.0
      %v2775 = vsel %vm1509, %v2743, 0.0
      %v2776 = vsel %vm1510, %v2744, 0.0
      %v2777 = vsel %vm1511, %v2745, 0.0
      %v2778 = vsel %vm1512, %v2746, 0.0
      %v2779 = vsel %vm1513, %v2747, 0.0
      %v2780 = vsel %vm1514, %v2748, 0.0
      %v2781 = vsel %vm1515, %v2749, 0.0
      %v2782 = vsel %vm1516, %v2750, 0.0
      %v2783 = vsel %vm1517, %v2751, 0.0
      %v2784 = vsel %vm1518, %v2752, 0.0
      %v2785 = vsel %vm1519, %v2753, 0.0
      %v2786 = vsel %vm1520, %v2754, 0.0
      %v2787 = vsel %vm1521, %v2755, 0.0
      %v2788 = vsel %vm1522, %v2756, 0.0
      %v2789 = vsel %vm1523, %v2757, 0.0
      %v2790 = vsel %vm1524, %v2758, 0.0
      %v2791 = vsel %vm1525, %v2759, 0.0
      %v2792 = vsel %vm1526, %v2760, 0.0
      %v2793 = vsel %vm1527, %v2761, 0.0
      %v2794 = vsel %vm1528, %v2762, 0.0
      %v2795 = vsel %vm1529, %v2763, 0.0
      %v2796 = vsel %vm1530, %v2764, 0.0
      %v2797 = vsel %vm1531, %v2765, 0.0
      %v2798 = vsel %vm1532, %v2766, 0.0
      %v2799 = vsel %vm1533, %v2767, 0.0
      %s2800 = scalar_lea.vmem %s1, 20
      %v2801 = vld [vmem:[%s2800] sm:$0xf]
      %v2803 = vsel %vm788, %v2768, 0
      %v2806 = vsel %vm788, %v2769, 0
      %v2809 = vsel %vm788, %v2770, 0
      %v2812 = vsel %vm788, %v2771, 0
      %v2815 = vsel %vm788, %v2772, 0
      %v2818 = vsel %vm788, %v2773, 0
      %v2821 = vsel %vm788, %v2774, 0
      %v2824 = vsel %vm788, %v2775, 0
      %v2827 = vsel %vm788, %v2776, 0
      %v2830 = vsel %vm788, %v2777, 0
      %v2833 = vsel %vm788, %v2778, 0
      %v2836 = vsel %vm788, %v2779, 0
      %v2839 = vsel %vm788, %v2780, 0
      %v2842 = vsel %vm788, %v2781, 0
      %v2845 = vsel %vm788, %v2782, 0
      %v2848 = vsel %vm788, %v2783, 0
      %v2851 = vsel %vm788, %v2784, 0
      %v2854 = vsel %vm788, %v2785, 0
      %v2857 = vsel %vm788, %v2786, 0
      %v2860 = vsel %vm788, %v2787, 0
      %v2863 = vsel %vm788, %v2788, 0
      %v2866 = vsel %vm788, %v2789, 0
      %v2869 = vsel %vm788, %v2790, 0
      %v2872 = vsel %vm788, %v2791, 0
      %v2875 = vsel %vm788, %v2792, 0
      %v2878 = vsel %vm788, %v2793, 0
      %v2881 = vsel %vm788, %v2794, 0
      %v2884 = vsel %vm788, %v2795, 0
      %v2887 = vsel %vm788, %v2796, 0
      %v2890 = vsel %vm788, %v2797, 0
      %v2893 = vsel %vm788, %v2798, 0
      %v2896 = vsel %vm788, %v2799, 0
      %v2899 = vsel %vm885, %v2801, 0
      %2901 = vmatprep.subr.mxu0 0.0
      %2902 = vmatpush1.msra.mxu0 %v2899
      %2903 = vmatprep.subr.mxu0 0.0
      %2904 = vmatpush1.msra.mxu0 0.0
      %2905 = vmatprep.subr.mxu0 0.0
      %2906 = vmatpush1.msra.mxu0 0.0
      %2907 = vmatprep.subr.mxu0 0.0
      %2908 = vmatpush1.msra.mxu0 0.0
      %2909 = vmatprep.subr.mxu0 0.0
      %2910 = vmatpush1.msra.mxu0 0.0
      %2911 = vmatprep.subr.mxu0 0.0
      %2912 = vmatpush1.msra.mxu0 0.0
      %2913 = vmatprep.subr.mxu0 0.0
      %2914 = vmatpush1.msra.mxu0 0.0
      %2915 = vmatprep.subr.mxu0 0.0
      %2916 = vmatpush1.msra.mxu0 0.0
      %2917 = vmatprep.subr.mxu0 0.0
      %2918 = vmatpush1.msra.mxu0 0.0
      %2919 = vmatprep.subr.mxu0 0.0
      %2920 = vmatpush1.msra.mxu0 0.0
      %2921 = vmatprep.subr.mxu0 0.0
      %2922 = vmatpush1.msra.mxu0 0.0
      %2923 = vmatprep.subr.mxu0 0.0
      %2924 = vmatpush1.msra.mxu0 0.0
      %2925 = vmatprep.subr.mxu0 0.0
      %2926 = vmatpush1.msra.mxu0 0.0
      %2927 = vmatprep.subr.mxu0 0.0
      %2928 = vmatpush1.msra.mxu0 0.0
      %2929 = vmatprep.subr.mxu0 0.0
      %2930 = vmatpush1.msra.mxu0 0.0
      %2931 = vmatprep.subr.mxu0 0.0
      %2932 = vmatpush1.msra.mxu0 0.0
      %2933 = vmatprep.subr.mxu0 0.0
      %2934 = vmatpush1.msra.mxu0 0.0
      %2935 = vmatprep.subr.mxu0 0.0
      %2936 = vmatpush1.msra.mxu0 0.0
      %2937 = vmatprep.subr.mxu0 0.0
      %2938 = vmatpush1.msra.mxu0 0.0
      %2939 = vmatprep.subr.mxu0 0.0
      %2940 = vmatpush1.msra.mxu0 0.0
      %2941 = vmatprep.subr.mxu0 0.0
      %2942 = vmatpush1.msra.mxu0 0.0
      %2943 = vmatprep.subr.mxu0 0.0
      %2944 = vmatpush1.msra.mxu0 0.0
      %2945 = vmatprep.subr.mxu0 0.0
      %2946 = vmatpush1.msra.mxu0 0.0
      %2947 = vmatprep.subr.mxu0 0.0
      %2948 = vmatpush1.msra.mxu0 0.0
      %2949 = vmatprep.subr.mxu0 0.0
      %2950 = vmatpush1.msra.mxu0 0.0
      %2951 = vmatprep.subr.mxu0 0.0
      %2952 = vmatpush1.msra.mxu0 0.0
      %2953 = vmatprep.subr.mxu0 0.0
      %2954 = vmatpush1.msra.mxu0 0.0
      %2955 = vmatprep.subr.mxu0 0.0
      %2956 = vmatpush1.msra.mxu0 0.0
      %2957 = vmatprep.subr.mxu0 0.0
      %2958 = vmatpush1.msra.mxu0 0.0
      %2959 = vmatprep.subr.mxu0 0.0
      %2960 = vmatpush1.msra.mxu0 0.0
      %2961 = vmatprep.subr.mxu0 0.0
      %2962 = vmatpush1.msra.mxu0 0.0
      %2963 = vmatprep.subr.mxu0 0.0
      %2964 = vmatpush1.msra.mxu0 0.0
      %2965 = vmatprep.mubr.f32.mxu0 0.0
      %2966 = vmatmul.mubr.f32.gmra.mrb[0].mxu0 %v2803
      %v2967 = vpop.f32.mrb[0].mxu0
      %v2968 = vadd.f32 0.0, %v2967
      %v2969 = vpop.f32.mrb[0].mxu0
      %2970 = vmatprep.mubr.f32.mxu0 0.0
      %2971 = vmatmul.mubr.f32.gmra.mrb[0].mxu0 %v2806
      %v2972 = vpop.f32.mrb[0].mxu0
      %v2973 = vadd.f32 0.0, %v2972
      %v2974 = vpop.f32.mrb[0].mxu0
      %2975 = vmatprep.mubr.f32.mxu0 0.0
      %2976 = vmatmul.mubr.f32.gmra.mrb[0].mxu0 %v2809
      %v2977 = vpop.f32.mrb[0].mxu0
      %v2978 = vadd.f32 0.0, %v2977
      %v2979 = vpop.f32.mrb[0].mxu0
      %2980 = vmatprep.mubr.f32.mxu0 0.0
      %2981 = vmatmul.mubr.f32.gmra.mrb[0].mxu0 %v2812
      %v2982 = vpop.f32.mrb[0].mxu0
      %v2983 = vadd.f32 0.0, %v2982
      %v2984 = vpop.f32.mrb[0].mxu0
      %2985 = vmatprep.mubr.f32.mxu0 0.0
      %2986 = vmatmul.mubr.f32.gmra.mrb[0].mxu0 %v2815
      %v2987 = vpop.f32.mrb[0].mxu0
      %v2988 = vadd.f32 0.0, %v2987
      %v2989 = vpop.f32.mrb[0].mxu0
      %2990 = vmatprep.mubr.f32.mxu0 0.0
      %2991 = vmatmul.mubr.f32.gmra.mrb[0].mxu0 %v2818
      %v2992 = vpop.f32.mrb[0].mxu0
      %v2993 = vadd.f32 0.0, %v2992
      %v2994 = vpop.f32.mrb[0].mxu0
      %2995 = vmatprep.mubr.f32.mxu0 0.0
      %2996 = vmatmul.mubr.f32.gmra.mrb[0].mxu0 %v2821
      %v2997 = vpop.f32.mrb[0].mxu0
      %v2998 = vadd.f32 0.0, %v2997
      %v2999 = vpop.f32.mrb[0].mxu0
      %3000 = vmatprep.mubr.f32.mxu0 0.0
      %3001 = vmatmul.mubr.f32.gmra.mrb[0].mxu0 %v2824
      %v3002 = vpop.f32.mrb[0].mxu0
      %v3003 = vadd.f32 0.0, %v3002
      %v3004 = vpop.f32.mrb[0].mxu0
      %3005 = vmatprep.mubr.f32.mxu0 0.0
      %3006 = vmatmul.mubr.f32.gmra.mrb[0].mxu0 %v2827
      %v3007 = vpop.f32.mrb[0].mxu0
      %v3008 = vadd.f32 0.0, %v3007
      %v3009 = vpop.f32.mrb[0].mxu0
      %3010 = vmatprep.mubr.f32.mxu0 0.0
      %3011 = vmatmul.mubr.f32.gmra.mrb[0].mxu0 %v2830
      %v3012 = vpop.f32.mrb[0].mxu0
      %v3013 = vadd.f32 0.0, %v3012
      %v3014 = vpop.f32.mrb[0].mxu0
      %3015 = vmatprep.mubr.f32.mxu0 0.0
      %3016 = vmatmul.mubr.f32.gmra.mrb[0].mxu0 %v2833
      %v3017 = vpop.f32.mrb[0].mxu0
      %v3018 = vadd.f32 0.0, %v3017
      %v3019 = vpop.f32.mrb[0].mxu0
      %3020 = vmatprep.mubr.f32.mxu0 0.0
      %3021 = vmatmul.mubr.f32.gmra.mrb[0].mxu0 %v2836
      %v3022 = vpop.f32.mrb[0].mxu0
      %v3023 = vadd.f32 0.0, %v3022
      %v3024 = vpop.f32.mrb[0].mxu0
      %3025 = vmatprep.mubr.f32.mxu0 0.0
      %3026 = vmatmul.mubr.f32.gmra.mrb[0].mxu0 %v2839
      %v3027 = vpop.f32.mrb[0].mxu0
      %v3028 = vadd.f32 0.0, %v3027
      %v3029 = vpop.f32.mrb[0].mxu0
      %3030 = vmatprep.mubr.f32.mxu0 0.0
      %3031 = vmatmul.mubr.f32.gmra.mrb[0].mxu0 %v2842
      %v3032 = vpop.f32.mrb[0].mxu0
      %v3033 = vadd.f32 0.0, %v3032
      %v3034 = vpop.f32.mrb[0].mxu0
      %3035 = vmatprep.mubr.f32.mxu0 0.0
      %3036 = vmatmul.mubr.f32.gmra.mrb[0].mxu0 %v2845
      %v3037 = vpop.f32.mrb[0].mxu0
      %v3038 = vadd.f32 0.0, %v3037
      %v3039 = vpop.f32.mrb[0].mxu0
      %3040 = vmatprep.mubr.f32.mxu0 0.0
      %3041 = vmatmul.mubr.f32.gmra.mrb[0].mxu0 %v2848
      %v3042 = vpop.f32.mrb[0].mxu0
      %v3043 = vadd.f32 0.0, %v3042
      %v3044 = vpop.f32.mrb[0].mxu0
      %3045 = vmatprep.mubr.f32.mxu0 0.0
      %3046 = vmatmul.mubr.f32.gmra.mrb[0].mxu0 %v2851
      %v3047 = vpop.f32.mrb[0].mxu0
      %v3048 = vadd.f32 0.0, %v3047
      %v3049 = vpop.f32.mrb[0].mxu0
      %3050 = vmatprep.mubr.f32.mxu0 0.0
      %3051 = vmatmul.mubr.f32.gmra.mrb[0].mxu0 %v2854
      %v3052 = vpop.f32.mrb[0].mxu0
      %v3053 = vadd.f32 0.0, %v3052
      %v3054 = vpop.f32.mrb[0].mxu0
      %3055 = vmatprep.mubr.f32.mxu0 0.0
      %3056 = vmatmul.mubr.f32.gmra.mrb[0].mxu0 %v2857
      %v3057 = vpop.f32.mrb[0].mxu0
      %v3058 = vadd.f32 0.0, %v3057
      %v3059 = vpop.f32.mrb[0].mxu0
      %3060 = vmatprep.mubr.f32.mxu0 0.0
      %3061 = vmatmul.mubr.f32.gmra.mrb[0].mxu0 %v2860
      %v3062 = vpop.f32.mrb[0].mxu0
      %v3063 = vadd.f32 0.0, %v3062
      %v3064 = vpop.f32.mrb[0].mxu0
      %3065 = vmatprep.mubr.f32.mxu0 0.0
      %3066 = vmatmul.mubr.f32.gmra.mrb[0].mxu0 %v2863
      %v3067 = vpop.f32.mrb[0].mxu0
      %v3068 = vadd.f32 0.0, %v3067
      %v3069 = vpop.f32.mrb[0].mxu0
      %3070 = vmatprep.mubr.f32.mxu0 0.0
      %3071 = vmatmul.mubr.f32.gmra.mrb[0].mxu0 %v2866
      %v3072 = vpop.f32.mrb[0].mxu0
      %v3073 = vadd.f32 0.0, %v3072
      %v3074 = vpop.f32.mrb[0].mxu0
      %3075 = vmatprep.mubr.f32.mxu0 0.0
      %3076 = vmatmul.mubr.f32.gmra.mrb[0].mxu0 %v2869
      %v3077 = vpop.f32.mrb[0].mxu0
      %v3078 = vadd.f32 0.0, %v3077
      %v3079 = vpop.f32.mrb[0].mxu0
      %3080 = vmatprep.mubr.f32.mxu0 0.0
      %3081 = vmatmul.mubr.f32.gmra.mrb[0].mxu0 %v2872
      %v3082 = vpop.f32.mrb[0].mxu0
      %v3083 = vadd.f32 0.0, %v3082
      %v3084 = vpop.f32.mrb[0].mxu0
      %3085 = vmatprep.mubr.f32.mxu0 0.0
      %3086 = vmatmul.mubr.f32.gmra.mrb[0].mxu0 %v2875
      %v3087 = vpop.f32.mrb[0].mxu0
      %v3088 = vadd.f32 0.0, %v3087
      %v3089 = vpop.f32.mrb[0].mxu0
      %3090 = vmatprep.mubr.f32.mxu0 0.0
      %3091 = vmatmul.mubr.f32.gmra.mrb[0].mxu0 %v2878
      %v3092 = vpop.f32.mrb[0].mxu0
      %v3093 = vadd.f32 0.0, %v3092
      %v3094 = vpop.f32.mrb[0].mxu0
      %3095 = vmatprep.mubr.f32.mxu0 0.0
      %3096 = vmatmul.mubr.f32.gmra.mrb[0].mxu0 %v2881
      %v3097 = vpop.f32.mrb[0].mxu0
      %v3098 = vadd.f32 0.0, %v3097
      %v3099 = vpop.f32.mrb[0].mxu0
      %3100 = vmatprep.mubr.f32.mxu0 0.0
      %3101 = vmatmul.mubr.f32.gmra.mrb[0].mxu0 %v2884
      %v3102 = vpop.f32.mrb[0].mxu0
      %v3103 = vadd.f32 0.0, %v3102
      %v3104 = vpop.f32.mrb[0].mxu0
      %3105 = vmatprep.mubr.f32.mxu0 0.0
      %3106 = vmatmul.mubr.f32.gmra.mrb[0].mxu0 %v2887
      %v3107 = vpop.f32.mrb[0].mxu0
      %v3108 = vadd.f32 0.0, %v3107
      %v3109 = vpop.f32.mrb[0].mxu0
      %3110 = vmatprep.mubr.f32.mxu0 0.0
      %3111 = vmatmul.mubr.f32.gmra.mrb[0].mxu0 %v2890
      %v3112 = vpop.f32.mrb[0].mxu0
      %v3113 = vadd.f32 0.0, %v3112
      %v3114 = vpop.f32.mrb[0].mxu0
      %3115 = vmatprep.mubr.f32.mxu0 0.0
      %3116 = vmatmul.mubr.f32.gmra.mrb[0].mxu0 %v2893
      %v3117 = vpop.f32.mrb[0].mxu0
      %v3118 = vadd.f32 0.0, %v3117
      %v3119 = vpop.f32.mrb[0].mxu0
      %3120 = vmatprep.mubr.f32.mxu0 0.0
      %3121 = vmatmul.mubr.f32.gmra.mrb[0].mxu0 %v2896
      %v3122 = vpop.f32.mrb[0].mxu0
      %v3123 = vadd.f32 0.0, %v3122
      %v3124 = vpop.f32.mrb[0].mxu0
      %3125 = vdwg.mxu0
      %v3126 = vadd.f32 %v2704, %v2968
      %v3127 = vadd.f32 %v2705, %v2973
      %v3128 = vadd.f32 %v2706, %v2978
      %v3129 = vadd.f32 %v2707, %v2983
      %v3130 = vadd.f32 %v2708, %v2988
      %v3131 = vadd.f32 %v2709, %v2993
      %v3132 = vadd.f32 %v2710, %v2998
      %v3133 = vadd.f32 %v2711, %v3003
      %v3134 = vadd.f32 %v2712, %v3008
      %v3135 = vadd.f32 %v2713, %v3013
      %v3136 = vadd.f32 %v2714, %v3018
      %v3137 = vadd.f32 %v2715, %v3023
      %v3138 = vadd.f32 %v2716, %v3028
      %v3139 = vadd.f32 %v2717, %v3033
      %v3140 = vadd.f32 %v2718, %v3038
      %v3141 = vadd.f32 %v2719, %v3043
      %v3142 = vadd.f32 %v2720, %v3048
      %v3143 = vadd.f32 %v2721, %v3053
      %v3144 = vadd.f32 %v2722, %v3058
      %v3145 = vadd.f32 %v2723, %v3063
      %v3146 = vadd.f32 %v2724, %v3068
      %v3147 = vadd.f32 %v2725, %v3073
      %v3148 = vadd.f32 %v2726, %v3078
      %v3149 = vadd.f32 %v2727, %v3083
      %v3150 = vadd.f32 %v2728, %v3088
      %v3151 = vadd.f32 %v2729, %v3093
      %v3152 = vadd.f32 %v2730, %v3098
      %v3153 = vadd.f32 %v2731, %v3103
      %v3154 = vadd.f32 %v2732, %v3108
      %v3155 = vadd.f32 %v2733, %v3113
      %v3156 = vadd.f32 %v2734, %v3118
      %v3157 = vadd.f32 %v2735, %v3123
      %v3158 = vld [vmem:[%s138 + $0x27] sm:$0xff]
      %v3159 = vld [vmem:[%s138 + $0x2f] sm:$0xff]
      %v3160 = vld [vmem:[%s138 + $0x37] sm:$0xff]
      %v3161 = vld [vmem:[%s138 + $0x3f] sm:$0xff]
      %v3162 = vld [vmem:[%s138 + $0x47] sm:$0xff]
      %v3163 = vld [vmem:[%s138 + $0x4f] sm:$0xff]
      %v3164 = vld [vmem:[%s138 + $0x57] sm:$0xff]
      %v3165 = vld [vmem:[%s138 + $0x5f] sm:$0xff]
      %v3166 = vld [vmem:[%s138 + $0x67] sm:$0xff]
      %v3167 = vld [vmem:[%s138 + $0x6f] sm:$0xff]
      %v3168 = vld [vmem:[%s138 + $0x77] sm:$0xff]
      %v3169 = vld [vmem:[%s138 + $0x7f] sm:$0xff]
      %v3170 = vld [vmem:[%s138 + $0x87] sm:$0xff]
      %v3171 = vld [vmem:[%s138 + $0x8f] sm:$0xff]
      %v3172 = vld [vmem:[%s138 + $0x97] sm:$0xff]
      %v3173 = vld [vmem:[%s138 + $0x9f] sm:$0xff]
      %v3174 = vld [vmem:[%s138 + $0xa7] sm:$0xff]
      %v3175 = vld [vmem:[%s138 + $0xaf] sm:$0xff]
      %v3176 = vld [vmem:[%s138 + $0xb7] sm:$0xff]
      %v3177 = vld [vmem:[%s138 + $0xbf] sm:$0xff]
      %v3178 = vld [vmem:[%s138 + $0xc7] sm:$0xff]
      %v3179 = vld [vmem:[%s138 + $0xcf] sm:$0xff]
      %v3180 = vld [vmem:[%s138 + $0xd7] sm:$0xff]
      %v3181 = vld [vmem:[%s138 + $0xdf] sm:$0xff]
      %v3182 = vld [vmem:[%s138 + $0xe7] sm:$0xff]
      %v3183 = vld [vmem:[%s138 + $0xef] sm:$0xff]
      %v3184 = vld [vmem:[%s138 + $0xf7] sm:$0xff]
      %v3185 = vld [vmem:[%s138 + $0xff] sm:$0xff]
      %v3186 = vld [vmem:[%s138 + $0x107] sm:$0xff]
      %v3187 = vld [vmem:[%s138 + $0x10f] sm:$0xff]
      %v3188 = vld [vmem:[%s138 + $0x117] sm:$0xff]
      %v3189 = vld [vmem:[%s138 + $0x11f] sm:$0xff]
      %v3190 = vsel %vm689, %v3158, 0.0
      %v3191 = vsel %vm690, %v3159, 0.0
      %v3192 = vsel %vm691, %v3160, 0.0
      %v3193 = vsel %vm692, %v3161, 0.0
      %v3194 = vsel %vm693, %v3162, 0.0
      %v3195 = vsel %vm694, %v3163, 0.0
      %v3196 = vsel %vm695, %v3164, 0.0
      %v3197 = vsel %vm696, %v3165, 0.0
      %v3198 = vsel %vm697, %v3166, 0.0
      %v3199 = vsel %vm698, %v3167, 0.0
      %v3200 = vsel %vm699, %v3168, 0.0
      %v3201 = vsel %vm700, %v3169, 0.0
      %v3202 = vsel %vm701, %v3170, 0.0
      %v3203 = vsel %vm702, %v3171, 0.0
      %v3204 = vsel %vm703, %v3172, 0.0
      %v3205 = vsel %vm704, %v3173, 0.0
      %v3206 = vsel %vm705, %v3174, 0.0
      %v3207 = vsel %vm706, %v3175, 0.0
      %v3208 = vsel %vm707, %v3176, 0.0
      %v3209 = vsel %vm708, %v3177, 0.0
      %v3210 = vsel %vm709, %v3178, 0.0
      %v3211 = vsel %vm710, %v3179, 0.0
      %v3212 = vsel %vm711, %v3180, 0.0
      %v3213 = vsel %vm712, %v3181, 0.0
      %v3214 = vsel %vm713, %v3182, 0.0
      %v3215 = vsel %vm714, %v3183, 0.0
      %v3216 = vsel %vm715, %v3184, 0.0
      %v3217 = vsel %vm716, %v3185, 0.0
      %v3218 = vsel %vm717, %v3186, 0.0
      %v3219 = vsel %vm718, %v3187, 0.0
      %v3220 = vsel %vm719, %v3188, 0.0
      %v3221 = vsel %vm720, %v3189, 0.0
      %s3222 = scalar_lea.vmem %s1, 24
      %v3223 = vld [vmem:[%s3222] sm:$0xf]
      %v3225 = vsel %vm788, %v3190, 0
      %v3228 = vsel %vm788, %v3191, 0
      %v3231 = vsel %vm788, %v3192, 0
      %v3234 = vsel %vm788, %v3193, 0
      %v3237 = vsel %vm788, %v3194, 0
      %v3240 = vsel %vm788, %v3195, 0
      %v3243 = vsel %vm788, %v3196, 0
      %v3246 = vsel %vm788, %v3197, 0
      %v3249 = vsel %vm788, %v3198, 0
      %v3252 = vsel %vm788, %v3199, 0
      %v3255 = vsel %vm788, %v3200, 0
      %v3258 = vsel %vm788, %v3201, 0
      %v3261 = vsel %vm788, %v3202, 0
      %v3264 = vsel %vm788, %v3203, 0
      %v3267 = vsel %vm788, %v3204, 0
      %v3270 = vsel %vm788, %v3205, 0
      %v3273 = vsel %vm788, %v3206, 0
      %v3276 = vsel %vm788, %v3207, 0
      %v3279 = vsel %vm788, %v3208, 0
      %v3282 = vsel %vm788, %v3209, 0
      %v3285 = vsel %vm788, %v3210, 0
      %v3288 = vsel %vm788, %v3211, 0
      %v3291 = vsel %vm788, %v3212, 0
      %v3294 = vsel %vm788, %v3213, 0
      %v3297 = vsel %vm788, %v3214, 0
      %v3300 = vsel %vm788, %v3215, 0
      %v3303 = vsel %vm788, %v3216, 0
      %v3306 = vsel %vm788, %v3217, 0
      %v3309 = vsel %vm788, %v3218, 0
      %v3312 = vsel %vm788, %v3219, 0
      %v3315 = vsel %vm788, %v3220, 0
      %v3318 = vsel %vm788, %v3221, 0
      %v3321 = vsel %vm885, %v3223, 0
      %3323 = vmatprep.subr.mxu0 0.0
      %3324 = vmatpush1.msra.mxu0 %v3321
      %3325 = vmatprep.subr.mxu0 0.0
      %3326 = vmatpush1.msra.mxu0 0.0
      %3327 = vmatprep.subr.mxu0 0.0
      %3328 = vmatpush1.msra.mxu0 0.0
      %3329 = vmatprep.subr.mxu0 0.0
      %3330 = vmatpush1.msra.mxu0 0.0
      %3331 = vmatprep.subr.mxu0 0.0
      %3332 = vmatpush1.msra.mxu0 0.0
      %3333 = vmatprep.subr.mxu0 0.0
      %3334 = vmatpush1.msra.mxu0 0.0
      %3335 = vmatprep.subr.mxu0 0.0
      %3336 = vmatpush1.msra.mxu0 0.0
      %3337 = vmatprep.subr.mxu0 0.0
      %3338 = vmatpush1.msra.mxu0 0.0
      %3339 = vmatprep.subr.mxu0 0.0
      %3340 = vmatpush1.msra.mxu0 0.0
      %3341 = vmatprep.subr.mxu0 0.0
      %3342 = vmatpush1.msra.mxu0 0.0
      %3343 = vmatprep.subr.mxu0 0.0
      %3344 = vmatpush1.msra.mxu0 0.0
      %3345 = vmatprep.subr.mxu0 0.0
      %3346 = vmatpush1.msra.mxu0 0.0
      %3347 = vmatprep.subr.mxu0 0.0
      %3348 = vmatpush1.msra.mxu0 0.0
      %3349 = vmatprep.subr.mxu0 0.0
      %3350 = vmatpush1.msra.mxu0 0.0
      %3351 = vmatprep.subr.mxu0 0.0
      %3352 = vmatpush1.msra.mxu0 0.0
      %3353 = vmatprep.subr.mxu0 0.0
      %3354 = vmatpush1.msra.mxu0 0.0
      %3355 = vmatprep.subr.mxu0 0.0
      %3356 = vmatpush1.msra.mxu0 0.0
      %3357 = vmatprep.subr.mxu0 0.0
      %3358 = vmatpush1.msra.mxu0 0.0
      %3359 = vmatprep.subr.mxu0 0.0
      %3360 = vmatpush1.msra.mxu0 0.0
      %3361 = vmatprep.subr.mxu0 0.0
      %3362 = vmatpush1.msra.mxu0 0.0
      %3363 = vmatprep.subr.mxu0 0.0
      %3364 = vmatpush1.msra.mxu0 0.0
      %3365 = vmatprep.subr.mxu0 0.0
      %3366 = vmatpush1.msra.mxu0 0.0
      %3367 = vmatprep.subr.mxu0 0.0
      %3368 = vmatpush1.msra.mxu0 0.0
      %3369 = vmatprep.subr.mxu0 0.0
      %3370 = vmatpush1.msra.mxu0 0.0
      %3371 = vmatprep.subr.mxu0 0.0
      %3372 = vmatpush1.msra.mxu0 0.0
      %3373 = vmatprep.subr.mxu0 0.0
      %3374 = vmatpush1.msra.mxu0 0.0
      %3375 = vmatprep.subr.mxu0 0.0
      %3376 = vmatpush1.msra.mxu0 0.0
      %3377 = vmatprep.subr.mxu0 0.0
      %3378 = vmatpush1.msra.mxu0 0.0
      %3379 = vmatprep.subr.mxu0 0.0
      %3380 = vmatpush1.msra.mxu0 0.0
      %3381 = vmatprep.subr.mxu0 0.0
      %3382 = vmatpush1.msra.mxu0 0.0
      %3383 = vmatprep.subr.mxu0 0.0
      %3384 = vmatpush1.msra.mxu0 0.0
      %3385 = vmatprep.subr.mxu0 0.0
      %3386 = vmatpush1.msra.mxu0 0.0
      %3387 = vmatprep.mubr.f32.mxu0 0.0
      %3388 = vmatmul.mubr.f32.gmra.mrb[0].mxu0 %v3225
      %v3389 = vpop.f32.mrb[0].mxu0
      %v3390 = vadd.f32 0.0, %v3389
      %v3391 = vpop.f32.mrb[0].mxu0
      %3392 = vmatprep.mubr.f32.mxu0 0.0
      %3393 = vmatmul.mubr.f32.gmra.mrb[0].mxu0 %v3228
      %v3394 = vpop.f32.mrb[0].mxu0
      %v3395 = vadd.f32 0.0, %v3394
      %v3396 = vpop.f32.mrb[0].mxu0
      %3397 = vmatprep.mubr.f32.mxu0 0.0
      %3398 = vmatmul.mubr.f32.gmra.mrb[0].mxu0 %v3231
      %v3399 = vpop.f32.mrb[0].mxu0
      %v3400 = vadd.f32 0.0, %v3399
      %v3401 = vpop.f32.mrb[0].mxu0
      %3402 = vmatprep.mubr.f32.mxu0 0.0
      %3403 = vmatmul.mubr.f32.gmra.mrb[0].mxu0 %v3234
      %v3404 = vpop.f32.mrb[0].mxu0
      %v3405 = vadd.f32 0.0, %v3404
      %v3406 = vpop.f32.mrb[0].mxu0
      %3407 = vmatprep.mubr.f32.mxu0 0.0
      %3408 = vmatmul.mubr.f32.gmra.mrb[0].mxu0 %v3237
      %v3409 = vpop.f32.mrb[0].mxu0
      %v3410 = vadd.f32 0.0, %v3409
      %v3411 = vpop.f32.mrb[0].mxu0
      %3412 = vmatprep.mubr.f32.mxu0 0.0
      %3413 = vmatmul.mubr.f32.gmra.mrb[0].mxu0 %v3240
      %v3414 = vpop.f32.mrb[0].mxu0
      %v3415 = vadd.f32 0.0, %v3414
      %v3416 = vpop.f32.mrb[0].mxu0
      %3417 = vmatprep.mubr.f32.mxu0 0.0
      %3418 = vmatmul.mubr.f32.gmra.mrb[0].mxu0 %v3243
      %v3419 = vpop.f32.mrb[0].mxu0
      %v3420 = vadd.f32 0.0, %v3419
      %v3421 = vpop.f32.mrb[0].mxu0
      %3422 = vmatprep.mubr.f32.mxu0 0.0
      %3423 = vmatmul.mubr.f32.gmra.mrb[0].mxu0 %v3246
      %v3424 = vpop.f32.mrb[0].mxu0
      %v3425 = vadd.f32 0.0, %v3424
      %v3426 = vpop.f32.mrb[0].mxu0
      %3427 = vmatprep.mubr.f32.mxu0 0.0
      %3428 = vmatmul.mubr.f32.gmra.mrb[0].mxu0 %v3249
      %v3429 = vpop.f32.mrb[0].mxu0
      %v3430 = vadd.f32 0.0, %v3429
      %v3431 = vpop.f32.mrb[0].mxu0
      %3432 = vmatprep.mubr.f32.mxu0 0.0
      %3433 = vmatmul.mubr.f32.gmra.mrb[0].mxu0 %v3252
      %v3434 = vpop.f32.mrb[0].mxu0
      %v3435 = vadd.f32 0.0, %v3434
      %v3436 = vpop.f32.mrb[0].mxu0
      %3437 = vmatprep.mubr.f32.mxu0 0.0
      %3438 = vmatmul.mubr.f32.gmra.mrb[0].mxu0 %v3255
      %v3439 = vpop.f32.mrb[0].mxu0
      %v3440 = vadd.f32 0.0, %v3439
      %v3441 = vpop.f32.mrb[0].mxu0
      %3442 = vmatprep.mubr.f32.mxu0 0.0
      %3443 = vmatmul.mubr.f32.gmra.mrb[0].mxu0 %v3258
      %v3444 = vpop.f32.mrb[0].mxu0
      %v3445 = vadd.f32 0.0, %v3444
      %v3446 = vpop.f32.mrb[0].mxu0
      %3447 = vmatprep.mubr.f32.mxu0 0.0
      %3448 = vmatmul.mubr.f32.gmra.mrb[0].mxu0 %v3261
      %v3449 = vpop.f32.mrb[0].mxu0
      %v3450 = vadd.f32 0.0, %v3449
      %v3451 = vpop.f32.mrb[0].mxu0
      %3452 = vmatprep.mubr.f32.mxu0 0.0
      %3453 = vmatmul.mubr.f32.gmra.mrb[0].mxu0 %v3264
      %v3454 = vpop.f32.mrb[0].mxu0
      %v3455 = vadd.f32 0.0, %v3454
      %v3456 = vpop.f32.mrb[0].mxu0
      %3457 = vmatprep.mubr.f32.mxu0 0.0
      %3458 = vmatmul.mubr.f32.gmra.mrb[0].mxu0 %v3267
      %v3459 = vpop.f32.mrb[0].mxu0
      %v3460 = vadd.f32 0.0, %v3459
      %v3461 = vpop.f32.mrb[0].mxu0
      %3462 = vmatprep.mubr.f32.mxu0 0.0
      %3463 = vmatmul.mubr.f32.gmra.mrb[0].mxu0 %v3270
      %v3464 = vpop.f32.mrb[0].mxu0
      %v3465 = vadd.f32 0.0, %v3464
      %v3466 = vpop.f32.mrb[0].mxu0
      %3467 = vmatprep.mubr.f32.mxu0 0.0
      %3468 = vmatmul.mubr.f32.gmra.mrb[0].mxu0 %v3273
      %v3469 = vpop.f32.mrb[0].mxu0
      %v3470 = vadd.f32 0.0, %v3469
      %v3471 = vpop.f32.mrb[0].mxu0
      %3472 = vmatprep.mubr.f32.mxu0 0.0
      %3473 = vmatmul.mubr.f32.gmra.mrb[0].mxu0 %v3276
      %v3474 = vpop.f32.mrb[0].mxu0
      %v3475 = vadd.f32 0.0, %v3474
      %v3476 = vpop.f32.mrb[0].mxu0
      %3477 = vmatprep.mubr.f32.mxu0 0.0
      %3478 = vmatmul.mubr.f32.gmra.mrb[0].mxu0 %v3279
      %v3479 = vpop.f32.mrb[0].mxu0
      %v3480 = vadd.f32 0.0, %v3479
      %v3481 = vpop.f32.mrb[0].mxu0
      %3482 = vmatprep.mubr.f32.mxu0 0.0
      %3483 = vmatmul.mubr.f32.gmra.mrb[0].mxu0 %v3282
      %v3484 = vpop.f32.mrb[0].mxu0
      %v3485 = vadd.f32 0.0, %v3484
      %v3486 = vpop.f32.mrb[0].mxu0
      %3487 = vmatprep.mubr.f32.mxu0 0.0
      %3488 = vmatmul.mubr.f32.gmra.mrb[0].mxu0 %v3285
      %v3489 = vpop.f32.mrb[0].mxu0
      %v3490 = vadd.f32 0.0, %v3489
      %v3491 = vpop.f32.mrb[0].mxu0
      %3492 = vmatprep.mubr.f32.mxu0 0.0
      %3493 = vmatmul.mubr.f32.gmra.mrb[0].mxu0 %v3288
      %v3494 = vpop.f32.mrb[0].mxu0
      %v3495 = vadd.f32 0.0, %v3494
      %v3496 = vpop.f32.mrb[0].mxu0
      %3497 = vmatprep.mubr.f32.mxu0 0.0
      %3498 = vmatmul.mubr.f32.gmra.mrb[0].mxu0 %v3291
      %v3499 = vpop.f32.mrb[0].mxu0
      %v3500 = vadd.f32 0.0, %v3499
      %v3501 = vpop.f32.mrb[0].mxu0
      %3502 = vmatprep.mubr.f32.mxu0 0.0
      %3503 = vmatmul.mubr.f32.gmra.mrb[0].mxu0 %v3294
      %v3504 = vpop.f32.mrb[0].mxu0
      %v3505 = vadd.f32 0.0, %v3504
      %v3506 = vpop.f32.mrb[0].mxu0
      %3507 = vmatprep.mubr.f32.mxu0 0.0
      %3508 = vmatmul.mubr.f32.gmra.mrb[0].mxu0 %v3297
      %v3509 = vpop.f32.mrb[0].mxu0
      %v3510 = vadd.f32 0.0, %v3509
      %v3511 = vpop.f32.mrb[0].mxu0
      %3512 = vmatprep.mubr.f32.mxu0 0.0
      %3513 = vmatmul.mubr.f32.gmra.mrb[0].mxu0 %v3300
      %v3514 = vpop.f32.mrb[0].mxu0
      %v3515 = vadd.f32 0.0, %v3514
      %v3516 = vpop.f32.mrb[0].mxu0
      %3517 = vmatprep.mubr.f32.mxu0 0.0
      %3518 = vmatmul.mubr.f32.gmra.mrb[0].mxu0 %v3303
      %v3519 = vpop.f32.mrb[0].mxu0
      %v3520 = vadd.f32 0.0, %v3519
      %v3521 = vpop.f32.mrb[0].mxu0
      %3522 = vmatprep.mubr.f32.mxu0 0.0
      %3523 = vmatmul.mubr.f32.gmra.mrb[0].mxu0 %v3306
      %v3524 = vpop.f32.mrb[0].mxu0
      %v3525 = vadd.f32 0.0, %v3524
      %v3526 = vpop.f32.mrb[0].mxu0
      %3527 = vmatprep.mubr.f32.mxu0 0.0
      %3528 = vmatmul.mubr.f32.gmra.mrb[0].mxu0 %v3309
      %v3529 = vpop.f32.mrb[0].mxu0
      %v3530 = vadd.f32 0.0, %v3529
      %v3531 = vpop.f32.mrb[0].mxu0
      %3532 = vmatprep.mubr.f32.mxu0 0.0
      %3533 = vmatmul.mubr.f32.gmra.mrb[0].mxu0 %v3312
      %v3534 = vpop.f32.mrb[0].mxu0
      %v3535 = vadd.f32 0.0, %v3534
      %v3536 = vpop.f32.mrb[0].mxu0
      %3537 = vmatprep.mubr.f32.mxu0 0.0
      %3538 = vmatmul.mubr.f32.gmra.mrb[0].mxu0 %v3315
      %v3539 = vpop.f32.mrb[0].mxu0
      %v3540 = vadd.f32 0.0, %v3539
      %v3541 = vpop.f32.mrb[0].mxu0
      %3542 = vmatprep.mubr.f32.mxu0 0.0
      %3543 = vmatmul.mubr.f32.gmra.mrb[0].mxu0 %v3318
      %v3544 = vpop.f32.mrb[0].mxu0
      %v3545 = vadd.f32 0.0, %v3544
      %v3546 = vpop.f32.mrb[0].mxu0
      %3547 = vdwg.mxu0
      %v3548 = vadd.f32 %v3126, %v3390
      %v3549 = vadd.f32 %v3127, %v3395
      %v3550 = vadd.f32 %v3128, %v3400
      %v3551 = vadd.f32 %v3129, %v3405
      %v3552 = vadd.f32 %v3130, %v3410
      %v3553 = vadd.f32 %v3131, %v3415
      %v3554 = vadd.f32 %v3132, %v3420
      %v3555 = vadd.f32 %v3133, %v3425
      %v3556 = vadd.f32 %v3134, %v3430
      %v3557 = vadd.f32 %v3135, %v3435
      %v3558 = vadd.f32 %v3136, %v3440
      %v3559 = vadd.f32 %v3137, %v3445
      %v3560 = vadd.f32 %v3138, %v3450
      %v3561 = vadd.f32 %v3139, %v3455
      %v3562 = vadd.f32 %v3140, %v3460
      %v3563 = vadd.f32 %v3141, %v3465
      %v3564 = vadd.f32 %v3142, %v3470
      %v3565 = vadd.f32 %v3143, %v3475
      %v3566 = vadd.f32 %v3144, %v3480
      %v3567 = vadd.f32 %v3145, %v3485
      %v3568 = vadd.f32 %v3146, %v3490
      %v3569 = vadd.f32 %v3147, %v3495
      %v3570 = vadd.f32 %v3148, %v3500
      %v3571 = vadd.f32 %v3149, %v3505
      %v3572 = vadd.f32 %v3150, %v3510
      %v3573 = vadd.f32 %v3151, %v3515
      %v3574 = vadd.f32 %v3152, %v3520
      %v3575 = vadd.f32 %v3153, %v3525
      %v3576 = vadd.f32 %v3154, %v3530
      %v3577 = vadd.f32 %v3155, %v3535
      %v3578 = vadd.f32 %v3156, %v3540
      %v3579 = vadd.f32 %v3157, %v3545
      %v3580 = vld [vmem:[%s138 + $0x28] sm:$0xff]
      %v3581 = vld [vmem:[%s138 + $0x30] sm:$0xff]
      %v3582 = vld [vmem:[%s138 + $0x38] sm:$0xff]
      %v3583 = vld [vmem:[%s138 + $0x40] sm:$0xff]
      %v3584 = vld [vmem:[%s138 + $0x48] sm:$0xff]
      %v3585 = vld [vmem:[%s138 + $0x50] sm:$0xff]
      %v3586 = vld [vmem:[%s138 + $0x58] sm:$0xff]
      %v3587 = vld [vmem:[%s138 + $0x60] sm:$0xff]
      %v3588 = vld [vmem:[%s138 + $0x68] sm:$0xff]
      %v3589 = vld [vmem:[%s138 + $0x70] sm:$0xff]
      %v3590 = vld [vmem:[%s138 + $0x78] sm:$0xff]
      %v3591 = vld [vmem:[%s138 + $0x80] sm:$0xff]
      %v3592 = vld [vmem:[%s138 + $0x88] sm:$0xff]
      %v3593 = vld [vmem:[%s138 + $0x90] sm:$0xff]
      %v3594 = vld [vmem:[%s138 + $0x98] sm:$0xff]
      %v3595 = vld [vmem:[%s138 + $0xa0] sm:$0xff]
      %v3596 = vld [vmem:[%s138 + $0xa8] sm:$0xff]
      %v3597 = vld [vmem:[%s138 + $0xb0] sm:$0xff]
      %v3598 = vld [vmem:[%s138 + $0xb8] sm:$0xff]
      %v3599 = vld [vmem:[%s138 + $0xc0] sm:$0xff]
      %v3600 = vld [vmem:[%s138 + $0xc8] sm:$0xff]
      %v3601 = vld [vmem:[%s138 + $0xd0] sm:$0xff]
      %v3602 = vld [vmem:[%s138 + $0xd8] sm:$0xff]
      %v3603 = vld [vmem:[%s138 + $0xe0] sm:$0xff]
      %v3604 = vld [vmem:[%s138 + $0xe8] sm:$0xff]
      %v3605 = vld [vmem:[%s138 + $0xf0] sm:$0xff]
      %v3606 = vld [vmem:[%s138 + $0xf8] sm:$0xff]
      %v3607 = vld [vmem:[%s138 + $0x100] sm:$0xff]
      %v3608 = vld [vmem:[%s138 + $0x108] sm:$0xff]
      %v3609 = vld [vmem:[%s138 + $0x110] sm:$0xff]
      %v3610 = vld [vmem:[%s138 + $0x118] sm:$0xff]
      %v3611 = vld [vmem:[%s138 + $0x120] sm:$0xff]
      %s3612 = scalar_lea.vmem %s1, 28
      %v3613 = vld [vmem:[%s3612] sm:$0xf]
      %v3615 = vsel %vm788, %v3580, 0
      %v3618 = vsel %vm788, %v3581, 0
      %v3621 = vsel %vm788, %v3582, 0
      %v3624 = vsel %vm788, %v3583, 0
      %v3627 = vsel %vm788, %v3584, 0
      %v3630 = vsel %vm788, %v3585, 0
      %v3633 = vsel %vm788, %v3586, 0
      %v3636 = vsel %vm788, %v3587, 0
      %v3639 = vsel %vm788, %v3588, 0
      %v3642 = vsel %vm788, %v3589, 0
      %v3645 = vsel %vm788, %v3590, 0
      %v3648 = vsel %vm788, %v3591, 0
      %v3651 = vsel %vm788, %v3592, 0
      %v3654 = vsel %vm788, %v3593, 0
      %v3657 = vsel %vm788, %v3594, 0
      %v3660 = vsel %vm788, %v3595, 0
      %v3663 = vsel %vm788, %v3596, 0
      %v3666 = vsel %vm788, %v3597, 0
      %v3669 = vsel %vm788, %v3598, 0
      %v3672 = vsel %vm788, %v3599, 0
      %v3675 = vsel %vm788, %v3600, 0
      %v3678 = vsel %vm788, %v3601, 0
      %v3681 = vsel %vm788, %v3602, 0
      %v3684 = vsel %vm788, %v3603, 0
      %v3687 = vsel %vm788, %v3604, 0
      %v3690 = vsel %vm788, %v3605, 0
      %v3693 = vsel %vm788, %v3606, 0
      %v3696 = vsel %vm788, %v3607, 0
      %v3699 = vsel %vm788, %v3608, 0
      %v3702 = vsel %vm788, %v3609, 0
      %v3705 = vsel %vm788, %v3610, 0
      %v3708 = vsel %vm788, %v3611, 0
      %v3711 = vsel %vm885, %v3613, 0
      %3713 = vmatprep.subr.mxu0 0.0
      %3714 = vmatpush1.msra.mxu0 %v3711
      %3715 = vmatprep.subr.mxu0 0.0
      %3716 = vmatpush1.msra.mxu0 0.0
      %3717 = vmatprep.subr.mxu0 0.0
      %3718 = vmatpush1.msra.mxu0 0.0
      %3719 = vmatprep.subr.mxu0 0.0
      %3720 = vmatpush1.msra.mxu0 0.0
      %3721 = vmatprep.subr.mxu0 0.0
      %3722 = vmatpush1.msra.mxu0 0.0
      %3723 = vmatprep.subr.mxu0 0.0
      %3724 = vmatpush1.msra.mxu0 0.0
      %3725 = vmatprep.subr.mxu0 0.0
      %3726 = vmatpush1.msra.mxu0 0.0
      %3727 = vmatprep.subr.mxu0 0.0
      %3728 = vmatpush1.msra.mxu0 0.0
      %3729 = vmatprep.subr.mxu0 0.0
      %3730 = vmatpush1.msra.mxu0 0.0
      %3731 = vmatprep.subr.mxu0 0.0
      %3732 = vmatpush1.msra.mxu0 0.0
      %3733 = vmatprep.subr.mxu0 0.0
      %3734 = vmatpush1.msra.mxu0 0.0
      %3735 = vmatprep.subr.mxu0 0.0
      %3736 = vmatpush1.msra.mxu0 0.0
      %3737 = vmatprep.subr.mxu0 0.0
      %3738 = vmatpush1.msra.mxu0 0.0
      %3739 = vmatprep.subr.mxu0 0.0
      %3740 = vmatpush1.msra.mxu0 0.0
      %3741 = vmatprep.subr.mxu0 0.0
      %3742 = vmatpush1.msra.mxu0 0.0
      %3743 = vmatprep.subr.mxu0 0.0
      %3744 = vmatpush1.msra.mxu0 0.0
      %3745 = vmatprep.subr.mxu0 0.0
      %3746 = vmatpush1.msra.mxu0 0.0
      %3747 = vmatprep.subr.mxu0 0.0
      %3748 = vmatpush1.msra.mxu0 0.0
      %3749 = vmatprep.subr.mxu0 0.0
      %3750 = vmatpush1.msra.mxu0 0.0
      %3751 = vmatprep.subr.mxu0 0.0
      %3752 = vmatpush1.msra.mxu0 0.0
      %3753 = vmatprep.subr.mxu0 0.0
      %3754 = vmatpush1.msra.mxu0 0.0
      %3755 = vmatprep.subr.mxu0 0.0
      %3756 = vmatpush1.msra.mxu0 0.0
      %3757 = vmatprep.subr.mxu0 0.0
      %3758 = vmatpush1.msra.mxu0 0.0
      %3759 = vmatprep.subr.mxu0 0.0
      %3760 = vmatpush1.msra.mxu0 0.0
      %3761 = vmatprep.subr.mxu0 0.0
      %3762 = vmatpush1.msra.mxu0 0.0
      %3763 = vmatprep.subr.mxu0 0.0
      %3764 = vmatpush1.msra.mxu0 0.0
      %3765 = vmatprep.subr.mxu0 0.0
      %3766 = vmatpush1.msra.mxu0 0.0
      %3767 = vmatprep.subr.mxu0 0.0
      %3768 = vmatpush1.msra.mxu0 0.0
      %3769 = vmatprep.subr.mxu0 0.0
      %3770 = vmatpush1.msra.mxu0 0.0
      %3771 = vmatprep.subr.mxu0 0.0
      %3772 = vmatpush1.msra.mxu0 0.0
      %3773 = vmatprep.subr.mxu0 0.0
      %3774 = vmatpush1.msra.mxu0 0.0
      %3775 = vmatprep.subr.mxu0 0.0
      %3776 = vmatpush1.msra.mxu0 0.0
      %3777 = vmatprep.mubr.f32.mxu0 0.0
      %3778 = vmatmul.mubr.f32.gmra.mrb[0].mxu0 %v3615
      %v3779 = vpop.f32.mrb[0].mxu0
      %v3780 = vadd.f32 0.0, %v3779
      %v3781 = vpop.f32.mrb[0].mxu0
      %3782 = vmatprep.mubr.f32.mxu0 0.0
      %3783 = vmatmul.mubr.f32.gmra.mrb[0].mxu0 %v3618
      %v3784 = vpop.f32.mrb[0].mxu0
      %v3785 = vadd.f32 0.0, %v3784
      %v3786 = vpop.f32.mrb[0].mxu0
      %3787 = vmatprep.mubr.f32.mxu0 0.0
      %3788 = vmatmul.mubr.f32.gmra.mrb[0].mxu0 %v3621
      %v3789 = vpop.f32.mrb[0].mxu0
      %v3790 = vadd.f32 0.0, %v3789
      %v3791 = vpop.f32.mrb[0].mxu0
      %3792 = vmatprep.mubr.f32.mxu0 0.0
      %3793 = vmatmul.mubr.f32.gmra.mrb[0].mxu0 %v3624
      %v3794 = vpop.f32.mrb[0].mxu0
      %v3795 = vadd.f32 0.0, %v3794
      %v3796 = vpop.f32.mrb[0].mxu0
      %3797 = vmatprep.mubr.f32.mxu0 0.0
      %3798 = vmatmul.mubr.f32.gmra.mrb[0].mxu0 %v3627
      %v3799 = vpop.f32.mrb[0].mxu0
      %v3800 = vadd.f32 0.0, %v3799
      %v3801 = vpop.f32.mrb[0].mxu0
      %3802 = vmatprep.mubr.f32.mxu0 0.0
      %3803 = vmatmul.mubr.f32.gmra.mrb[0].mxu0 %v3630
      %v3804 = vpop.f32.mrb[0].mxu0
      %v3805 = vadd.f32 0.0, %v3804
      %v3806 = vpop.f32.mrb[0].mxu0
      %3807 = vmatprep.mubr.f32.mxu0 0.0
      %3808 = vmatmul.mubr.f32.gmra.mrb[0].mxu0 %v3633
      %v3809 = vpop.f32.mrb[0].mxu0
      %v3810 = vadd.f32 0.0, %v3809
      %v3811 = vpop.f32.mrb[0].mxu0
      %3812 = vmatprep.mubr.f32.mxu0 0.0
      %3813 = vmatmul.mubr.f32.gmra.mrb[0].mxu0 %v3636
      %v3814 = vpop.f32.mrb[0].mxu0
      %v3815 = vadd.f32 0.0, %v3814
      %v3816 = vpop.f32.mrb[0].mxu0
      %3817 = vmatprep.mubr.f32.mxu0 0.0
      %3818 = vmatmul.mubr.f32.gmra.mrb[0].mxu0 %v3639
      %v3819 = vpop.f32.mrb[0].mxu0
      %v3820 = vadd.f32 0.0, %v3819
      %v3821 = vpop.f32.mrb[0].mxu0
      %3822 = vmatprep.mubr.f32.mxu0 0.0
      %3823 = vmatmul.mubr.f32.gmra.mrb[0].mxu0 %v3642
      %v3824 = vpop.f32.mrb[0].mxu0
      %v3825 = vadd.f32 0.0, %v3824
      %v3826 = vpop.f32.mrb[0].mxu0
      %3827 = vmatprep.mubr.f32.mxu0 0.0
      %3828 = vmatmul.mubr.f32.gmra.mrb[0].mxu0 %v3645
      %v3829 = vpop.f32.mrb[0].mxu0
      %v3830 = vadd.f32 0.0, %v3829
      %v3831 = vpop.f32.mrb[0].mxu0
      %3832 = vmatprep.mubr.f32.mxu0 0.0
      %3833 = vmatmul.mubr.f32.gmra.mrb[0].mxu0 %v3648
      %v3834 = vpop.f32.mrb[0].mxu0
      %v3835 = vadd.f32 0.0, %v3834
      %v3836 = vpop.f32.mrb[0].mxu0
      %3837 = vmatprep.mubr.f32.mxu0 0.0
      %3838 = vmatmul.mubr.f32.gmra.mrb[0].mxu0 %v3651
      %v3839 = vpop.f32.mrb[0].mxu0
      %v3840 = vadd.f32 0.0, %v3839
      %v3841 = vpop.f32.mrb[0].mxu0
      %3842 = vmatprep.mubr.f32.mxu0 0.0
      %3843 = vmatmul.mubr.f32.gmra.mrb[0].mxu0 %v3654
      %v3844 = vpop.f32.mrb[0].mxu0
      %v3845 = vadd.f32 0.0, %v3844
      %v3846 = vpop.f32.mrb[0].mxu0
      %3847 = vmatprep.mubr.f32.mxu0 0.0
      %3848 = vmatmul.mubr.f32.gmra.mrb[0].mxu0 %v3657
      %v3849 = vpop.f32.mrb[0].mxu0
      %v3850 = vadd.f32 0.0, %v3849
      %v3851 = vpop.f32.mrb[0].mxu0
      %3852 = vmatprep.mubr.f32.mxu0 0.0
      %3853 = vmatmul.mubr.f32.gmra.mrb[0].mxu0 %v3660
      %v3854 = vpop.f32.mrb[0].mxu0
      %v3855 = vadd.f32 0.0, %v3854
      %v3856 = vpop.f32.mrb[0].mxu0
      %3857 = vmatprep.mubr.f32.mxu0 0.0
      %3858 = vmatmul.mubr.f32.gmra.mrb[0].mxu0 %v3663
      %v3859 = vpop.f32.mrb[0].mxu0
      %v3860 = vadd.f32 0.0, %v3859
      %v3861 = vpop.f32.mrb[0].mxu0
      %3862 = vmatprep.mubr.f32.mxu0 0.0
      %3863 = vmatmul.mubr.f32.gmra.mrb[0].mxu0 %v3666
      %v3864 = vpop.f32.mrb[0].mxu0
      %v3865 = vadd.f32 0.0, %v3864
      %v3866 = vpop.f32.mrb[0].mxu0
      %3867 = vmatprep.mubr.f32.mxu0 0.0
      %3868 = vmatmul.mubr.f32.gmra.mrb[0].mxu0 %v3669
      %v3869 = vpop.f32.mrb[0].mxu0
      %v3870 = vadd.f32 0.0, %v3869
      %v3871 = vpop.f32.mrb[0].mxu0
      %3872 = vmatprep.mubr.f32.mxu0 0.0
      %3873 = vmatmul.mubr.f32.gmra.mrb[0].mxu0 %v3672
      %v3874 = vpop.f32.mrb[0].mxu0
      %v3875 = vadd.f32 0.0, %v3874
      %v3876 = vpop.f32.mrb[0].mxu0
      %3877 = vmatprep.mubr.f32.mxu0 0.0
      %3878 = vmatmul.mubr.f32.gmra.mrb[0].mxu0 %v3675
      %v3879 = vpop.f32.mrb[0].mxu0
      %v3880 = vadd.f32 0.0, %v3879
      %v3881 = vpop.f32.mrb[0].mxu0
      %3882 = vmatprep.mubr.f32.mxu0 0.0
      %3883 = vmatmul.mubr.f32.gmra.mrb[0].mxu0 %v3678
      %v3884 = vpop.f32.mrb[0].mxu0
      %v3885 = vadd.f32 0.0, %v3884
      %v3886 = vpop.f32.mrb[0].mxu0
      %3887 = vmatprep.mubr.f32.mxu0 0.0
      %3888 = vmatmul.mubr.f32.gmra.mrb[0].mxu0 %v3681
      %v3889 = vpop.f32.mrb[0].mxu0
      %v3890 = vadd.f32 0.0, %v3889
      %v3891 = vpop.f32.mrb[0].mxu0
      %3892 = vmatprep.mubr.f32.mxu0 0.0
      %3893 = vmatmul.mubr.f32.gmra.mrb[0].mxu0 %v3684
      %v3894 = vpop.f32.mrb[0].mxu0
      %v3895 = vadd.f32 0.0, %v3894
      %v3896 = vpop.f32.mrb[0].mxu0
      %3897 = vmatprep.mubr.f32.mxu0 0.0
      %3898 = vmatmul.mubr.f32.gmra.mrb[0].mxu0 %v3687
      %v3899 = vpop.f32.mrb[0].mxu0
      %v3900 = vadd.f32 0.0, %v3899
      %v3901 = vpop.f32.mrb[0].mxu0
      %3902 = vmatprep.mubr.f32.mxu0 0.0
      %3903 = vmatmul.mubr.f32.gmra.mrb[0].mxu0 %v3690
      %v3904 = vpop.f32.mrb[0].mxu0
      %v3905 = vadd.f32 0.0, %v3904
      %v3906 = vpop.f32.mrb[0].mxu0
      %3907 = vmatprep.mubr.f32.mxu0 0.0
      %3908 = vmatmul.mubr.f32.gmra.mrb[0].mxu0 %v3693
      %v3909 = vpop.f32.mrb[0].mxu0
      %v3910 = vadd.f32 0.0, %v3909
      %v3911 = vpop.f32.mrb[0].mxu0
      %3912 = vmatprep.mubr.f32.mxu0 0.0
      %3913 = vmatmul.mubr.f32.gmra.mrb[0].mxu0 %v3696
      %v3914 = vpop.f32.mrb[0].mxu0
      %v3915 = vadd.f32 0.0, %v3914
      %v3916 = vpop.f32.mrb[0].mxu0
      %3917 = vmatprep.mubr.f32.mxu0 0.0
      %3918 = vmatmul.mubr.f32.gmra.mrb[0].mxu0 %v3699
      %v3919 = vpop.f32.mrb[0].mxu0
      %v3920 = vadd.f32 0.0, %v3919
      %v3921 = vpop.f32.mrb[0].mxu0
      %3922 = vmatprep.mubr.f32.mxu0 0.0
      %3923 = vmatmul.mubr.f32.gmra.mrb[0].mxu0 %v3702
      %v3924 = vpop.f32.mrb[0].mxu0
      %v3925 = vadd.f32 0.0, %v3924
      %v3926 = vpop.f32.mrb[0].mxu0
      %3927 = vmatprep.mubr.f32.mxu0 0.0
      %3928 = vmatmul.mubr.f32.gmra.mrb[0].mxu0 %v3705
      %v3929 = vpop.f32.mrb[0].mxu0
      %v3930 = vadd.f32 0.0, %v3929
      %v3931 = vpop.f32.mrb[0].mxu0
      %3932 = vmatprep.mubr.f32.mxu0 0.0
      %3933 = vmatmul.mubr.f32.gmra.mrb[0].mxu0 %v3708
      %v3934 = vpop.f32.mrb[0].mxu0
      %v3935 = vadd.f32 0.0, %v3934
      %v3936 = vpop.f32.mrb[0].mxu0
      %3937 = vdwg.mxu0
      %v3938 = vadd.f32 %v3548, %v3780
      %v3939 = vadd.f32 %v3549, %v3785
      %v3940 = vadd.f32 %v3550, %v3790
      %v3941 = vadd.f32 %v3551, %v3795
      %v3942 = vadd.f32 %v3552, %v3800
      %v3943 = vadd.f32 %v3553, %v3805
      %v3944 = vadd.f32 %v3554, %v3810
      %v3945 = vadd.f32 %v3555, %v3815
      %v3946 = vadd.f32 %v3556, %v3820
      %v3947 = vadd.f32 %v3557, %v3825
      %v3948 = vadd.f32 %v3558, %v3830
      %v3949 = vadd.f32 %v3559, %v3835
      %v3950 = vadd.f32 %v3560, %v3840
      %v3951 = vadd.f32 %v3561, %v3845
      %v3952 = vadd.f32 %v3562, %v3850
      %v3953 = vadd.f32 %v3563, %v3855
      %v3954 = vadd.f32 %v3564, %v3860
      %v3955 = vadd.f32 %v3565, %v3865
      %v3956 = vadd.f32 %v3566, %v3870
      %v3957 = vadd.f32 %v3567, %v3875
      %v3958 = vadd.f32 %v3568, %v3880
      %v3959 = vadd.f32 %v3569, %v3885
      %v3960 = vadd.f32 %v3570, %v3890
      %v3961 = vadd.f32 %v3571, %v3895
      %v3962 = vadd.f32 %v3572, %v3900
      %v3963 = vadd.f32 %v3573, %v3905
      %v3964 = vadd.f32 %v3574, %v3910
      %v3965 = vadd.f32 %v3575, %v3915
      %v3966 = vadd.f32 %v3576, %v3920
      %v3967 = vadd.f32 %v3577, %v3925
      %v3968 = vadd.f32 %v3578, %v3930
      %v3969 = vadd.f32 %v3579, %v3935
      %v3970 = vld [vmem:[%s138 + $0x29] sm:$0xff]
      %v3971 = vld [vmem:[%s138 + $0x31] sm:$0xff]
      %v3972 = vld [vmem:[%s138 + $0x39] sm:$0xff]
      %v3973 = vld [vmem:[%s138 + $0x41] sm:$0xff]
      %v3974 = vld [vmem:[%s138 + $0x49] sm:$0xff]
      %v3975 = vld [vmem:[%s138 + $0x51] sm:$0xff]
      %v3976 = vld [vmem:[%s138 + $0x59] sm:$0xff]
      %v3977 = vld [vmem:[%s138 + $0x61] sm:$0xff]
      %v3978 = vld [vmem:[%s138 + $0x69] sm:$0xff]
      %v3979 = vld [vmem:[%s138 + $0x71] sm:$0xff]
      %v3980 = vld [vmem:[%s138 + $0x79] sm:$0xff]
      %v3981 = vld [vmem:[%s138 + $0x81] sm:$0xff]
      %v3982 = vld [vmem:[%s138 + $0x89] sm:$0xff]
      %v3983 = vld [vmem:[%s138 + $0x91] sm:$0xff]
      %v3984 = vld [vmem:[%s138 + $0x99] sm:$0xff]
      %v3985 = vld [vmem:[%s138 + $0xa1] sm:$0xff]
      %v3986 = vld [vmem:[%s138 + $0xa9] sm:$0xff]
      %v3987 = vld [vmem:[%s138 + $0xb1] sm:$0xff]
      %v3988 = vld [vmem:[%s138 + $0xb9] sm:$0xff]
      %v3989 = vld [vmem:[%s138 + $0xc1] sm:$0xff]
      %v3990 = vld [vmem:[%s138 + $0xc9] sm:$0xff]
      %v3991 = vld [vmem:[%s138 + $0xd1] sm:$0xff]
      %v3992 = vld [vmem:[%s138 + $0xd9] sm:$0xff]
      %v3993 = vld [vmem:[%s138 + $0xe1] sm:$0xff]
      %v3994 = vld [vmem:[%s138 + $0xe9] sm:$0xff]
      %v3995 = vld [vmem:[%s138 + $0xf1] sm:$0xff]
      %v3996 = vld [vmem:[%s138 + $0xf9] sm:$0xff]
      %v3997 = vld [vmem:[%s138 + $0x101] sm:$0xff]
      %v3998 = vld [vmem:[%s138 + $0x109] sm:$0xff]
      %v3999 = vld [vmem:[%s138 + $0x111] sm:$0xff]
      %v4000 = vld [vmem:[%s138 + $0x119] sm:$0xff]
      %v4001 = vld [vmem:[%s138 + $0x121] sm:$0xff]
      %v4002 = vsel %vm1502, %v3970, 0.0
      %v4003 = vsel %vm1503, %v3971, 0.0
      %v4004 = vsel %vm1504, %v3972, 0.0
      %v4005 = vsel %vm1505, %v3973, 0.0
      %v4006 = vsel %vm1506, %v3974, 0.0
      %v4007 = vsel %vm1507, %v3975, 0.0
      %v4008 = vsel %vm1508, %v3976, 0.0
      %v4009 = vsel %vm1509, %v3977, 0.0
      %v4010 = vsel %vm1510, %v3978, 0.0
      %v4011 = vsel %vm1511, %v3979, 0.0
      %v4012 = vsel %vm1512, %v3980, 0.0
      %v4013 = vsel %vm1513, %v3981, 0.0
      %v4014 = vsel %vm1514, %v3982, 0.0
      %v4015 = vsel %vm1515, %v3983, 0.0
      %v4016 = vsel %vm1516, %v3984, 0.0
      %v4017 = vsel %vm1517, %v3985, 0.0
      %v4018 = vsel %vm1518, %v3986, 0.0
      %v4019 = vsel %vm1519, %v3987, 0.0
      %v4020 = vsel %vm1520, %v3988, 0.0
      %v4021 = vsel %vm1521, %v3989, 0.0
      %v4022 = vsel %vm1522, %v3990, 0.0
      %v4023 = vsel %vm1523, %v3991, 0.0
      %v4024 = vsel %vm1524, %v3992, 0.0
      %v4025 = vsel %vm1525, %v3993, 0.0
      %v4026 = vsel %vm1526, %v3994, 0.0
      %v4027 = vsel %vm1527, %v3995, 0.0
      %v4028 = vsel %vm1528, %v3996, 0.0
      %v4029 = vsel %vm1529, %v3997, 0.0
      %v4030 = vsel %vm1530, %v3998, 0.0
      %v4031 = vsel %vm1531, %v3999, 0.0
      %v4032 = vsel %vm1532, %v4000, 0.0
      %v4033 = vsel %vm1533, %v4001, 0.0
      %s4034 = scalar_lea.vmem %s1, 32
      %v4035 = vld [vmem:[%s4034] sm:$0xf]
      %v4037 = vsel %vm788, %v4002, 0
      %v4040 = vsel %vm788, %v4003, 0
      %v4043 = vsel %vm788, %v4004, 0
      %v4046 = vsel %vm788, %v4005, 0
      %v4049 = vsel %vm788, %v4006, 0
      %v4052 = vsel %vm788, %v4007, 0
      %v4055 = vsel %vm788, %v4008, 0
      %v4058 = vsel %vm788, %v4009, 0
      %v4061 = vsel %vm788, %v4010, 0
      %v4064 = vsel %vm788, %v4011, 0
      %v4067 = vsel %vm788, %v4012, 0
      %v4070 = vsel %vm788, %v4013, 0
      %v4073 = vsel %vm788, %v4014, 0
      %v4076 = vsel %vm788, %v4015, 0
      %v4079 = vsel %vm788, %v4016, 0
      %v4082 = vsel %vm788, %v4017, 0
      %v4085 = vsel %vm788, %v4018, 0
      %v4088 = vsel %vm788, %v4019, 0
      %v4091 = vsel %vm788, %v4020, 0
      %v4094 = vsel %vm788, %v4021, 0
      %v4097 = vsel %vm788, %v4022, 0
      %v4100 = vsel %vm788, %v4023, 0
      %v4103 = vsel %vm788, %v4024, 0
      %v4106 = vsel %vm788, %v4025, 0
      %v4109 = vsel %vm788, %v4026, 0
      %v4112 = vsel %vm788, %v4027, 0
      %v4115 = vsel %vm788, %v4028, 0
      %v4118 = vsel %vm788, %v4029, 0
      %v4121 = vsel %vm788, %v4030, 0
      %v4124 = vsel %vm788, %v4031, 0
      %v4127 = vsel %vm788, %v4032, 0
      %v4130 = vsel %vm788, %v4033, 0
      %v4133 = vsel %vm885, %v4035, 0
      %4135 = vmatprep.subr.mxu0 0.0
      %4136 = vmatpush1.msra.mxu0 %v4133
      %4137 = vmatprep.subr.mxu0 0.0
      %4138 = vmatpush1.msra.mxu0 0.0
      %4139 = vmatprep.subr.mxu0 0.0
      %4140 = vmatpush1.msra.mxu0 0.0
      %4141 = vmatprep.subr.mxu0 0.0
      %4142 = vmatpush1.msra.mxu0 0.0
      %4143 = vmatprep.subr.mxu0 0.0
      %4144 = vmatpush1.msra.mxu0 0.0
      %4145 = vmatprep.subr.mxu0 0.0
      %4146 = vmatpush1.msra.mxu0 0.0
      %4147 = vmatprep.subr.mxu0 0.0
      %4148 = vmatpush1.msra.mxu0 0.0
      %4149 = vmatprep.subr.mxu0 0.0
      %4150 = vmatpush1.msra.mxu0 0.0
      %4151 = vmatprep.subr.mxu0 0.0
      %4152 = vmatpush1.msra.mxu0 0.0
      %4153 = vmatprep.subr.mxu0 0.0
      %4154 = vmatpush1.msra.mxu0 0.0
      %4155 = vmatprep.subr.mxu0 0.0
      %4156 = vmatpush1.msra.mxu0 0.0
      %4157 = vmatprep.subr.mxu0 0.0
      %4158 = vmatpush1.msra.mxu0 0.0
      %4159 = vmatprep.subr.mxu0 0.0
      %4160 = vmatpush1.msra.mxu0 0.0
      %4161 = vmatprep.subr.mxu0 0.0
      %4162 = vmatpush1.msra.mxu0 0.0
      %4163 = vmatprep.subr.mxu0 0.0
      %4164 = vmatpush1.msra.mxu0 0.0
      %4165 = vmatprep.subr.mxu0 0.0
      %4166 = vmatpush1.msra.mxu0 0.0
      %4167 = vmatprep.subr.mxu0 0.0
      %4168 = vmatpush1.msra.mxu0 0.0
      %4169 = vmatprep.subr.mxu0 0.0
      %4170 = vmatpush1.msra.mxu0 0.0
      %4171 = vmatprep.subr.mxu0 0.0
      %4172 = vmatpush1.msra.mxu0 0.0
      %4173 = vmatprep.subr.mxu0 0.0
      %4174 = vmatpush1.msra.mxu0 0.0
      %4175 = vmatprep.subr.mxu0 0.0
      %4176 = vmatpush1.msra.mxu0 0.0
      %4177 = vmatprep.subr.mxu0 0.0
      %4178 = vmatpush1.msra.mxu0 0.0
      %4179 = vmatprep.subr.mxu0 0.0
      %4180 = vmatpush1.msra.mxu0 0.0
      %4181 = vmatprep.subr.mxu0 0.0
      %4182 = vmatpush1.msra.mxu0 0.0
      %4183 = vmatprep.subr.mxu0 0.0
      %4184 = vmatpush1.msra.mxu0 0.0
      %4185 = vmatprep.subr.mxu0 0.0
      %4186 = vmatpush1.msra.mxu0 0.0
      %4187 = vmatprep.subr.mxu0 0.0
      %4188 = vmatpush1.msra.mxu0 0.0
      %4189 = vmatprep.subr.mxu0 0.0
      %4190 = vmatpush1.msra.mxu0 0.0
      %4191 = vmatprep.subr.mxu0 0.0
      %4192 = vmatpush1.msra.mxu0 0.0
      %4193 = vmatprep.subr.mxu0 0.0
      %4194 = vmatpush1.msra.mxu0 0.0
      %4195 = vmatprep.subr.mxu0 0.0
      %4196 = vmatpush1.msra.mxu0 0.0
      %4197 = vmatprep.subr.mxu0 0.0
      %4198 = vmatpush1.msra.mxu0 0.0
      %4199 = vmatprep.mubr.f32.mxu0 0.0
      %4200 = vmatmul.mubr.f32.gmra.mrb[0].mxu0 %v4037
      %v4201 = vpop.f32.mrb[0].mxu0
      %v4202 = vadd.f32 0.0, %v4201
      %v4203 = vpop.f32.mrb[0].mxu0
      %4204 = vmatprep.mubr.f32.mxu0 0.0
      %4205 = vmatmul.mubr.f32.gmra.mrb[0].mxu0 %v4040
      %v4206 = vpop.f32.mrb[0].mxu0
      %v4207 = vadd.f32 0.0, %v4206
      %v4208 = vpop.f32.mrb[0].mxu0
      %4209 = vmatprep.mubr.f32.mxu0 0.0
      %4210 = vmatmul.mubr.f32.gmra.mrb[0].mxu0 %v4043
      %v4211 = vpop.f32.mrb[0].mxu0
      %v4212 = vadd.f32 0.0, %v4211
      %v4213 = vpop.f32.mrb[0].mxu0
      %4214 = vmatprep.mubr.f32.mxu0 0.0
      %4215 = vmatmul.mubr.f32.gmra.mrb[0].mxu0 %v4046
      %v4216 = vpop.f32.mrb[0].mxu0
      %v4217 = vadd.f32 0.0, %v4216
      %v4218 = vpop.f32.mrb[0].mxu0
      %4219 = vmatprep.mubr.f32.mxu0 0.0
      %4220 = vmatmul.mubr.f32.gmra.mrb[0].mxu0 %v4049
      %v4221 = vpop.f32.mrb[0].mxu0
      %v4222 = vadd.f32 0.0, %v4221
      %v4223 = vpop.f32.mrb[0].mxu0
      %4224 = vmatprep.mubr.f32.mxu0 0.0
      %4225 = vmatmul.mubr.f32.gmra.mrb[0].mxu0 %v4052
      %v4226 = vpop.f32.mrb[0].mxu0
      %v4227 = vadd.f32 0.0, %v4226
      %v4228 = vpop.f32.mrb[0].mxu0
      %4229 = vmatprep.mubr.f32.mxu0 0.0
      %4230 = vmatmul.mubr.f32.gmra.mrb[0].mxu0 %v4055
      %v4231 = vpop.f32.mrb[0].mxu0
      %v4232 = vadd.f32 0.0, %v4231
      %v4233 = vpop.f32.mrb[0].mxu0
      %4234 = vmatprep.mubr.f32.mxu0 0.0
      %4235 = vmatmul.mubr.f32.gmra.mrb[0].mxu0 %v4058
      %v4236 = vpop.f32.mrb[0].mxu0
      %v4237 = vadd.f32 0.0, %v4236
      %v4238 = vpop.f32.mrb[0].mxu0
      %4239 = vmatprep.mubr.f32.mxu0 0.0
      %4240 = vmatmul.mubr.f32.gmra.mrb[0].mxu0 %v4061
      %v4241 = vpop.f32.mrb[0].mxu0
      %v4242 = vadd.f32 0.0, %v4241
      %v4243 = vpop.f32.mrb[0].mxu0
      %4244 = vmatprep.mubr.f32.mxu0 0.0
      %4245 = vmatmul.mubr.f32.gmra.mrb[0].mxu0 %v4064
      %v4246 = vpop.f32.mrb[0].mxu0
      %v4247 = vadd.f32 0.0, %v4246
      %v4248 = vpop.f32.mrb[0].mxu0
      %4249 = vmatprep.mubr.f32.mxu0 0.0
      %4250 = vmatmul.mubr.f32.gmra.mrb[0].mxu0 %v4067
      %v4251 = vpop.f32.mrb[0].mxu0
      %v4252 = vadd.f32 0.0, %v4251
      %v4253 = vpop.f32.mrb[0].mxu0
      %4254 = vmatprep.mubr.f32.mxu0 0.0
      %4255 = vmatmul.mubr.f32.gmra.mrb[0].mxu0 %v4070
      %v4256 = vpop.f32.mrb[0].mxu0
      %v4257 = vadd.f32 0.0, %v4256
      %v4258 = vpop.f32.mrb[0].mxu0
      %4259 = vmatprep.mubr.f32.mxu0 0.0
      %4260 = vmatmul.mubr.f32.gmra.mrb[0].mxu0 %v4073
      %v4261 = vpop.f32.mrb[0].mxu0
      %v4262 = vadd.f32 0.0, %v4261
      %v4263 = vpop.f32.mrb[0].mxu0
      %4264 = vmatprep.mubr.f32.mxu0 0.0
      %4265 = vmatmul.mubr.f32.gmra.mrb[0].mxu0 %v4076
      %v4266 = vpop.f32.mrb[0].mxu0
      %v4267 = vadd.f32 0.0, %v4266
      %v4268 = vpop.f32.mrb[0].mxu0
      %4269 = vmatprep.mubr.f32.mxu0 0.0
      %4270 = vmatmul.mubr.f32.gmra.mrb[0].mxu0 %v4079
      %v4271 = vpop.f32.mrb[0].mxu0
      %v4272 = vadd.f32 0.0, %v4271
      %v4273 = vpop.f32.mrb[0].mxu0
      %4274 = vmatprep.mubr.f32.mxu0 0.0
      %4275 = vmatmul.mubr.f32.gmra.mrb[0].mxu0 %v4082
      %v4276 = vpop.f32.mrb[0].mxu0
      %v4277 = vadd.f32 0.0, %v4276
      %v4278 = vpop.f32.mrb[0].mxu0
      %4279 = vmatprep.mubr.f32.mxu0 0.0
      %4280 = vmatmul.mubr.f32.gmra.mrb[0].mxu0 %v4085
      %v4281 = vpop.f32.mrb[0].mxu0
      %v4282 = vadd.f32 0.0, %v4281
      %v4283 = vpop.f32.mrb[0].mxu0
      %4284 = vmatprep.mubr.f32.mxu0 0.0
      %4285 = vmatmul.mubr.f32.gmra.mrb[0].mxu0 %v4088
      %v4286 = vpop.f32.mrb[0].mxu0
      %v4287 = vadd.f32 0.0, %v4286
      %v4288 = vpop.f32.mrb[0].mxu0
      %4289 = vmatprep.mubr.f32.mxu0 0.0
      %4290 = vmatmul.mubr.f32.gmra.mrb[0].mxu0 %v4091
      %v4291 = vpop.f32.mrb[0].mxu0
      %v4292 = vadd.f32 0.0, %v4291
      %v4293 = vpop.f32.mrb[0].mxu0
      %4294 = vmatprep.mubr.f32.mxu0 0.0
      %4295 = vmatmul.mubr.f32.gmra.mrb[0].mxu0 %v4094
      %v4296 = vpop.f32.mrb[0].mxu0
      %v4297 = vadd.f32 0.0, %v4296
      %v4298 = vpop.f32.mrb[0].mxu0
      %4299 = vmatprep.mubr.f32.mxu0 0.0
      %4300 = vmatmul.mubr.f32.gmra.mrb[0].mxu0 %v4097
      %v4301 = vpop.f32.mrb[0].mxu0
      %v4302 = vadd.f32 0.0, %v4301
      %v4303 = vpop.f32.mrb[0].mxu0
      %4304 = vmatprep.mubr.f32.mxu0 0.0
      %4305 = vmatmul.mubr.f32.gmra.mrb[0].mxu0 %v4100
      %v4306 = vpop.f32.mrb[0].mxu0
      %v4307 = vadd.f32 0.0, %v4306
      %v4308 = vpop.f32.mrb[0].mxu0
      %4309 = vmatprep.mubr.f32.mxu0 0.0
      %4310 = vmatmul.mubr.f32.gmra.mrb[0].mxu0 %v4103
      %v4311 = vpop.f32.mrb[0].mxu0
      %v4312 = vadd.f32 0.0, %v4311
      %v4313 = vpop.f32.mrb[0].mxu0
      %4314 = vmatprep.mubr.f32.mxu0 0.0
      %4315 = vmatmul.mubr.f32.gmra.mrb[0].mxu0 %v4106
      %v4316 = vpop.f32.mrb[0].mxu0
      %v4317 = vadd.f32 0.0, %v4316
      %v4318 = vpop.f32.mrb[0].mxu0
      %4319 = vmatprep.mubr.f32.mxu0 0.0
      %4320 = vmatmul.mubr.f32.gmra.mrb[0].mxu0 %v4109
      %v4321 = vpop.f32.mrb[0].mxu0
      %v4322 = vadd.f32 0.0, %v4321
      %v4323 = vpop.f32.mrb[0].mxu0
      %4324 = vmatprep.mubr.f32.mxu0 0.0
      %4325 = vmatmul.mubr.f32.gmra.mrb[0].mxu0 %v4112
      %v4326 = vpop.f32.mrb[0].mxu0
      %v4327 = vadd.f32 0.0, %v4326
      %v4328 = vpop.f32.mrb[0].mxu0
      %4329 = vmatprep.mubr.f32.mxu0 0.0
      %4330 = vmatmul.mubr.f32.gmra.mrb[0].mxu0 %v4115
      %v4331 = vpop.f32.mrb[0].mxu0
      %v4332 = vadd.f32 0.0, %v4331
      %v4333 = vpop.f32.mrb[0].mxu0
      %4334 = vmatprep.mubr.f32.mxu0 0.0
      %4335 = vmatmul.mubr.f32.gmra.mrb[0].mxu0 %v4118
      %v4336 = vpop.f32.mrb[0].mxu0
      %v4337 = vadd.f32 0.0, %v4336
      %v4338 = vpop.f32.mrb[0].mxu0
      %4339 = vmatprep.mubr.f32.mxu0 0.0
      %4340 = vmatmul.mubr.f32.gmra.mrb[0].mxu0 %v4121
      %v4341 = vpop.f32.mrb[0].mxu0
      %v4342 = vadd.f32 0.0, %v4341
      %v4343 = vpop.f32.mrb[0].mxu0
      %4344 = vmatprep.mubr.f32.mxu0 0.0
      %4345 = vmatmul.mubr.f32.gmra.mrb[0].mxu0 %v4124
      %v4346 = vpop.f32.mrb[0].mxu0
      %v4347 = vadd.f32 0.0, %v4346
      %v4348 = vpop.f32.mrb[0].mxu0
      %4349 = vmatprep.mubr.f32.mxu0 0.0
      %4350 = vmatmul.mubr.f32.gmra.mrb[0].mxu0 %v4127
      %v4351 = vpop.f32.mrb[0].mxu0
      %v4352 = vadd.f32 0.0, %v4351
      %v4353 = vpop.f32.mrb[0].mxu0
      %4354 = vmatprep.mubr.f32.mxu0 0.0
      %4355 = vmatmul.mubr.f32.gmra.mrb[0].mxu0 %v4130
      %v4356 = vpop.f32.mrb[0].mxu0
      %v4357 = vadd.f32 0.0, %v4356
      %v4358 = vpop.f32.mrb[0].mxu0
      %4359 = vdwg.mxu0
      %v4360 = vadd.f32 %v3938, %v4202
      %v4361 = vadd.f32 %v3939, %v4207
      %v4362 = vadd.f32 %v3940, %v4212
      %v4363 = vadd.f32 %v3941, %v4217
      %v4364 = vadd.f32 %v3942, %v4222
      %v4365 = vadd.f32 %v3943, %v4227
      %v4366 = vadd.f32 %v3944, %v4232
      %v4367 = vadd.f32 %v3945, %v4237
      %v4368 = vadd.f32 %v3946, %v4242
      %v4369 = vadd.f32 %v3947, %v4247
      %v4370 = vadd.f32 %v3948, %v4252
      %v4371 = vadd.f32 %v3949, %v4257
      %v4372 = vadd.f32 %v3950, %v4262
      %v4373 = vadd.f32 %v3951, %v4267
      %v4374 = vadd.f32 %v3952, %v4272
      %v4375 = vadd.f32 %v3953, %v4277
      %v4376 = vadd.f32 %v3954, %v4282
      %v4377 = vadd.f32 %v3955, %v4287
      %v4378 = vadd.f32 %v3956, %v4292
      %v4379 = vadd.f32 %v3957, %v4297
      %v4380 = vadd.f32 %v3958, %v4302
      %v4381 = vadd.f32 %v3959, %v4307
      %v4382 = vadd.f32 %v3960, %v4312
      %v4383 = vadd.f32 %v3961, %v4317
      %v4384 = vadd.f32 %v3962, %v4322
      %v4385 = vadd.f32 %v3963, %v4327
      %v4386 = vadd.f32 %v3964, %v4332
      %v4387 = vadd.f32 %v3965, %v4337
      %v4388 = vadd.f32 %v3966, %v4342
      %v4389 = vadd.f32 %v3967, %v4347
      %v4390 = vadd.f32 %v3968, %v4352
      %v4391 = vadd.f32 %v3969, %v4357
      %vm4392 = vcmask 64512
      %4393 = vst.msk [vmem:[%s143] sm:$0xff] %vm4392, %v4360
      %4394 = vst.msk [vmem:[%s143 + $0x8] sm:$0xff] %vm4392, %v4361
      %4395 = vst.msk [vmem:[%s143 + $0x10] sm:$0xff] %vm4392, %v4362
      %4396 = vst.msk [vmem:[%s143 + $0x18] sm:$0xff] %vm4392, %v4363
      %4397 = vst.msk [vmem:[%s143 + $0x20] sm:$0xff] %vm4392, %v4364
      %4398 = vst.msk [vmem:[%s143 + $0x28] sm:$0xff] %vm4392, %v4365
      %4399 = vst.msk [vmem:[%s143 + $0x30] sm:$0xff] %vm4392, %v4366
      %4400 = vst.msk [vmem:[%s143 + $0x38] sm:$0xff] %vm4392, %v4367
      %4401 = vst.msk [vmem:[%s143 + $0x40] sm:$0xff] %vm4392, %v4368
      %4402 = vst.msk [vmem:[%s143 + $0x48] sm:$0xff] %vm4392, %v4369
      %4403 = vst.msk [vmem:[%s143 + $0x50] sm:$0xff] %vm4392, %v4370
      %4404 = vst.msk [vmem:[%s143 + $0x58] sm:$0xff] %vm4392, %v4371
      %4405 = vst.msk [vmem:[%s143 + $0x60] sm:$0xff] %vm4392, %v4372
      %4406 = vst.msk [vmem:[%s143 + $0x68] sm:$0xff] %vm4392, %v4373
      %4407 = vst.msk [vmem:[%s143 + $0x70] sm:$0xff] %vm4392, %v4374
      %4408 = vst.msk [vmem:[%s143 + $0x78] sm:$0xff] %vm4392, %v4375
      %4409 = vst.msk [vmem:[%s143 + $0x80] sm:$0xff] %vm4392, %v4376
      %4410 = vst.msk [vmem:[%s143 + $0x88] sm:$0xff] %vm4392, %v4377
      %4411 = vst.msk [vmem:[%s143 + $0x90] sm:$0xff] %vm4392, %v4378
      %4412 = vst.msk [vmem:[%s143 + $0x98] sm:$0xff] %vm4392, %v4379
      %4413 = vst.msk [vmem:[%s143 + $0xa0] sm:$0xff] %vm4392, %v4380
      %4414 = vst.msk [vmem:[%s143 + $0xa8] sm:$0xff] %vm4392, %v4381
      %4415 = vst.msk [vmem:[%s143 + $0xb0] sm:$0xff] %vm4392, %v4382
      %4416 = vst.msk [vmem:[%s143 + $0xb8] sm:$0xff] %vm4392, %v4383
      %4417 = vst.msk [vmem:[%s143 + $0xc0] sm:$0xff] %vm4392, %v4384
      %4418 = vst.msk [vmem:[%s143 + $0xc8] sm:$0xff] %vm4392, %v4385
      %4419 = vst.msk [vmem:[%s143 + $0xd0] sm:$0xff] %vm4392, %v4386
      %4420 = vst.msk [vmem:[%s143 + $0xd8] sm:$0xff] %vm4392, %v4387
      %4421 = vst.msk [vmem:[%s143 + $0xe0] sm:$0xff] %vm4392, %v4388
      %4422 = vst.msk [vmem:[%s143 + $0xe8] sm:$0xff] %vm4392, %v4389
      %4423 = vst.msk [vmem:[%s143 + $0xf0] sm:$0xff] %vm4392, %v4390
      %4424 = vst.msk [vmem:[%s143 + $0xf8] sm:$0xff] %vm4392, %v4391
      %p4425 = scmp.lt.s32.totalorder %s13, 1
      %s4426 = scalar_select %p4425, %s13, 1
      %s4427 = smul.addr %s4426, 32
      %s4428 = smul.addr %s4427, 8
      %s4429 = scalar_lea.vmem %s2, %s4428
      // Predicated region
      $region29: #{upsample_forward.1} parent=27 // pred_check
        %p4430 = pneg %p78
      $region30: #{upsample_forward.1} parent=27 // pred_check_branch
        %4432 = sbr.rel (%p4430) target = $region32
      $region31: #{upsample_forward.1} parent=27 // pred_region
        _
      $region32: #{upsample_forward.1} parent=27 // pred_fallthru
        _
    $region28: #{upsample_forward.1} parent=5 // pred_fallthru
      _
    %p4433 = scmp.le.s32.totalorder 2, %s8
    // Predicated region
    $region33: #{upsample_forward.1} parent=5 // pred_check
      %p4434 = pneg %p4433
    $region34: #{upsample_forward.1} parent=5 // pred_check_branch
      %4436 = sbr.rel (%p4434) target = $region36
    $region35: #{upsample_forward.1} parent=5 // pred_region
      %s4437 = ssub.s32 %s8, 2
      // Predicated region
      $region37: #{upsample_forward.1} parent=35 // pred_check
        %p4438 = pneg %p84
      $region38: #{upsample_forward.1} parent=35 // pred_check_branch
        %4440 = sbr.rel (%p4438) target = $region40
      $region39: #{upsample_forward.1} parent=35 // pred_region
        %p4441 = scmp.lt.s32.totalorder %s14, 1
        %s4442 = scalar_select %p4441, %s14, 1
        %s4443 = smul.addr %s4442, 32
        %s4444 = smul.addr %s4443, 8
        %s4445 = scalar_lea.vmem %s2, %s4444
      $region40: #{upsample_forward.1} parent=35 // pred_fallthru
        _
    $region36: #{upsample_forward.1} parent=5 // pred_fallthru
      _
  $region6: #{upsample_forward.1} parent=0 // loop_footer
    %s12 = sadd.s32 1, %s8
  $region7: #{upsample_forward.1} parent=0 // loop_footer_branch
    %7 = sbr.rel target = $region3
  $region8: #{upsample_forward.1} parent=0 // loop_exit
    _

</llo_original>
